<compile_context>
chip_gen: v5e
topology: v5e:2x2
jax: 0.10.0
libtpu: 0.0.40
codegen_flags: <defaults>
</compile_context>

<pallas_src>
import functools
import math

import jax
import jax.numpy as jnp
from jax.experimental import pallas as pl
from jax.experimental.pallas import tpu as pltpu


# ----------------------------- generation-aware knobs -----------------------------

def _tpu_generation():
    try:
        kind = jax.devices()[0].device_kind.lower()
    except Exception:
        return 6
    if "v7" in kind or "7x" in kind:
        return 7
    if "v6" in kind:
        return 6
    if "v5" in kind:
        return 5
    return 6


_GEN = _tpu_generation()
_MAX_TM = 256 if _GEN >= 7 else 512            # v7x: 64 MiB physical VMEM -> smaller row tiles
_VMEM_LIMIT = (48 << 20) if _GEN >= 7 else (96 << 20)


def _cparams(dimension_semantics):
    return pltpu.CompilerParams(dimension_semantics=dimension_semantics,
                                vmem_limit_bytes=_VMEM_LIMIT)


# ------------------------------ in-kernel helpers -------------------------------

def _layernorm(x, gamma, beta, eps):
    mean = jnp.mean(x, axis=-1, keepdims=True)
    var = jnp.mean(jnp.square(x - mean), axis=-1, keepdims=True)    # biased var (PyTorch LN)
    return (x - mean) * jax.lax.rsqrt(var + eps) * gamma + beta


_SQRT_2_OVER_PI = 0.7978845608028654


def _gelu_tanh(x):
    # tanh-approx GELU: the tanh goes to the EUP slot (frees VALU in the bf16-matmul regime).
    return 0.5 * x * (1.0 + jnp.tanh(_SQRT_2_OVER_PI * (x + 0.044715 * (x * x * x))))


# ------------------------------ tiling helpers -------------------------------

def _row_plan(m, max_tm=None, min_steps=2):
    """Row tile: as large as possible (<=max_tm), multiple of 8, >=min_steps grid steps when
    there is enough work (keeps both TensorCores busy via 'parallel' semantics)."""
    if max_tm is None:
        max_tm = _MAX_TM
    m_pad = -(-m // 8) * 8
    tm = min(m_pad, max_tm)
    if m_pad // tm < min_steps and m_pad > 8:
        half = -(-m_pad // min_steps)
        tm = -(-half // 8) * 8
    m_pad = -(-m_pad // tm) * tm
    return m_pad, tm


def _pad_rows(x, m_pad):
    m = x.shape[0]
    if m_pad == m:
        return x
    return jnp.pad(x, ((0, m_pad - m), (0, 0)))


def _patch_plan(n_patches, t_frames, max_rows):
    """Patches-per-tile for the patch-embed kernel (rows per tile = g * T)."""
    g = max(1, min(n_patches, max_rows // max(t_frames, 1)))
    tiles = -(-n_patches // g)
    g = -(-n_patches // tiles)
    if tiles > 1:
        g = -(-g // 8) * 8                      # keep frame_pos / row blocks (8, .)-aligned
    return g, g * tiles


def _token_plan(n_tokens, t_frames, max_rows):
    """Tokens-per-tile for the attention kernel (rows per tile = tn * T)."""
    tn = max(1, min(n_tokens, max_rows // max(t_frames, 1)))
    tiles = -(-n_tokens // tn)
    tn = -(-n_tokens // tiles)
    if tiles > 1:
        while (tn * t_frames) % 8 != 0:
            tn += 1
    return tn, tn * tiles


# --------------------------------- kernels ---------------------------------------

def _patch_embed_kernel(pf_ref, ps_ref, fp_ref, tp_ref, w_ref, b_ref, tf_ref, ts_ref):
    # Conv2d(kernel==stride) as matmul, shared bf16 weight for both streams; the positional
    # embedding (frame_pos + temporal_pos) is built in-kernel (no [B*Np*T, D] HBM broadcast).
    g, d = fp_ref.shape
    t = tp_ref.shape[0]
    w = w_ref[...]                                              # bf16 [CPP, D]
    pos = (fp_ref[...][:, None, :] + tp_ref[...][None, :, :]).reshape(g * t, d) + b_ref[...]
    tf_ref[...] = jnp.dot(pf_ref[...].astype(jnp.bfloat16), w,
                          preferred_element_type=jnp.float32) + pos
    ts_ref[...] = jnp.dot(ps_ref[...].astype(jnp.bfloat16), w,
                          preferred_element_type=jnp.float32) + pos


def _attn_block_kernel(xf_ref, xs_ref, g1_ref, b1_ref, g12_ref, b12_ref,
                       wqkv_f_ref, bqkv_f_ref, wqkv_s_ref, bqkv_s_ref,
                       ow_ref, ob_ref, ow2_ref, ob2_ref,
                       of_ref, os_ref, o_scr, *, t_frames, heads, eps):
    # Block = one token-tile of one batch element, rows ordered (token n, frame t).
    RT, D = xf_ref.shape
    T = t_frames
    N = RT // T
    hd = D // heads

    xf = xf_ref[...]                        # f32 residuals
    xs = xs_ref[...]
    hf = _layernorm(xf, g1_ref[...], b1_ref[...], eps).astype(jnp.bfloat16)
    hs = _layernorm(xs, g12_ref[...], b12_ref[...], eps).astype(jnp.bfloat16)

    # Fused q|k|v projection (softmax scale 1/sqrt(head_dim) pre-folded into the q columns).
    qkv_f = (jnp.dot(hf, wqkv_f_ref[...], preferred_element_type=jnp.float32)
             + bqkv_f_ref[...]).astype(jnp.bfloat16).reshape(N, T, 3 * D)
    qkv_s = (jnp.dot(hs, wqkv_s_ref[...], preferred_element_type=jnp.float32)
             + bqkv_s_ref[...]).astype(jnp.bfloat16).reshape(N, T, 3 * D)

    # Per-head temporal attention.  The concatenated (face|skel) contraction is decomposed as
    # qf.kf^T + qs.ks^T and attn@[vf|vs] as [attn@vf | attn@vs], so no sub-128-lane concats are
    # ever materialised.  Each head's output goes straight to its final column offset in the
    # scratch (layout 'b t (h d)' with d = [face|skel]), matching the torch.chunk semantics.
    for h in range(heads):
        q_sl = slice(h * hd, (h + 1) * hd)
        k_sl = slice(D + h * hd, D + (h + 1) * hd)
        v_sl = slice(2 * D + h * hd, 2 * D + (h + 1) * hd)
        s = (jnp.einsum('ntd,nsd->nts', qkv_f[:, :, q_sl], qkv_f[:, :, k_sl],
                        preferred_element_type=jnp.float32)
             + jnp.einsum('ntd,nsd->nts', qkv_s[:, :, q_sl], qkv_s[:, :, k_sl],
                          preferred_element_type=jnp.float32))
        s = s - jnp.max(s, axis=-1, keepdims=True)
        p = jnp.exp(s)
        attn = (p * pl.reciprocal(jnp.sum(p, axis=-1, keepdims=True), approx=True)
                ).astype(jnp.bfloat16)      # dropout = identity (inference)
        o_f = jnp.einsum('nts,nsd->ntd', attn, qkv_f[:, :, v_sl],
                         preferred_element_type=jnp.float32)
        o_s = jnp.einsum('nts,nsd->ntd', attn, qkv_s[:, :, v_sl],
                         preferred_element_type=jnp.float32)
        col = 2 * h * hd
        o_scr[:, col:col + hd] = o_f.reshape(RT, hd).astype(jnp.bfloat16)
        o_scr[:, col + hd:col + 2 * hd] = o_s.reshape(RT, hd).astype(jnp.bfloat16)

    # torch.chunk(output, 2, dim=-1): first half of columns (= first half of heads) -> out_proj,
    # second half -> out_proj_2.  Both projections stay as full DxD MXU matmuls.
    o1 = jnp.dot(o_scr[:, :D], ow_ref[...], preferred_element_type=jnp.float32) + ob_ref[...]
    o2 = jnp.dot(o_scr[:, D:], ow2_ref[...], preferred_element_type=jnp.float32) + ob2_ref[...]
    of_ref[...] = xf + o1                   # residual add fused
    os_ref[...] = xs + o2


def _mlp_kernel(xf_ref, xs_ref, g_ref, b_ref, w1_ref, b1_ref, w2_ref, b2_ref,
                of_ref, os_ref, *, eps):
    g = g_ref[...]
    b = b_ref[...]
    w1 = w1_ref[...]
    b1 = b1_ref[...]
    w2 = w2_ref[...]
    b2 = b2_ref[...]

    def branch(x):
        h = _layernorm(x, g, b, eps).astype(jnp.bfloat16)
        h = jnp.dot(h, w1, preferred_element_type=jnp.float32) + b1
        h = _gelu_tanh(h).astype(jnp.bfloat16)
        h = jnp.dot(h, w2, preferred_element_type=jnp.float32) + b2
        return x + h                        # residual fused

    # NOTE: the reference reuses self.norm2 / self.mlp for BOTH streams (reproduced).
    of_ref[...] = branch(xf_ref[...])
    os_ref[...] = branch(xs_ref[...])


def _head_kernel(x_ref, g_ref, b_ref, w_ref, bias_ref, o_ref, *, eps):
    h = _layernorm(x_ref[...], g_ref[...], b_ref[...], eps).astype(jnp.bfloat16)
    o_ref[...] = jnp.dot(h, w_ref[...], preferred_element_type=jnp.float32) + bias_ref[...]


# ------------------------------ pallas_call wrappers ------------------------------

def patch_embed(pf, ps, frame_pos, temporal_pos, w, b, *, g_patches, t_frames):
    B, _, CPP = pf.shape
    np_pad, D = frame_pos.shape
    tiles = np_pad // g_patches
    GT = g_patches * t_frames
    rowspec = lambda c: pl.BlockSpec((None, GT, c), lambda bb, g: (bb, g, 0))
    tf, ts = pl.pallas_call(
        _patch_embed_kernel,
        out_shape=(jax.ShapeDtypeStruct((B, np_pad * t_frames, D), jnp.float32),) * 2,
        grid=(B, tiles),
        in_specs=[rowspec(CPP), rowspec(CPP),
                  pl.BlockSpec((g_patches, D), lambda bb, g: (g, 0)),
                  pl.BlockSpec((t_frames, D), lambda bb, g: (0, 0)),
                  pl.BlockSpec((CPP, D), lambda bb, g: (0, 0), pipeline_mode=pl.Buffered(1)),
                  pl.BlockSpec((1, D), lambda bb, g: (0, 0))],
        out_specs=(rowspec(D), rowspec(D)),
        compiler_params=_cparams(("parallel", "parallel")),
        cost_estimate=pl.CostEstimate(
            flops=4 * B * np_pad * t_frames * CPP * D,
            transcendentals=0,
            bytes_accessed=4 * B * np_pad * t_frames * (CPP + 2 * D) + 2 * CPP * D),
    )(pf, ps, frame_pos, temporal_pos, w, b.reshape(1, D))
    return tf, ts


def attention_block(xf, xs, lp, *, tn_tokens, t_frames, heads):
    B, R, D = xf.shape
    RT = tn_tokens * t_frames
    n_tiles = R // RT
    D3 = 3 * D
    hd = D // heads
    n_tokens = R // t_frames
    x_spec = pl.BlockSpec((None, RT, D), lambda b, n: (b, n, 0))
    vec = lambda c: pl.BlockSpec((1, c), lambda b, n: (0, 0))
    wspec = lambda r, c: pl.BlockSpec((r, c), lambda b, n: (0, 0),
                                      pipeline_mode=pl.Buffered(1))
    flops = (16 * B * R * D * D
             + 8 * B * n_tokens * heads * t_frames * t_frames * 2 * hd)
    bytes_acc = 4 * 6 * B * R * D + 2 * (2 * D * D3 + 2 * D * D) + 4 * (2 * D3 + 8 * D)
    of, os = pl.pallas_call(
        functools.partial(_attn_block_kernel, t_frames=t_frames, heads=heads, eps=1e-5),
        out_shape=(jax.ShapeDtypeStruct((B, R, D), jnp.float32),) * 2,
        grid=(B, n_tiles),
        in_specs=[x_spec, x_spec,
                  vec(D), vec(D), vec(D), vec(D),
                  wspec(D, D3), vec(D3), wspec(D, D3), vec(D3),
                  wspec(D, D), vec(D), wspec(D, D), vec(D)],
        out_specs=(x_spec, x_spec),
        scratch_shapes=[pltpu.VMEM((RT, 2 * D), jnp.bfloat16)],
        compiler_params=_cparams(("parallel", "parallel")),
        cost_estimate=pl.CostEstimate(
            flops=flops,
            transcendentals=B * n_tokens * heads * t_frames * t_frames,
            bytes_accessed=bytes_acc),
    )(xf, xs,
      lp['ln1_g'].reshape(1, D), lp['ln1_b'].reshape(1, D),
      lp['ln1_2_g'].reshape(1, D), lp['ln1_2_b'].reshape(1, D),
      lp['qkv_w_f'], lp['qkv_b_f'].reshape(1, D3),
      lp['qkv_w_s'], lp['qkv_b_s'].reshape(1, D3),
      lp['ow'], lp['ob'].reshape(1, D),
      lp['ow2'], lp['ob2'].reshape(1, D))
    return of, os


def mlp_block(xf, xs, lp):
    B, R, D = xf.shape
    M = B * R
    Dh = lp['mlp_w1'].shape[1]
    m_pad, tm = _row_plan(M)
    xf2 = _pad_rows(xf.reshape(M, D), m_pad)
    xs2 = _pad_rows(xs.reshape(M, D), m_pad)
    row = pl.BlockSpec((tm, D), lambda i: (i, 0))
    vec = lambda c: pl.BlockSpec((1, c), lambda i: (0, 0))
    wspec = lambda r, c: pl.BlockSpec((r, c), lambda i: (0, 0), pipeline_mode=pl.Buffered(1))
    of, os = pl.pallas_call(
        functools.partial(_mlp_kernel, eps=1e-5),
        out_shape=(jax.ShapeDtypeStruct((m_pad, D), jnp.float32),) * 2,
        grid=(m_pad // tm,),
        in_specs=[row, row, vec(D), vec(D),
                  wspec(D, Dh), vec(Dh), wspec(Dh, D), vec(D)],
        out_specs=(row, row),
        compiler_params=_cparams(("parallel",)),
        cost_estimate=pl.CostEstimate(
            flops=8 * m_pad * D * Dh,
            transcendentals=2 * m_pad * Dh,
            bytes_accessed=4 * 4 * m_pad * D + 2 * 2 * D * Dh + 4 * (Dh + 3 * D)),
    )(xf2, xs2,
      lp['ln2_g'].reshape(1, D), lp['ln2_b'].reshape(1, D),
      lp['mlp_w1'], lp['mlp_b1'].reshape(1, Dh),
      lp['mlp_w2'], lp['mlp_b2'].reshape(1, D))
    return of[:M].reshape(B, R, D), os[:M].reshape(B, R, D)


def mlp_head(x, g, b, w, bias):
    M, D = x.shape
    Cn = w.shape[1]
    m_pad, tm = _row_plan(M)
    xp = _pad_rows(x, m_pad)
    out = pl.pallas_call(
        functools.partial(_head_kernel, eps=1e-5),
        out_shape=jax.ShapeDtypeStruct((m_pad, Cn), jnp.float32),
        grid=(m_pad // tm,),
        in_specs=[pl.BlockSpec((tm, D), lambda i: (i, 0)),
                  pl.BlockSpec((1, D), lambda i: (0, 0)),
                  pl.BlockSpec((1, D), lambda i: (0, 0)),
                  pl.BlockSpec((D, Cn), lambda i: (0, 0), pipeline_mode=pl.Buffered(1)),
                  pl.BlockSpec((1, Cn), lambda i: (0, 0))],
        out_specs=pl.BlockSpec((tm, Cn), lambda i: (i, 0)),
        compiler_params=_cparams(("parallel",)),
        cost_estimate=pl.CostEstimate(flops=2 * m_pad * D * Cn, transcendentals=0,
                                      bytes_accessed=4 * m_pad * (D + Cn) + 2 * D * Cn),
    )(xp, g.reshape(1, D), b.reshape(1, D), w, bias.reshape(1, Cn))
    return out[:M]


# --------------------------------- forward pass -----------------------------------

def video_transformer_forward(params, x_face, x_skeleton, *, cfg):
    B, C, T, H, W = x_face.shape
    P = cfg['patch_size']
    D = cfg['dim']
    heads = cfg['heads']
    nh, nw = H // P, W // P
    Np = nh * nw
    N = Np + 1                                              # +cls token

    g_patches, np_pad = _patch_plan(Np, T, _MAX_TM)

    def extract_patches(x):
        # NCHW frames -> rows ordered (patch, t), features ordered (c, kh, kw), matching a
        # Conv2d(kernel==stride) weight flattened to [C*P*P, D].
        xt = x.reshape(B, C, T, nh, P, nw, P)
        xt = xt.transpose(0, 3, 5, 2, 1, 4, 6)              # B, nh, nw, T, C, P, P
        xt = xt.reshape(B, Np, T, C * P * P)
        if np_pad != Np:
            xt = jnp.pad(xt, ((0, 0), (0, np_pad - Np), (0, 0), (0, 0)))
        return xt.reshape(B, np_pad * T, C * P * P)

    fp = params['frame_pos']
    if np_pad != Np:
        fp = jnp.pad(fp, ((0, np_pad - Np), (0, 0)))

    tf, ts = patch_embed(extract_patches(x_face), extract_patches(x_skeleton),
                         fp, params['temporal_pos'], params['patch_w'], params['patch_b'],
                         g_patches=g_patches, t_frames=T)
    if np_pad != Np:
        tf = tf.reshape(B, np_pad, T, D)[:, :Np].reshape(B, Np * T, D)
        ts = ts.reshape(B, np_pad, T, D)[:, :Np].reshape(B, Np * T, D)

    # cls token gets no positional embedding (matches the reference).  Activations stay in a
    # [B, N*T, D] token-major / time-minor layout for the whole stack.
    cls = jnp.broadcast_to(params['cls'][None, None, :], (B, T, D))
    xf = jnp.concatenate([cls, tf], axis=1)
    xs = jnp.concatenate([cls, ts], axis=1)

    # Token-axis padding for the attention tile grid.  Attention never mixes tokens, so pad
    # tokens only ever attend to themselves and are sliced away at the head.
    tn_tokens, n_pad = _token_plan(N, T, _MAX_TM)
    if n_pad != N:
        xf = jnp.pad(xf, ((0, 0), (0, (n_pad - N) * T), (0, 0)))
        xs = jnp.pad(xs, ((0, 0), (0, (n_pad - N) * T), (0, 0)))

    for lp in params['layers']:
        xf, xs = attention_block(xf, xs, lp, tn_tokens=tn_tokens, t_frames=T, heads=heads)
        xf, xs = mlp_block(xf, xs, lp)

    cls_feat = xf[:, :T, :] + xs[:, :T, :]                  # token 0 (cls) for every frame
    logits = mlp_head(cls_feat.reshape(B * T, D),
                      params['head_ln_g'], params['head_ln_b'],
                      params['head_w'], params['head_b'])
    return logits.reshape(B, T, cfg['num_classes'])


# -------------------------------- parameter init ----------------------------------

def init_params(key, *, dim, depth, patch_size, num_patches, num_frames,
                num_classes, heads, in_chans=3):
    keys = iter(jax.random.split(key, 16 + depth * 16))

    def nrm(shape, scale=0.02):
        return (scale * jax.random.normal(next(keys), shape)).astype(jnp.float32)

    bf = lambda a: a.astype(jnp.bfloat16)                   # matmul weights live in bf16
    zeros = lambda s: jnp.zeros(s, jnp.float32)
    ones = lambda s: jnp.ones(s, jnp.float32)
    attn_scale = 1.0 / math.sqrt(dim // heads)              # 1/sqrt(head_dim), as in the reference

    params = {
        # Conv2d patch-embed as matmul: weight is torch_conv_w.reshape(D,-1).T, stored bf16.
        'patch_w': bf(nrm((in_chans * patch_size * patch_size, dim))),
        'patch_b': zeros((dim,)),
        'frame_pos': nrm((num_patches, dim)),
        'temporal_pos': nrm((num_frames, dim)),
        'cls': nrm((dim,)),
        'head_ln_g': ones((dim,)), 'head_ln_b': zeros((dim,)),
        'head_w': bf(nrm((dim, num_classes))), 'head_b': zeros((num_classes,)),
        'layers': [],
    }
    for _ in range(depth):
        qw, kw, vw = nrm((dim, dim)), nrm((dim, dim)), nrm((dim, dim))
        qw2, kw2, vw2 = nrm((dim, dim)), nrm((dim, dim)), nrm((dim, dim))
        lp = {
            'ln1_g': ones((dim,)), 'ln1_b': zeros((dim,)),
            'ln1_2_g': ones((dim,)), 'ln1_2_b': zeros((dim,)),
            # q|k|v fused along the output axis; softmax scale folded into the q block (a real
            # checkpoint's q bias must also be scaled by attn_scale when packed here).
            'qkv_w_f': bf(jnp.concatenate([qw * attn_scale, kw, vw], axis=1)),
            'qkv_b_f': zeros((3 * dim,)),
            'qkv_w_s': bf(jnp.concatenate([qw2 * attn_scale, kw2, vw2], axis=1)),
            'qkv_b_s': zeros((3 * dim,)),
            'ow': bf(nrm((dim, dim))), 'ob': zeros((dim,)),
            'ow2': bf(nrm((dim, dim))), 'ob2': zeros((dim,)),
            'ln2_g': ones((dim,)), 'ln2_b': zeros((dim,)),
            'mlp_w1': bf(nrm((dim, 4 * dim))), 'mlp_b1': zeros((4 * dim,)),
            'mlp_w2': bf(nrm((4 * dim, dim))), 'mlp_b2': zeros((dim,)),
            # norm2_2 / mlp_2 / rel_pos_bias exist in the PyTorch module but are never used in
            # its forward, so they are not materialized here.
        }
        params['layers'].append(lp)
    return params


# ------------------------------------- main ----------------------------------------

if __name__ == "__main__":
    # Small shapes consistent with the module's forward.
    B, C, T, H, W = 2, 3, 4, 16, 16
    patch_size = 8
    dim = 32
    heads = 4            # head_dim = 8
    depth = 2
    num_classes = 5
    num_patches = (H // patch_size) ** 2    # 4

    key = jax.random.PRNGKey(0)
    kp, kf, ks = jax.random.split(key, 3)
    params = init_params(kp, dim=dim, depth=depth, patch_size=patch_size,
                         num_patches=num_patches, num_frames=T,
                         num_classes=num_classes, heads=heads, in_chans=C)
    x_face = jax.random.normal(kf, (B, C, T, H, W), dtype=jnp.float32)
    x_skeleton = jax.random.normal(ks, (B, C, T, H, W), dtype=jnp.float32)

    cfg = dict(patch_size=patch_size, dim=dim, heads=heads, num_classes=num_classes)
    fwd = jax.jit(functools.partial(video_transformer_forward, cfg=cfg))
    out = jax.block_until_ready(fwd(params, x_face, x_skeleton))

    assert out.shape == (B, T, num_classes), out.shape
    assert bool(jnp.all(jnp.isfinite(out)))
    print("KERNEL_OK")
</pallas_src>

<mosaic_0001>
module attributes {stable_mosaic.version = 11 : i64} {
  func.func @_patch_embed_kernel(%arg0: i32, %arg1: i32, %arg2: memref<1x16x192xf32, #tpu.memory_space<vmem>>, %arg3: memref<1x16x192xf32, #tpu.memory_space<vmem>>, %arg4: memref<4x32xf32, #tpu.memory_space<vmem>>, %arg5: memref<4x32xf32, #tpu.memory_space<vmem>>, %arg6: memref<192x32xbf16, #tpu.memory_space<vmem>>, %arg7: memref<1x32xf32, #tpu.memory_space<vmem>>, %arg8: memref<1x16x32xf32, #tpu.memory_space<vmem>>, %arg9: memref<1x16x32xf32, #tpu.memory_space<vmem>>) attributes {dimension_semantics = [#tpu.dimension_semantics<parallel>, #tpu.dimension_semantics<parallel>], iteration_bounds = array<i64: 2, 1>, scalar_prefetch = 0 : i64, scratch_operands = 0 : i64, tpu.core_type = #tpu.core_type<tc>, window_params = [{transform_indices = @transform_0, window_bounds = array<i64: 1, 16, 192>}, {transform_indices = @transform_1, window_bounds = array<i64: 1, 16, 192>}, {transform_indices = @transform_2, window_bounds = array<i64: 4, 32>}, {pipeline_mode = #tpu.pipeline_mode<synchronous>, transform_indices = @transform_3, window_bounds = array<i64: 4, 32>}, {pipeline_mode = #tpu.pipeline_mode<synchronous>, transform_indices = @transform_4, window_bounds = array<i64: 192, 32>}, {pipeline_mode = #tpu.pipeline_mode<synchronous>, transform_indices = @transform_5, window_bounds = array<i64: 1, 32>}, {transform_indices = @transform_6, window_bounds = array<i64: 1, 16, 32>}, {transform_indices = @transform_7, window_bounds = array<i64: 1, 16, 32>}]} {
    %c0 = arith.constant 0 : index
    %c0_0 = arith.constant 0 : index
    %0 = vector.load %arg6[%c0, %c0_0] : memref<192x32xbf16, #tpu.memory_space<vmem>>, vector<192x32xbf16>
    %c0_1 = arith.constant 0 : index
    %c0_2 = arith.constant 0 : index
    %1 = vector.load %arg4[%c0_1, %c0_2] : memref<4x32xf32, #tpu.memory_space<vmem>>, vector<4x32xf32>
    %2 = vector.shape_cast %1 : vector<4x32xf32> to vector<4x1x32xf32>
    %c0_3 = arith.constant 0 : index
    %c0_4 = arith.constant 0 : index
    %3 = vector.load %arg5[%c0_3, %c0_4] : memref<4x32xf32, #tpu.memory_space<vmem>>, vector<4x32xf32>
    %4 = vector.shape_cast %3 : vector<4x32xf32> to vector<1x4x32xf32>
    %5 = vector.broadcast %2 : vector<4x1x32xf32> to vector<4x4x32xf32>
    %6 = vector.broadcast %4 : vector<1x4x32xf32> to vector<4x4x32xf32>
    %7 = arith.addf %5, %6 : vector<4x4x32xf32>
    %8 = vector.shape_cast %7 : vector<4x4x32xf32> to vector<16x32xf32>
    %c0_5 = arith.constant 0 : index
    %c0_6 = arith.constant 0 : index
    %9 = vector.load %arg7[%c0_5, %c0_6] : memref<1x32xf32, #tpu.memory_space<vmem>>, vector<1x32xf32>
    %10 = vector.broadcast %9 : vector<1x32xf32> to vector<16x32xf32>
    %11 = arith.addf %8, %10 : vector<16x32xf32>
    %c0_7 = arith.constant 0 : index
    %c0_8 = arith.constant 0 : index
    %c0_9 = arith.constant 0 : index
    %12 = vector.load %arg2[%c0_7, %c0_8, %c0_9] : memref<1x16x192xf32, #tpu.memory_space<vmem>>, vector<1x16x192xf32>
    %13 = vector.shape_cast %12 : vector<1x16x192xf32> to vector<16x192xf32>
    %14 = arith.truncf %13 : vector<16x192xf32> to vector<16x192xbf16>
    %cst = arith.constant dense<0.000000e+00> : vector<16x32xf32>
    %15 = tpu.matmul %14, %0, %cst {dimension_numbers = #tpu.dot_dimension_numbers<[1], [0], [0], [1], [0, 0, 1, 1], [], []>} : vector<16x192xbf16>, vector<192x32xbf16>, vector<16x32xf32> -> vector<16x32xf32>
    %16 = arith.addf %15, %11 : vector<16x32xf32>
    %c0_10 = arith.constant 0 : index
    %c0_11 = arith.constant 0 : index
    %c0_12 = arith.constant 0 : index
    %17 = vector.load %arg8[%c0_10, %c0_11, %c0_12] : memref<1x16x32xf32, #tpu.memory_space<vmem>>, vector<1x16x32xf32>
    %18 = vector.shape_cast %17 : vector<1x16x32xf32> to vector<16x32xf32>
    %19 = vector.shape_cast %16 : vector<16x32xf32> to vector<1x16x32xf32>
    tpu.vector_store %arg8[%c0_10, %c0_11, %c0_12], %19 {strides = array<i32>} : memref<1x16x32xf32, #tpu.memory_space<vmem>>, vector<1x16x32xf32>,
    %c0_13 = arith.constant 0 : index
    %c0_14 = arith.constant 0 : index
    %c0_15 = arith.constant 0 : index
    %20 = vector.load %arg3[%c0_13, %c0_14, %c0_15] : memref<1x16x192xf32, #tpu.memory_space<vmem>>, vector<1x16x192xf32>
    %21 = vector.shape_cast %20 : vector<1x16x192xf32> to vector<16x192xf32>
    %22 = arith.truncf %21 : vector<16x192xf32> to vector<16x192xbf16>
    %cst_16 = arith.constant dense<0.000000e+00> : vector<16x32xf32>
    %23 = tpu.matmul %22, %0, %cst_16 {dimension_numbers = #tpu.dot_dimension_numbers<[1], [0], [0], [1], [0, 0, 1, 1], [], []>} : vector<16x192xbf16>, vector<192x32xbf16>, vector<16x32xf32> -> vector<16x32xf32>
    %24 = arith.addf %23, %11 : vector<16x32xf32>
    %c0_17 = arith.constant 0 : index
    %c0_18 = arith.constant 0 : index
    %c0_19 = arith.constant 0 : index
    %25 = vector.load %arg9[%c0_17, %c0_18, %c0_19] : memref<1x16x32xf32, #tpu.memory_space<vmem>>, vector<1x16x32xf32>
    %26 = vector.shape_cast %25 : vector<1x16x32xf32> to vector<16x32xf32>
    %27 = vector.shape_cast %24 : vector<16x32xf32> to vector<1x16x32xf32>
    tpu.vector_store %arg9[%c0_17, %c0_18, %c0_19], %27 {strides = array<i32>} : memref<1x16x32xf32, #tpu.memory_space<vmem>>, vector<1x16x32xf32>,
    return
  }
  func.func @transform_0(%arg0: i32, %arg1: i32) -> (i32, i32, i32) {
    %c0_i32 = arith.constant 0 : i32
    %c0_i32_0 = arith.constant 0 : i32
    return %arg0, %arg1, %c0_i32 : i32, i32, i32
  }
  func.func @transform_1(%arg0: i32, %arg1: i32) -> (i32, i32, i32) {
    %c0_i32 = arith.constant 0 : i32
    %c0_i32_0 = arith.constant 0 : i32
    return %arg0, %arg1, %c0_i32 : i32, i32, i32
  }
  func.func @transform_2(%arg0: i32, %arg1: i32) -> (i32, i32) {
    %c0_i32 = arith.constant 0 : i32
    %c0_i32_0 = arith.constant 0 : i32
    return %arg1, %c0_i32 : i32, i32
  }
  func.func @transform_3(%arg0: i32, %arg1: i32) -> (i32, i32) {
    %c0_i32 = arith.constant 0 : i32
    %c0_i32_0 = arith.constant 0 : i32
    %c0_i32_1 = arith.constant 0 : i32
    return %c0_i32, %c0_i32_0 : i32, i32
  }
  func.func @transform_4(%arg0: i32, %arg1: i32) -> (i32, i32) {
    %c0_i32 = arith.constant 0 : i32
    %c0_i32_0 = arith.constant 0 : i32
    %c0_i32_1 = arith.constant 0 : i32
    return %c0_i32, %c0_i32_0 : i32, i32
  }
  func.func @transform_5(%arg0: i32, %arg1: i32) -> (i32, i32) {
    %c0_i32 = arith.constant 0 : i32
    %c0_i32_0 = arith.constant 0 : i32
    %c0_i32_1 = arith.constant 0 : i32
    return %c0_i32, %c0_i32_0 : i32, i32
  }
  func.func @transform_6(%arg0: i32, %arg1: i32) -> (i32, i32, i32) {
    %c0_i32 = arith.constant 0 : i32
    %c0_i32_0 = arith.constant 0 : i32
    return %arg0, %arg1, %c0_i32 : i32, i32, i32
  }
  func.func @transform_7(%arg0: i32, %arg1: i32) -> (i32, i32, i32) {
    %c0_i32 = arith.constant 0 : i32
    %c0_i32_0 = arith.constant 0 : i32
    return %arg0, %arg1, %c0_i32 : i32, i32, i32
  }
}

module attributes {stable_mosaic.version = 11 : i64} {
  func.func @_mlp_kernel(%arg0: i32, %arg1: memref<24x32xf32, #tpu.memory_space<vmem>>, %arg2: memref<24x32xf32, #tpu.memory_space<vmem>>, %arg3: memref<1x32xf32, #tpu.memory_space<vmem>>, %arg4: memref<1x32xf32, #tpu.memory_space<vmem>>, %arg5: memref<32x128xbf16, #tpu.memory_space<vmem>>, %arg6: memref<1x128xf32, #tpu.memory_space<vmem>>, %arg7: memref<128x32xbf16, #tpu.memory_space<vmem>>, %arg8: memref<1x32xf32, #tpu.memory_space<vmem>>, %arg9: memref<24x32xf32, #tpu.memory_space<vmem>>, %arg10: memref<24x32xf32, #tpu.memory_space<vmem>>) attributes {dimension_semantics = [#tpu.dimension_semantics<parallel>], iteration_bounds = array<i64: 2>, scalar_prefetch = 0 : i64, scratch_operands = 0 : i64, tpu.core_type = #tpu.core_type<tc>, window_params = [{transform_indices = @transform_0, window_bounds = array<i64: 24, 32>}, {transform_indices = @transform_1, window_bounds = array<i64: 24, 32>}, {pipeline_mode = #tpu.pipeline_mode<synchronous>, transform_indices = @transform_2, window_bounds = array<i64: 1, 32>}, {pipeline_mode = #tpu.pipeline_mode<synchronous>, transform_indices = @transform_3, window_bounds = array<i64: 1, 32>}, {pipeline_mode = #tpu.pipeline_mode<synchronous>, transform_indices = @transform_4, window_bounds = array<i64: 32, 128>}, {pipeline_mode = #tpu.pipeline_mode<synchronous>, transform_indices = @transform_5, window_bounds = array<i64: 1, 128>}, {pipeline_mode = #tpu.pipeline_mode<synchronous>, transform_indices = @transform_6, window_bounds = array<i64: 128, 32>}, {pipeline_mode = #tpu.pipeline_mode<synchronous>, transform_indices = @transform_7, window_bounds = array<i64: 1, 32>}, {transform_indices = @transform_8, window_bounds = array<i64: 24, 32>}, {transform_indices = @transform_9, window_bounds = array<i64: 24, 32>}]} {
    %c0 = arith.constant 0 : index
    %c0_0 = arith.constant 0 : index
    %0 = vector.load %arg3[%c0, %c0_0] : memref<1x32xf32, #tpu.memory_space<vmem>>, vector<1x32xf32>
    %c0_1 = arith.constant 0 : index
    %c0_2 = arith.constant 0 : index
    %1 = vector.load %arg4[%c0_1, %c0_2] : memref<1x32xf32, #tpu.memory_space<vmem>>, vector<1x32xf32>
    %c0_3 = arith.constant 0 : index
    %c0_4 = arith.constant 0 : index
    %2 = vector.load %arg5[%c0_3, %c0_4] : memref<32x128xbf16, #tpu.memory_space<vmem>>, vector<32x128xbf16>
    %c0_5 = arith.constant 0 : index
    %c0_6 = arith.constant 0 : index
    %3 = vector.load %arg6[%c0_5, %c0_6] : memref<1x128xf32, #tpu.memory_space<vmem>>, vector<1x128xf32>
    %c0_7 = arith.constant 0 : index
    %c0_8 = arith.constant 0 : index
    %4 = vector.load %arg7[%c0_7, %c0_8] : memref<128x32xbf16, #tpu.memory_space<vmem>>, vector<128x32xbf16>
    %c0_9 = arith.constant 0 : index
    %c0_10 = arith.constant 0 : index
    %5 = vector.load %arg8[%c0_9, %c0_10] : memref<1x32xf32, #tpu.memory_space<vmem>>, vector<1x32xf32>
    %c0_11 = arith.constant 0 : index
    %c0_12 = arith.constant 0 : index
    %6 = vector.load %arg1[%c0_11, %c0_12] : memref<24x32xf32, #tpu.memory_space<vmem>>, vector<24x32xf32>
    %cst = arith.constant dense<0.000000e+00> : vector<24xf32>
    %7 = vector.multi_reduction <add>, %6, %cst [1] : vector<24x32xf32> to vector<24xf32>
    %8 = vector.shape_cast %7 : vector<24xf32> to vector<24x1xf32>
    %cst_13 = arith.constant 3.200000e+01 : f32
    %9 = vector.broadcast %cst_13 : f32 to vector<24x1xf32>
    %10 = arith.divf %8, %9 : vector<24x1xf32>
    %11 = vector.broadcast %10 : vector<24x1xf32> to vector<24x32xf32>
    %12 = arith.subf %6, %11 : vector<24x32xf32>
    %13 = arith.mulf %12, %12 : vector<24x32xf32>
    %cst_14 = arith.constant dense<0.000000e+00> : vector<24xf32>
    %14 = vector.multi_reduction <add>, %13, %cst_14 [1] : vector<24x32xf32> to vector<24xf32>
    %15 = vector.shape_cast %14 : vector<24xf32> to vector<24x1xf32>
    %cst_15 = arith.constant 3.200000e+01 : f32
    %16 = vector.broadcast %cst_15 : f32 to vector<24x1xf32>
    %17 = arith.divf %15, %16 : vector<24x1xf32>
    %18 = vector.broadcast %10 : vector<24x1xf32> to vector<24x32xf32>
    %19 = arith.subf %6, %18 : vector<24x32xf32>
    %cst_16 = arith.constant 9.99999974E-6 : f32
    %20 = vector.broadcast %cst_16 : f32 to vector<24x1xf32>
    %21 = arith.addf %17, %20 : vector<24x1xf32>
    %22 = math.rsqrt %21 : vector<24x1xf32>
    %23 = vector.broadcast %22 : vector<24x1xf32> to vector<24x32xf32>
    %24 = arith.mulf %19, %23 : vector<24x32xf32>
    %25 = vector.broadcast %0 : vector<1x32xf32> to vector<24x32xf32>
    %26 = arith.mulf %24, %25 : vector<24x32xf32>
    %27 = vector.broadcast %1 : vector<1x32xf32> to vector<24x32xf32>
    %28 = arith.addf %26, %27 : vector<24x32xf32>
    %29 = arith.truncf %28 : vector<24x32xf32> to vector<24x32xbf16>
    %cst_17 = arith.constant dense<0.000000e+00> : vector<24x128xf32>
    %30 = tpu.matmul %29, %2, %cst_17 {dimension_numbers = #tpu.dot_dimension_numbers<[1], [0], [0], [1], [0, 0, 1, 1], [], []>} : vector<24x32xbf16>, vector<32x128xbf16>, vector<24x128xf32> -> vector<24x128xf32>
    %31 = vector.broadcast %3 : vector<1x128xf32> to vector<24x128xf32>
    %32 = arith.addf %30, %31 : vector<24x128xf32>
    %cst_18 = arith.constant 5.000000e-01 : f32
    %33 = vector.broadcast %cst_18 : f32 to vector<24x128xf32>
    %34 = arith.mulf %33, %32 : vector<24x128xf32>
    %35 = arith.mulf %32, %32 : vector<24x128xf32>
    %36 = arith.mulf %35, %32 : vector<24x128xf32>
    %cst_19 = arith.constant 4.471500e-02 : f32
    %37 = vector.broadcast %cst_19 : f32 to vector<24x128xf32>
    %38 = arith.mulf %37, %36 : vector<24x128xf32>
    %39 = arith.addf %32, %38 : vector<24x128xf32>
    %cst_20 = arith.constant 0.797884583 : f32
    %40 = vector.broadcast %cst_20 : f32 to vector<24x128xf32>
    %41 = arith.mulf %40, %39 : vector<24x128xf32>
    %42 = math.tanh %41 : vector<24x128xf32>
    %cst_21 = arith.constant 1.000000e+00 : f32
    %43 = vector.broadcast %cst_21 : f32 to vector<24x128xf32>
    %44 = arith.addf %43, %42 : vector<24x128xf32>
    %45 = arith.mulf %34, %44 : vector<24x128xf32>
    %46 = arith.truncf %45 : vector<24x128xf32> to vector<24x128xbf16>
    %cst_22 = arith.constant dense<0.000000e+00> : vector<24x32xf32>
    %47 = tpu.matmul %46, %4, %cst_22 {dimension_numbers = #tpu.dot_dimension_numbers<[1], [0], [0], [1], [0, 0, 1, 1], [], []>} : vector<24x128xbf16>, vector<128x32xbf16>, vector<24x32xf32> -> vector<24x32xf32>
    %48 = vector.broadcast %5 : vector<1x32xf32> to vector<24x32xf32>
    %49 = arith.addf %47, %48 : vector<24x32xf32>
    %50 = arith.addf %6, %49 : vector<24x32xf32>
    %c0_23 = arith.constant 0 : index
    %c0_24 = arith.constant 0 : index
    %51 = vector.load %arg9[%c0_23, %c0_24] : memref<24x32xf32, #tpu.memory_space<vmem>>, vector<24x32xf32>
    tpu.vector_store %arg9[%c0_23, %c0_24], %50 {strides = array<i32>} : memref<24x32xf32, #tpu.memory_space<vmem>>, vector<24x32xf32>,
    %c0_25 = arith.constant 0 : index
    %c0_26 = arith.constant 0 : index
    %52 = vector.load %arg2[%c0_25, %c0_26] : memref<24x32xf32, #tpu.memory_space<vmem>>, vector<24x32xf32>
    %cst_27 = arith.constant dense<0.000000e+00> : vector<24xf32>
    %53 = vector.multi_reduction <add>, %52, %cst_27 [1] : vector<24x32xf32> to vector<24xf32>
    %54 = vector.shape_cast %53 : vector<24xf32> to vector<24x1xf32>
    %cst_28 = arith.constant 3.200000e+01 : f32
    %55 = vector.broadcast %cst_28 : f32 to vector<24x1xf32>
    %56 = arith.divf %54, %55 : vector<24x1xf32>
    %57 = vector.broadcast %56 : vector<24x1xf32> to vector<24x32xf32>
    %58 = arith.subf %52, %57 : vector<24x32xf32>
    %59 = arith.mulf %58, %58 : vector<24x32xf32>
    %cst_29 = arith.constant dense<0.000000e+00> : vector<24xf32>
    %60 = vector.multi_reduction <add>, %59, %cst_29 [1] : vector<24x32xf32> to vector<24xf32>
    %61 = vector.shape_cast %60 : vector<24xf32> to vector<24x1xf32>
    %cst_30 = arith.constant 3.200000e+01 : f32
    %62 = vector.broadcast %cst_30 : f32 to vector<24x1xf32>
    %63 = arith.divf %61, %62 : vector<24x1xf32>
    %64 = vector.broadcast %56 : vector<24x1xf32> to vector<24x32xf32>
    %65 = arith.subf %52, %64 : vector<24x32xf32>
    %cst_31 = arith.constant 9.99999974E-6 : f32
    %66 = vector.broadcast %cst_31 : f32 to vector<24x1xf32>
    %67 = arith.addf %63, %66 : vector<24x1xf32>
    %68 = math.rsqrt %67 : vector<24x1xf32>
    %69 = vector.broadcast %68 : vector<24x1xf32> to vector<24x32xf32>
    %70 = arith.mulf %65, %69 : vector<24x32xf32>
    %71 = vector.broadcast %0 : vector<1x32xf32> to vector<24x32xf32>
    %72 = arith.mulf %70, %71 : vector<24x32xf32>
    %73 = vector.broadcast %1 : vector<1x32xf32> to vector<24x32xf32>
    %74 = arith.addf %72, %73 : vector<24x32xf32>
    %75 = arith.truncf %74 : vector<24x32xf32> to vector<24x32xbf16>
    %cst_32 = arith.constant dense<0.000000e+00> : vector<24x128xf32>
    %76 = tpu.matmul %75, %2, %cst_32 {dimension_numbers = #tpu.dot_dimension_numbers<[1], [0], [0], [1], [0, 0, 1, 1], [], []>} : vector<24x32xbf16>, vector<32x128xbf16>, vector<24x128xf32> -> vector<24x128xf32>
    %77 = vector.broadcast %3 : vector<1x128xf32> to vector<24x128xf32>
    %78 = arith.addf %76, %77 : vector<24x128xf32>
    %cst_33 = arith.constant 5.000000e-01 : f32
    %79 = vector.broadcast %cst_33 : f32 to vector<24x128xf32>
    %80 = arith.mulf %79, %78 : vector<24x128xf32>
    %81 = arith.mulf %78, %78 : vector<24x128xf32>
    %82 = arith.mulf %81, %78 : vector<24x128xf32>
    %cst_34 = arith.constant 4.471500e-02 : f32
    %83 = vector.broadcast %cst_34 : f32 to vector<24x128xf32>
    %84 = arith.mulf %83, %82 : vector<24x128xf32>
    %85 = arith.addf %78, %84 : vector<24x128xf32>
    %cst_35 = arith.constant 0.797884583 : f32
    %86 = vector.broadcast %cst_35 : f32 to vector<24x128xf32>
    %87 = arith.mulf %86, %85 : vector<24x128xf32>
    %88 = math.tanh %87 : vector<24x128xf32>
    %cst_36 = arith.constant 1.000000e+00 : f32
    %89 = vector.broadcast %cst_36 : f32 to vector<24x128xf32>
    %90 = arith.addf %89, %88 : vector<24x128xf32>
    %91 = arith.mulf %80, %90 : vector<24x128xf32>
    %92 = arith.truncf %91 : vector<24x128xf32> to vector<24x128xbf16>
    %cst_37 = arith.constant dense<0.000000e+00> : vector<24x32xf32>
    %93 = tpu.matmul %92, %4, %cst_37 {dimension_numbers = #tpu.dot_dimension_numbers<[1], [0], [0], [1], [0, 0, 1, 1], [], []>} : vector<24x128xbf16>, vector<128x32xbf16>, vector<24x32xf32> -> vector<24x32xf32>
    %94 = vector.broadcast %5 : vector<1x32xf32> to vector<24x32xf32>
    %95 = arith.addf %93, %94 : vector<24x32xf32>
    %96 = arith.addf %52, %95 : vector<24x32xf32>
    %c0_38 = arith.constant 0 : index
    %c0_39 = arith.constant 0 : index
    %97 = vector.load %arg10[%c0_38, %c0_39] : memref<24x32xf32, #tpu.memory_space<vmem>>, vector<24x32xf32>
    tpu.vector_store %arg10[%c0_38, %c0_39], %96 {strides = array<i32>} : memref<24x32xf32, #tpu.memory_space<vmem>>, vector<24x32xf32>,
    return
  }
  func.func @transform_0(%arg0: i32) -> (i32, i32) {
    %c0_i32 = arith.constant 0 : i32
    %c0_i32_0 = arith.constant 0 : i32
    return %arg0, %c0_i32 : i32, i32
  }
  func.func @transform_1(%arg0: i32) -> (i32, i32) {
    %c0_i32 = arith.constant 0 : i32
    %c0_i32_0 = arith.constant 0 : i32
    return %arg0, %c0_i32 : i32, i32
  }
  func.func @transform_2(%arg0: i32) -> (i32, i32) {
    %c0_i32 = arith.constant 0 : i32
    %c0_i32_0 = arith.constant 0 : i32
    %c0_i32_1 = arith.constant 0 : i32
    return %c0_i32, %c0_i32_0 : i32, i32
  }
  func.func @transform_3(%arg0: i32) -> (i32, i32) {
    %c0_i32 = arith.constant 0 : i32
    %c0_i32_0 = arith.constant 0 : i32
    %c0_i32_1 = arith.constant 0 : i32
    return %c0_i32, %c0_i32_0 : i32, i32
  }
  func.func @transform_4(%arg0: i32) -> (i32, i32) {
    %c0_i32 = arith.constant 0 : i32
    %c0_i32_0 = arith.constant 0 : i32
    %c0_i32_1 = arith.constant 0 : i32
    return %c0_i32, %c0_i32_0 : i32, i32
  }
  func.func @transform_5(%arg0: i32) -> (i32, i32) {
    %c0_i32 = arith.constant 0 : i32
    %c0_i32_0 = arith.constant 0 : i32
    %c0_i32_1 = arith.constant 0 : i32
    return %c0_i32, %c0_i32_0 : i32, i32
  }
  func.func @transform_6(%arg0: i32) -> (i32, i32) {
    %c0_i32 = arith.constant 0 : i32
    %c0_i32_0 = arith.constant 0 : i32
    %c0_i32_1 = arith.constant 0 : i32
    return %c0_i32, %c0_i32_0 : i32, i32
  }
  func.func @transform_7(%arg0: i32) -> (i32, i32) {
    %c0_i32 = arith.constant 0 : i32
    %c0_i32_0 = arith.constant 0 : i32
    %c0_i32_1 = arith.constant 0 : i32
    return %c0_i32, %c0_i32_0 : i32, i32
  }
  func.func @transform_8(%arg0: i32) -> (i32, i32) {
    %c0_i32 = arith.constant 0 : i32
    %c0_i32_0 = arith.constant 0 : i32
    return %arg0, %c0_i32 : i32, i32
  }
  func.func @transform_9(%arg0: i32) -> (i32, i32) {
    %c0_i32 = arith.constant 0 : i32
    %c0_i32_0 = arith.constant 0 : i32
    return %arg0, %c0_i32 : i32, i32
  }
}

module attributes {stable_mosaic.version = 11 : i64} {
  func.func @_attn_block_kernel(%arg0: i32, %arg1: i32, %arg2: memref<1x20x32xf32, #tpu.memory_space<vmem>>, %arg3: memref<1x20x32xf32, #tpu.memory_space<vmem>>, %arg4: memref<1x32xf32, #tpu.memory_space<vmem>>, %arg5: memref<1x32xf32, #tpu.memory_space<vmem>>, %arg6: memref<1x32xf32, #tpu.memory_space<vmem>>, %arg7: memref<1x32xf32, #tpu.memory_space<vmem>>, %arg8: memref<32x96xbf16, #tpu.memory_space<vmem>>, %arg9: memref<1x96xf32, #tpu.memory_space<vmem>>, %arg10: memref<32x96xbf16, #tpu.memory_space<vmem>>, %arg11: memref<1x96xf32, #tpu.memory_space<vmem>>, %arg12: memref<32x32xbf16, #tpu.memory_space<vmem>>, %arg13: memref<1x32xf32, #tpu.memory_space<vmem>>, %arg14: memref<32x32xbf16, #tpu.memory_space<vmem>>, %arg15: memref<1x32xf32, #tpu.memory_space<vmem>>, %arg16: memref<1x20x32xf32, #tpu.memory_space<vmem>>, %arg17: memref<1x20x32xf32, #tpu.memory_space<vmem>>, %arg18: memref<20x64xbf16, #tpu.memory_space<vmem>>) attributes {dimension_semantics = [#tpu.dimension_semantics<parallel>, #tpu.dimension_semantics<parallel>], iteration_bounds = array<i64: 2, 1>, scalar_prefetch = 0 : i64, scratch_operands = 1 : i64, tpu.core_type = #tpu.core_type<tc>, window_params = [{transform_indices = @transform_0, window_bounds = array<i64: 1, 20, 32>}, {transform_indices = @transform_1, window_bounds = array<i64: 1, 20, 32>}, {pipeline_mode = #tpu.pipeline_mode<synchronous>, transform_indices = @transform_2, window_bounds = array<i64: 1, 32>}, {pipeline_mode = #tpu.pipeline_mode<synchronous>, transform_indices = @transform_3, window_bounds = array<i64: 1, 32>}, {pipeline_mode = #tpu.pipeline_mode<synchronous>, transform_indices = @transform_4, window_bounds = array<i64: 1, 32>}, {pipeline_mode = #tpu.pipeline_mode<synchronous>, transform_indices = @transform_5, window_bounds = array<i64: 1, 32>}, {pipeline_mode = #tpu.pipeline_mode<synchronous>, transform_indices = @transform_6, window_bounds = array<i64: 32, 96>}, {pipeline_mode = #tpu.pipeline_mode<synchronous>, transform_indices = @transform_7, window_bounds = array<i64: 1, 96>}, {pipeline_mode = #tpu.pipeline_mode<synchronous>, transform_indices = @transform_8, window_bounds = array<i64: 32, 96>}, {pipeline_mode = #tpu.pipeline_mode<synchronous>, transform_indices = @transform_9, window_bounds = array<i64: 1, 96>}, {pipeline_mode = #tpu.pipeline_mode<synchronous>, transform_indices = @transform_10, window_bounds = array<i64: 32, 32>}, {pipeline_mode = #tpu.pipeline_mode<synchronous>, transform_indices = @transform_11, window_bounds = array<i64: 1, 32>}, {pipeline_mode = #tpu.pipeline_mode<synchronous>, transform_indices = @transform_12, window_bounds = array<i64: 32, 32>}, {pipeline_mode = #tpu.pipeline_mode<synchronous>, transform_indices = @transform_13, window_bounds = array<i64: 1, 32>}, {transform_indices = @transform_14, window_bounds = array<i64: 1, 20, 32>}, {transform_indices = @transform_15, window_bounds = array<i64: 1, 20, 32>}]} {
    %c0 = arith.constant 0 : index
    %c0_0 = arith.constant 0 : index
    %c0_1 = arith.constant 0 : index
    %0 = vector.load %arg2[%c0, %c0_0, %c0_1] : memref<1x20x32xf32, #tpu.memory_space<vmem>>, vector<1x20x32xf32>
    %1 = vector.shape_cast %0 : vector<1x20x32xf32> to vector<20x32xf32>
    %c0_2 = arith.constant 0 : index
    %c0_3 = arith.constant 0 : index
    %c0_4 = arith.constant 0 : index
    %2 = vector.load %arg3[%c0_2, %c0_3, %c0_4] : memref<1x20x32xf32, #tpu.memory_space<vmem>>, vector<1x20x32xf32>
    %3 = vector.shape_cast %2 : vector<1x20x32xf32> to vector<20x32xf32>
    %c0_5 = arith.constant 0 : index
    %c0_6 = arith.constant 0 : index
    %4 = vector.load %arg4[%c0_5, %c0_6] : memref<1x32xf32, #tpu.memory_space<vmem>>, vector<1x32xf32>
    %c0_7 = arith.constant 0 : index
    %c0_8 = arith.constant 0 : index
    %5 = vector.load %arg5[%c0_7, %c0_8] : memref<1x32xf32, #tpu.memory_space<vmem>>, vector<1x32xf32>
    %cst = arith.constant dense<0.000000e+00> : vector<20xf32>
    %6 = vector.multi_reduction <add>, %1, %cst [1] : vector<20x32xf32> to vector<20xf32>
    %7 = vector.shape_cast %6 : vector<20xf32> to vector<20x1xf32>
    %cst_9 = arith.constant 3.200000e+01 : f32
    %8 = vector.broadcast %cst_9 : f32 to vector<20x1xf32>
    %9 = arith.divf %7, %8 : vector<20x1xf32>
    %10 = vector.broadcast %9 : vector<20x1xf32> to vector<20x32xf32>
    %11 = arith.subf %1, %10 : vector<20x32xf32>
    %12 = arith.mulf %11, %11 : vector<20x32xf32>
    %cst_10 = arith.constant dense<0.000000e+00> : vector<20xf32>
    %13 = vector.multi_reduction <add>, %12, %cst_10 [1] : vector<20x32xf32> to vector<20xf32>
    %14 = vector.shape_cast %13 : vector<20xf32> to vector<20x1xf32>
    %cst_11 = arith.constant 3.200000e+01 : f32
    %15 = vector.broadcast %cst_11 : f32 to vector<20x1xf32>
    %16 = arith.divf %14, %15 : vector<20x1xf32>
    %17 = vector.broadcast %9 : vector<20x1xf32> to vector<20x32xf32>
    %18 = arith.subf %1, %17 : vector<20x32xf32>
    %cst_12 = arith.constant 9.99999974E-6 : f32
    %19 = vector.broadcast %cst_12 : f32 to vector<20x1xf32>
    %20 = arith.addf %16, %19 : vector<20x1xf32>
    %21 = math.rsqrt %20 : vector<20x1xf32>
    %22 = vector.broadcast %21 : vector<20x1xf32> to vector<20x32xf32>
    %23 = arith.mulf %18, %22 : vector<20x32xf32>
    %24 = vector.broadcast %4 : vector<1x32xf32> to vector<20x32xf32>
    %25 = arith.mulf %23, %24 : vector<20x32xf32>
    %26 = vector.broadcast %5 : vector<1x32xf32> to vector<20x32xf32>
    %27 = arith.addf %25, %26 : vector<20x32xf32>
    %28 = arith.truncf %27 : vector<20x32xf32> to vector<20x32xbf16>
    %c0_13 = arith.constant 0 : index
    %c0_14 = arith.constant 0 : index
    %29 = vector.load %arg6[%c0_13, %c0_14] : memref<1x32xf32, #tpu.memory_space<vmem>>, vector<1x32xf32>
    %c0_15 = arith.constant 0 : index
    %c0_16 = arith.constant 0 : index
    %30 = vector.load %arg7[%c0_15, %c0_16] : memref<1x32xf32, #tpu.memory_space<vmem>>, vector<1x32xf32>
    %cst_17 = arith.constant dense<0.000000e+00> : vector<20xf32>
    %31 = vector.multi_reduction <add>, %3, %cst_17 [1] : vector<20x32xf32> to vector<20xf32>
    %32 = vector.shape_cast %31 : vector<20xf32> to vector<20x1xf32>
    %cst_18 = arith.constant 3.200000e+01 : f32
    %33 = vector.broadcast %cst_18 : f32 to vector<20x1xf32>
    %34 = arith.divf %32, %33 : vector<20x1xf32>
    %35 = vector.broadcast %34 : vector<20x1xf32> to vector<20x32xf32>
    %36 = arith.subf %3, %35 : vector<20x32xf32>
    %37 = arith.mulf %36, %36 : vector<20x32xf32>
    %cst_19 = arith.constant dense<0.000000e+00> : vector<20xf32>
    %38 = vector.multi_reduction <add>, %37, %cst_19 [1] : vector<20x32xf32> to vector<20xf32>
    %39 = vector.shape_cast %38 : vector<20xf32> to vector<20x1xf32>
    %cst_20 = arith.constant 3.200000e+01 : f32
    %40 = vector.broadcast %cst_20 : f32 to vector<20x1xf32>
    %41 = arith.divf %39, %40 : vector<20x1xf32>
    %42 = vector.broadcast %34 : vector<20x1xf32> to vector<20x32xf32>
    %43 = arith.subf %3, %42 : vector<20x32xf32>
    %cst_21 = arith.constant 9.99999974E-6 : f32
    %44 = vector.broadcast %cst_21 : f32 to vector<20x1xf32>
    %45 = arith.addf %41, %44 : vector<20x1xf32>
    %46 = math.rsqrt %45 : vector<20x1xf32>
    %47 = vector.broadcast %46 : vector<20x1xf32> to vector<20x32xf32>
    %48 = arith.mulf %43, %47 : vector<20x32xf32>
    %49 = vector.broadcast %29 : vector<1x32xf32> to vector<20x32xf32>
    %50 = arith.mulf %48, %49 : vector<20x32xf32>
    %51 = vector.broadcast %30 : vector<1x32xf32> to vector<20x32xf32>
    %52 = arith.addf %50, %51 : vector<20x32xf32>
    %53 = arith.truncf %52 : vector<20x32xf32> to vector<20x32xbf16>
    %c0_22 = arith.constant 0 : index
    %c0_23 = arith.constant 0 : index
    %54 = vector.load %arg8[%c0_22, %c0_23] : memref<32x96xbf16, #tpu.memory_space<vmem>>, vector<32x96xbf16>
    %cst_24 = arith.constant dense<0.000000e+00> : vector<20x96xf32>
    %55 = tpu.matmul %28, %54, %cst_24 {dimension_numbers = #tpu.dot_dimension_numbers<[1], [0], [0], [1], [0, 0, 1, 1], [], []>} : vector<20x32xbf16>, vector<32x96xbf16>, vector<20x96xf32> -> vector<20x96xf32>
    %c0_25 = arith.constant 0 : index
    %c0_26 = arith.constant 0 : index
    %56 = vector.load %arg9[%c0_25, %c0_26] : memref<1x96xf32, #tpu.memory_space<vmem>>, vector<1x96xf32>
    %57 = vector.broadcast %56 : vector<1x96xf32> to vector<20x96xf32>
    %58 = arith.addf %55, %57 : vector<20x96xf32>
    %59 = arith.truncf %58 : vector<20x96xf32> to vector<20x96xbf16>
    %60 = vector.shape_cast %59 : vector<20x96xbf16> to vector<5x4x96xbf16>
    %c0_27 = arith.constant 0 : index
    %c0_28 = arith.constant 0 : index
    %61 = vector.load %arg10[%c0_27, %c0_28] : memref<32x96xbf16, #tpu.memory_space<vmem>>, vector<32x96xbf16>
    %cst_29 = arith.constant dense<0.000000e+00> : vector<20x96xf32>
    %62 = tpu.matmul %53, %61, %cst_29 {dimension_numbers = #tpu.dot_dimension_numbers<[1], [0], [0], [1], [0, 0, 1, 1], [], []>} : vector<20x32xbf16>, vector<32x96xbf16>, vector<20x96xf32> -> vector<20x96xf32>
    %c0_30 = arith.constant 0 : index
    %c0_31 = arith.constant 0 : index
    %63 = vector.load %arg11[%c0_30, %c0_31] : memref<1x96xf32, #tpu.memory_space<vmem>>, vector<1x96xf32>
    %64 = vector.broadcast %63 : vector<1x96xf32> to vector<20x96xf32>
    %65 = arith.addf %62, %64 : vector<20x96xf32>
    %66 = arith.truncf %65 : vector<20x96xf32> to vector<20x96xbf16>
    %67 = vector.shape_cast %66 : vector<20x96xbf16> to vector<5x4x96xbf16>
    %68 = vector.extract_strided_slice %60 {offsets = [0, 0, 0], sizes = [5, 4, 8], strides = [1, 1, 1]} : vector<5x4x96xbf16> to vector<5x4x8xbf16>
    %69 = vector.extract_strided_slice %60 {offsets = [0, 0, 32], sizes = [5, 4, 8], strides = [1, 1, 1]} : vector<5x4x96xbf16> to vector<5x4x8xbf16>
    "tpu.trace_start"() <{level = 10 : i32, message = "ntd,nsd->nts"}> : () -> ()
    %cst_32 = arith.constant dense<0.000000e+00> : vector<5x4x4xf32>
    %70 = tpu.matmul %68, %69, %cst_32 {dimension_numbers = #tpu.dot_dimension_numbers<[2], [2], [1], [1], [0, 0, 0, 1, 1, 1], [0], [0]>} : vector<5x4x8xbf16>, vector<5x4x8xbf16>, vector<5x4x4xf32> -> vector<5x4x4xf32>
    "tpu.trace_stop"() : () -> ()
    %71 = vector.extract_strided_slice %67 {offsets = [0, 0, 0], sizes = [5, 4, 8], strides = [1, 1, 1]} : vector<5x4x96xbf16> to vector<5x4x8xbf16>
    %72 = vector.extract_strided_slice %67 {offsets = [0, 0, 32], sizes = [5, 4, 8], strides = [1, 1, 1]} : vector<5x4x96xbf16> to vector<5x4x8xbf16>
    "tpu.trace_start"() <{level = 10 : i32, message = "ntd,nsd->nts"}> : () -> ()
    %cst_33 = arith.constant dense<0.000000e+00> : vector<5x4x4xf32>
    %73 = tpu.matmul %71, %72, %cst_33 {dimension_numbers = #tpu.dot_dimension_numbers<[2], [2], [1], [1], [0, 0, 0, 1, 1, 1], [0], [0]>} : vector<5x4x8xbf16>, vector<5x4x8xbf16>, vector<5x4x4xf32> -> vector<5x4x4xf32>
    "tpu.trace_stop"() : () -> ()
    %74 = arith.addf %70, %73 : vector<5x4x4xf32>
    %cst_34 = arith.constant dense<0xFF800000> : vector<5x4xf32>
    %75 = vector.multi_reduction <maximumf>, %74, %cst_34 [2] : vector<5x4x4xf32> to vector<5x4xf32>
    %76 = vector.shape_cast %75 : vector<5x4xf32> to vector<5x4x1xf32>
    %77 = vector.broadcast %76 : vector<5x4x1xf32> to vector<5x4x4xf32>
    %78 = arith.subf %74, %77 : vector<5x4x4xf32>
    %79 = math.exp %78 : vector<5x4x4xf32>
    %cst_35 = arith.constant dense<0.000000e+00> : vector<5x4xf32>
    %80 = vector.multi_reduction <add>, %79, %cst_35 [2] : vector<5x4x4xf32> to vector<5x4xf32>
    %81 = vector.shape_cast %80 : vector<5x4xf32> to vector<5x4x1xf32>
    %82 = tpu.reciprocal %81 {approx = true} : vector<5x4x1xf32> -> vector<5x4x1xf32>
    %83 = vector.broadcast %82 : vector<5x4x1xf32> to vector<5x4x4xf32>
    %84 = arith.mulf %79, %83 : vector<5x4x4xf32>
    %85 = arith.truncf %84 : vector<5x4x4xf32> to vector<5x4x4xbf16>
    %86 = vector.extract_strided_slice %60 {offsets = [0, 0, 64], sizes = [5, 4, 8], strides = [1, 1, 1]} : vector<5x4x96xbf16> to vector<5x4x8xbf16>
    "tpu.trace_start"() <{level = 10 : i32, message = "nts,nsd->ntd"}> : () -> ()
    %cst_36 = arith.constant dense<0.000000e+00> : vector<5x4x8xf32>
    %87 = tpu.matmul %85, %86, %cst_36 {dimension_numbers = #tpu.dot_dimension_numbers<[2], [1], [1], [2], [0, 0, 0, 1, 1, 2], [0], [0]>} : vector<5x4x4xbf16>, vector<5x4x8xbf16>, vector<5x4x8xf32> -> vector<5x4x8xf32>
    "tpu.trace_stop"() : () -> ()
    %88 = vector.extract_strided_slice %67 {offsets = [0, 0, 64], sizes = [5, 4, 8], strides = [1, 1, 1]} : vector<5x4x96xbf16> to vector<5x4x8xbf16>
    "tpu.trace_start"() <{level = 10 : i32, message = "nts,nsd->ntd"}> : () -> ()
    %cst_37 = arith.constant dense<0.000000e+00> : vector<5x4x8xf32>
    %89 = tpu.matmul %85, %88, %cst_37 {dimension_numbers = #tpu.dot_dimension_numbers<[2], [1], [1], [2], [0, 0, 0, 1, 1, 2], [0], [0]>} : vector<5x4x4xbf16>, vector<5x4x8xbf16>, vector<5x4x8xf32> -> vector<5x4x8xf32>
    "tpu.trace_stop"() : () -> ()
    %90 = vector.shape_cast %87 : vector<5x4x8xf32> to vector<20x8xf32>
    %91 = arith.truncf %90 : vector<20x8xf32> to vector<20x8xbf16>
    %c0_38 = arith.constant 0 : index
    %c0_39 = arith.constant 0 : index
    %92 = vector.load %arg18[%c0_38, %c0_39] : memref<20x64xbf16, #tpu.memory_space<vmem>>, vector<20x8xbf16>
    tpu.vector_store %arg18[%c0_38, %c0_39], %91 {strides = array<i32>} : memref<20x64xbf16, #tpu.memory_space<vmem>>, vector<20x8xbf16>,
    %93 = vector.shape_cast %89 : vector<5x4x8xf32> to vector<20x8xf32>
    %94 = arith.truncf %93 : vector<20x8xf32> to vector<20x8xbf16>
    %c0_40 = arith.constant 0 : index
    %c8 = arith.constant 8 : index
    %95 = vector.load %arg18[%c0_40, %c8] : memref<20x64xbf16, #tpu.memory_space<vmem>>, vector<20x8xbf16>
    tpu.vector_store %arg18[%c0_40, %c8], %94 {strides = array<i32>} : memref<20x64xbf16, #tpu.memory_space<vmem>>, vector<20x8xbf16>,
    %96 = vector.extract_strided_slice %60 {offsets = [0, 0, 8], sizes = [5, 4, 8], strides = [1, 1, 1]} : vector<5x4x96xbf16> to vector<5x4x8xbf16>
    %97 = vector.extract_strided_slice %60 {offsets = [0, 0, 40], sizes = [5, 4, 8], strides = [1, 1, 1]} : vector<5x4x96xbf16> to vector<5x4x8xbf16>
    "tpu.trace_start"() <{level = 10 : i32, message = "ntd,nsd->nts"}> : () -> ()
    %cst_41 = arith.constant dense<0.000000e+00> : vector<5x4x4xf32>
    %98 = tpu.matmul %96, %97, %cst_41 {dimension_numbers = #tpu.dot_dimension_numbers<[2], [2], [1], [1], [0, 0, 0, 1, 1, 1], [0], [0]>} : vector<5x4x8xbf16>, vector<5x4x8xbf16>, vector<5x4x4xf32> -> vector<5x4x4xf32>
    "tpu.trace_stop"() : () -> ()
    %99 = vector.extract_strided_slice %67 {offsets = [0, 0, 8], sizes = [5, 4, 8], strides = [1, 1, 1]} : vector<5x4x96xbf16> to vector<5x4x8xbf16>
    %100 = vector.extract_strided_slice %67 {offsets = [0, 0, 40], sizes = [5, 4, 8], strides = [1, 1, 1]} : vector<5x4x96xbf16> to vector<5x4x8xbf16>
    "tpu.trace_start"() <{level = 10 : i32, message = "ntd,nsd->nts"}> : () -> ()
    %cst_42 = arith.constant dense<0.000000e+00> : vector<5x4x4xf32>
    %101 = tpu.matmul %99, %100, %cst_42 {dimension_numbers = #tpu.dot_dimension_numbers<[2], [2], [1], [1], [0, 0, 0, 1, 1, 1], [0], [0]>} : vector<5x4x8xbf16>, vector<5x4x8xbf16>, vector<5x4x4xf32> -> vector<5x4x4xf32>
    "tpu.trace_stop"() : () -> ()
    %102 = arith.addf %98, %101 : vector<5x4x4xf32>
    %cst_43 = arith.constant dense<0xFF800000> : vector<5x4xf32>
    %103 = vector.multi_reduction <maximumf>, %102, %cst_43 [2] : vector<5x4x4xf32> to vector<5x4xf32>
    %104 = vector.shape_cast %103 : vector<5x4xf32> to vector<5x4x1xf32>
    %105 = vector.broadcast %104 : vector<5x4x1xf32> to vector<5x4x4xf32>
    %106 = arith.subf %102, %105 : vector<5x4x4xf32>
    %107 = math.exp %106 : vector<5x4x4xf32>
    %cst_44 = arith.constant dense<0.000000e+00> : vector<5x4xf32>
    %108 = vector.multi_reduction <add>, %107, %cst_44 [2] : vector<5x4x4xf32> to vector<5x4xf32>
    %109 = vector.shape_cast %108 : vector<5x4xf32> to vector<5x4x1xf32>
    %110 = tpu.reciprocal %109 {approx = true} : vector<5x4x1xf32> -> vector<5x4x1xf32>
    %111 = vector.broadcast %110 : vector<5x4x1xf32> to vector<5x4x4xf32>
    %112 = arith.mulf %107, %111 : vector<5x4x4xf32>
    %113 = arith.truncf %112 : vector<5x4x4xf32> to vector<5x4x4xbf16>
    %114 = vector.extract_strided_slice %60 {offsets = [0, 0, 72], sizes = [5, 4, 8], strides = [1, 1, 1]} : vector<5x4x96xbf16> to vector<5x4x8xbf16>
    "tpu.trace_start"() <{level = 10 : i32, message = "nts,nsd->ntd"}> : () -> ()
    %cst_45 = arith.constant dense<0.000000e+00> : vector<5x4x8xf32>
    %115 = tpu.matmul %113, %114, %cst_45 {dimension_numbers = #tpu.dot_dimension_numbers<[2], [1], [1], [2], [0, 0, 0, 1, 1, 2], [0], [0]>} : vector<5x4x4xbf16>, vector<5x4x8xbf16>, vector<5x4x8xf32> -> vector<5x4x8xf32>
    "tpu.trace_stop"() : () -> ()
    %116 = vector.extract_strided_slice %67 {offsets = [0, 0, 72], sizes = [5, 4, 8], strides = [1, 1, 1]} : vector<5x4x96xbf16> to vector<5x4x8xbf16>
    "tpu.trace_start"() <{level = 10 : i32, message = "nts,nsd->ntd"}> : () -> ()
    %cst_46 = arith.constant dense<0.000000e+00> : vector<5x4x8xf32>
    %117 = tpu.matmul %113, %116, %cst_46 {dimension_numbers = #tpu.dot_dimension_numbers<[2], [1], [1], [2], [0, 0, 0, 1, 1, 2], [0], [0]>} : vector<5x4x4xbf16>, vector<5x4x8xbf16>, vector<5x4x8xf32> -> vector<5x4x8xf32>
    "tpu.trace_stop"() : () -> ()
    %118 = vector.shape_cast %115 : vector<5x4x8xf32> to vector<20x8xf32>
    %119 = arith.truncf %118 : vector<20x8xf32> to vector<20x8xbf16>
    %c0_47 = arith.constant 0 : index
    %c16 = arith.constant 16 : index
    %120 = vector.load %arg18[%c0_47, %c16] : memref<20x64xbf16, #tpu.memory_space<vmem>>, vector<20x8xbf16>
    tpu.vector_store %arg18[%c0_47, %c16], %119 {strides = array<i32>} : memref<20x64xbf16, #tpu.memory_space<vmem>>, vector<20x8xbf16>,
    %121 = vector.shape_cast %117 : vector<5x4x8xf32> to vector<20x8xf32>
    %122 = arith.truncf %121 : vector<20x8xf32> to vector<20x8xbf16>
    %c0_48 = arith.constant 0 : index
    %c24 = arith.constant 24 : index
    %123 = vector.load %arg18[%c0_48, %c24] : memref<20x64xbf16, #tpu.memory_space<vmem>>, vector<20x8xbf16>
    tpu.vector_store %arg18[%c0_48, %c24], %122 {strides = array<i32>} : memref<20x64xbf16, #tpu.memory_space<vmem>>, vector<20x8xbf16>,
    %124 = vector.extract_strided_slice %60 {offsets = [0, 0, 16], sizes = [5, 4, 8], strides = [1, 1, 1]} : vector<5x4x96xbf16> to vector<5x4x8xbf16>
    %125 = vector.extract_strided_slice %60 {offsets = [0, 0, 48], sizes = [5, 4, 8], strides = [1, 1, 1]} : vector<5x4x96xbf16> to vector<5x4x8xbf16>
    "tpu.trace_start"() <{level = 10 : i32, message = "ntd,nsd->nts"}> : () -> ()
    %cst_49 = arith.constant dense<0.000000e+00> : vector<5x4x4xf32>
    %126 = tpu.matmul %124, %125, %cst_49 {dimension_numbers = #tpu.dot_dimension_numbers<[2], [2], [1], [1], [0, 0, 0, 1, 1, 1], [0], [0]>} : vector<5x4x8xbf16>, vector<5x4x8xbf16>, vector<5x4x4xf32> -> vector<5x4x4xf32>
    "tpu.trace_stop"() : () -> ()
    %127 = vector.extract_strided_slice %67 {offsets = [0, 0, 16], sizes = [5, 4, 8], strides = [1, 1, 1]} : vector<5x4x96xbf16> to vector<5x4x8xbf16>
    %128 = vector.extract_strided_slice %67 {offsets = [0, 0, 48], sizes = [5, 4, 8], strides = [1, 1, 1]} : vector<5x4x96xbf16> to vector<5x4x8xbf16>
    "tpu.trace_start"() <{level = 10 : i32, message = "ntd,nsd->nts"}> : () -> ()
    %cst_50 = arith.constant dense<0.000000e+00> : vector<5x4x4xf32>
    %129 = tpu.matmul %127, %128, %cst_50 {dimension_numbers = #tpu.dot_dimension_numbers<[2], [2], [1], [1], [0, 0, 0, 1, 1, 1], [0], [0]>} : vector<5x4x8xbf16>, vector<5x4x8xbf16>, vector<5x4x4xf32> -> vector<5x4x4xf32>
    "tpu.trace_stop"() : () -> ()
    %130 = arith.addf %126, %129 : vector<5x4x4xf32>
    %cst_51 = arith.constant dense<0xFF800000> : vector<5x4xf32>
    %131 = vector.multi_reduction <maximumf>, %130, %cst_51 [2] : vector<5x4x4xf32> to vector<5x4xf32>
    %132 = vector.shape_cast %131 : vector<5x4xf32> to vector<5x4x1xf32>
    %133 = vector.broadcast %132 : vector<5x4x1xf32> to vector<5x4x4xf32>
    %134 = arith.subf %130, %133 : vector<5x4x4xf32>
    %135 = math.exp %134 : vector<5x4x4xf32>
    %cst_52 = arith.constant dense<0.000000e+00> : vector<5x4xf32>
    %136 = vector.multi_reduction <add>, %135, %cst_52 [2] : vector<5x4x4xf32> to vector<5x4xf32>
    %137 = vector.shape_cast %136 : vector<5x4xf32> to vector<5x4x1xf32>
    %138 = tpu.reciprocal %137 {approx = true} : vector<5x4x1xf32> -> vector<5x4x1xf32>
    %139 = vector.broadcast %138 : vector<5x4x1xf32> to vector<5x4x4xf32>
    %140 = arith.mulf %135, %139 : vector<5x4x4xf32>
    %141 = arith.truncf %140 : vector<5x4x4xf32> to vector<5x4x4xbf16>
    %142 = vector.extract_strided_slice %60 {offsets = [0, 0, 80], sizes = [5, 4, 8], strides = [1, 1, 1]} : vector<5x4x96xbf16> to vector<5x4x8xbf16>
    "tpu.trace_start"() <{level = 10 : i32, message = "nts,nsd->ntd"}> : () -> ()
    %cst_53 = arith.constant dense<0.000000e+00> : vector<5x4x8xf32>
    %143 = tpu.matmul %141, %142, %cst_53 {dimension_numbers = #tpu.dot_dimension_numbers<[2], [1], [1], [2], [0, 0, 0, 1, 1, 2], [0], [0]>} : vector<5x4x4xbf16>, vector<5x4x8xbf16>, vector<5x4x8xf32> -> vector<5x4x8xf32>
    "tpu.trace_stop"() : () -> ()
    %144 = vector.extract_strided_slice %67 {offsets = [0, 0, 80], sizes = [5, 4, 8], strides = [1, 1, 1]} : vector<5x4x96xbf16> to vector<5x4x8xbf16>
    "tpu.trace_start"() <{level = 10 : i32, message = "nts,nsd->ntd"}> : () -> ()
    %cst_54 = arith.constant dense<0.000000e+00> : vector<5x4x8xf32>
    %145 = tpu.matmul %141, %144, %cst_54 {dimension_numbers = #tpu.dot_dimension_numbers<[2], [1], [1], [2], [0, 0, 0, 1, 1, 2], [0], [0]>} : vector<5x4x4xbf16>, vector<5x4x8xbf16>, vector<5x4x8xf32> -> vector<5x4x8xf32>
    "tpu.trace_stop"() : () -> ()
    %146 = vector.shape_cast %143 : vector<5x4x8xf32> to vector<20x8xf32>
    %147 = arith.truncf %146 : vector<20x8xf32> to vector<20x8xbf16>
    %c0_55 = arith.constant 0 : index
    %c32 = arith.constant 32 : index
    %148 = vector.load %arg18[%c0_55, %c32] : memref<20x64xbf16, #tpu.memory_space<vmem>>, vector<20x8xbf16>
    tpu.vector_store %arg18[%c0_55, %c32], %147 {strides = array<i32>} : memref<20x64xbf16, #tpu.memory_space<vmem>>, vector<20x8xbf16>,
    %149 = vector.shape_cast %145 : vector<5x4x8xf32> to vector<20x8xf32>
    %150 = arith.truncf %149 : vector<20x8xf32> to vector<20x8xbf16>
    %c0_56 = arith.constant 0 : index
    %c40 = arith.constant 40 : index
    %151 = vector.load %arg18[%c0_56, %c40] : memref<20x64xbf16, #tpu.memory_space<vmem>>, vector<20x8xbf16>
    tpu.vector_store %arg18[%c0_56, %c40], %150 {strides = array<i32>} : memref<20x64xbf16, #tpu.memory_space<vmem>>, vector<20x8xbf16>,
    %152 = vector.extract_strided_slice %60 {offsets = [0, 0, 24], sizes = [5, 4, 8], strides = [1, 1, 1]} : vector<5x4x96xbf16> to vector<5x4x8xbf16>
    %153 = vector.extract_strided_slice %60 {offsets = [0, 0, 56], sizes = [5, 4, 8], strides = [1, 1, 1]} : vector<5x4x96xbf16> to vector<5x4x8xbf16>
    "tpu.trace_start"() <{level = 10 : i32, message = "ntd,nsd->nts"}> : () -> ()
    %cst_57 = arith.constant dense<0.000000e+00> : vector<5x4x4xf32>
    %154 = tpu.matmul %152, %153, %cst_57 {dimension_numbers = #tpu.dot_dimension_numbers<[2], [2], [1], [1], [0, 0, 0, 1, 1, 1], [0], [0]>} : vector<5x4x8xbf16>, vector<5x4x8xbf16>, vector<5x4x4xf32> -> vector<5x4x4xf32>
    "tpu.trace_stop"() : () -> ()
    %155 = vector.extract_strided_slice %67 {offsets = [0, 0, 24], sizes = [5, 4, 8], strides = [1, 1, 1]} : vector<5x4x96xbf16> to vector<5x4x8xbf16>
    %156 = vector.extract_strided_slice %67 {offsets = [0, 0, 56], sizes = [5, 4, 8], strides = [1, 1, 1]} : vector<5x4x96xbf16> to vector<5x4x8xbf16>
    "tpu.trace_start"() <{level = 10 : i32, message = "ntd,nsd->nts"}> : () -> ()
    %cst_58 = arith.constant dense<0.000000e+00> : vector<5x4x4xf32>
    %157 = tpu.matmul %155, %156, %cst_58 {dimension_numbers = #tpu.dot_dimension_numbers<[2], [2], [1], [1], [0, 0, 0, 1, 1, 1], [0], [0]>} : vector<5x4x8xbf16>, vector<5x4x8xbf16>, vector<5x4x4xf32> -> vector<5x4x4xf32>
    "tpu.trace_stop"() : () -> ()
    %158 = arith.addf %154, %157 : vector<5x4x4xf32>
    %cst_59 = arith.constant dense<0xFF800000> : vector<5x4xf32>
    %159 = vector.multi_reduction <maximumf>, %158, %cst_59 [2] : vector<5x4x4xf32> to vector<5x4xf32>
    %160 = vector.shape_cast %159 : vector<5x4xf32> to vector<5x4x1xf32>
    %161 = vector.broadcast %160 : vector<5x4x1xf32> to vector<5x4x4xf32>
    %162 = arith.subf %158, %161 : vector<5x4x4xf32>
    %163 = math.exp %162 : vector<5x4x4xf32>
    %cst_60 = arith.constant dense<0.000000e+00> : vector<5x4xf32>
    %164 = vector.multi_reduction <add>, %163, %cst_60 [2] : vector<5x4x4xf32> to vector<5x4xf32>
    %165 = vector.shape_cast %164 : vector<5x4xf32> to vector<5x4x1xf32>
    %166 = tpu.reciprocal %165 {approx = true} : vector<5x4x1xf32> -> vector<5x4x1xf32>
    %167 = vector.broadcast %166 : vector<5x4x1xf32> to vector<5x4x4xf32>
    %168 = arith.mulf %163, %167 : vector<5x4x4xf32>
    %169 = arith.truncf %168 : vector<5x4x4xf32> to vector<5x4x4xbf16>
    %170 = vector.extract_strided_slice %60 {offsets = [0, 0, 88], sizes = [5, 4, 8], strides = [1, 1, 1]} : vector<5x4x96xbf16> to vector<5x4x8xbf16>
    "tpu.trace_start"() <{level = 10 : i32, message = "nts,nsd->ntd"}> : () -> ()
    %cst_61 = arith.constant dense<0.000000e+00> : vector<5x4x8xf32>
    %171 = tpu.matmul %169, %170, %cst_61 {dimension_numbers = #tpu.dot_dimension_numbers<[2], [1], [1], [2], [0, 0, 0, 1, 1, 2], [0], [0]>} : vector<5x4x4xbf16>, vector<5x4x8xbf16>, vector<5x4x8xf32> -> vector<5x4x8xf32>
    "tpu.trace_stop"() : () -> ()
    %172 = vector.extract_strided_slice %67 {offsets = [0, 0, 88], sizes = [5, 4, 8], strides = [1, 1, 1]} : vector<5x4x96xbf16> to vector<5x4x8xbf16>
    "tpu.trace_start"() <{level = 10 : i32, message = "nts,nsd->ntd"}> : () -> ()
    %cst_62 = arith.constant dense<0.000000e+00> : vector<5x4x8xf32>
    %173 = tpu.matmul %169, %172, %cst_62 {dimension_numbers = #tpu.dot_dimension_numbers<[2], [1], [1], [2], [0, 0, 0, 1, 1, 2], [0], [0]>} : vector<5x4x4xbf16>, vector<5x4x8xbf16>, vector<5x4x8xf32> -> vector<5x4x8xf32>
    "tpu.trace_stop"() : () -> ()
    %174 = vector.shape_cast %171 : vector<5x4x8xf32> to vector<20x8xf32>
    %175 = arith.truncf %174 : vector<20x8xf32> to vector<20x8xbf16>
    %c0_63 = arith.constant 0 : index
    %c48 = arith.constant 48 : index
    %176 = vector.load %arg18[%c0_63, %c48] : memref<20x64xbf16, #tpu.memory_space<vmem>>, vector<20x8xbf16>
    tpu.vector_store %arg18[%c0_63, %c48], %175 {strides = array<i32>} : memref<20x64xbf16, #tpu.memory_space<vmem>>, vector<20x8xbf16>,
    %177 = vector.shape_cast %173 : vector<5x4x8xf32> to vector<20x8xf32>
    %178 = arith.truncf %177 : vector<20x8xf32> to vector<20x8xbf16>
    %c0_64 = arith.constant 0 : index
    %c56 = arith.constant 56 : index
    %179 = vector.load %arg18[%c0_64, %c56] : memref<20x64xbf16, #tpu.memory_space<vmem>>, vector<20x8xbf16>
    tpu.vector_store %arg18[%c0_64, %c56], %178 {strides = array<i32>} : memref<20x64xbf16, #tpu.memory_space<vmem>>, vector<20x8xbf16>,
    %c0_65 = arith.constant 0 : index
    %c0_66 = arith.constant 0 : index
    %180 = vector.load %arg18[%c0_65, %c0_66] : memref<20x64xbf16, #tpu.memory_space<vmem>>, vector<20x32xbf16>
    %c0_67 = arith.constant 0 : index
    %c0_68 = arith.constant 0 : index
    %181 = vector.load %arg12[%c0_67, %c0_68] : memref<32x32xbf16, #tpu.memory_space<vmem>>, vector<32x32xbf16>
    %cst_69 = arith.constant dense<0.000000e+00> : vector<20x32xf32>
    %182 = tpu.matmul %180, %181, %cst_69 {dimension_numbers = #tpu.dot_dimension_numbers<[1], [0], [0], [1], [0, 0, 1, 1], [], []>} : vector<20x32xbf16>, vector<32x32xbf16>, vector<20x32xf32> -> vector<20x32xf32>
    %c0_70 = arith.constant 0 : index
    %c0_71 = arith.constant 0 : index
    %183 = vector.load %arg13[%c0_70, %c0_71] : memref<1x32xf32, #tpu.memory_space<vmem>>, vector<1x32xf32>
    %184 = vector.broadcast %183 : vector<1x32xf32> to vector<20x32xf32>
    %185 = arith.addf %182, %184 : vector<20x32xf32>
    %c0_72 = arith.constant 0 : index
    %c32_73 = arith.constant 32 : index
    %186 = vector.load %arg18[%c0_72, %c32_73] : memref<20x64xbf16, #tpu.memory_space<vmem>>, vector<20x32xbf16>
    %c0_74 = arith.constant 0 : index
    %c0_75 = arith.constant 0 : index
    %187 = vector.load %arg14[%c0_74, %c0_75] : memref<32x32xbf16, #tpu.memory_space<vmem>>, vector<32x32xbf16>
    %cst_76 = arith.constant dense<0.000000e+00> : vector<20x32xf32>
    %188 = tpu.matmul %186, %187, %cst_76 {dimension_numbers = #tpu.dot_dimension_numbers<[1], [0], [0], [1], [0, 0, 1, 1], [], []>} : vector<20x32xbf16>, vector<32x32xbf16>, vector<20x32xf32> -> vector<20x32xf32>
    %c0_77 = arith.constant 0 : index
    %c0_78 = arith.constant 0 : index
    %189 = vector.load %arg15[%c0_77, %c0_78] : memref<1x32xf32, #tpu.memory_space<vmem>>, vector<1x32xf32>
    %190 = vector.broadcast %189 : vector<1x32xf32> to vector<20x32xf32>
    %191 = arith.addf %188, %190 : vector<20x32xf32>
    %192 = arith.addf %1, %185 : vector<20x32xf32>
    %c0_79 = arith.constant 0 : index
    %c0_80 = arith.constant 0 : index
    %c0_81 = arith.constant 0 : index
    %193 = vector.load %arg16[%c0_79, %c0_80, %c0_81] : memref<1x20x32xf32, #tpu.memory_space<vmem>>, vector<1x20x32xf32>
    %194 = vector.shape_cast %193 : vector<1x20x32xf32> to vector<20x32xf32>
    %195 = vector.shape_cast %192 : vector<20x32xf32> to vector<1x20x32xf32>
    tpu.vector_store %arg16[%c0_79, %c0_80, %c0_81], %195 {strides = array<i32>} : memref<1x20x32xf32, #tpu.memory_space<vmem>>, vector<1x20x32xf32>,
    %196 = arith.addf %3, %191 : vector<20x32xf32>
    %c0_82 = arith.constant 0 : index
    %c0_83 = arith.constant 0 : index
    %c0_84 = arith.constant 0 : index
    %197 = vector.load %arg17[%c0_82, %c0_83, %c0_84] : memref<1x20x32xf32, #tpu.memory_space<vmem>>, vector<1x20x32xf32>
    %198 = vector.shape_cast %197 : vector<1x20x32xf32> to vector<20x32xf32>
    %199 = vector.shape_cast %196 : vector<20x32xf32> to vector<1x20x32xf32>
    tpu.vector_store %arg17[%c0_82, %c0_83, %c0_84], %199 {strides = array<i32>} : memref<1x20x32xf32, #tpu.memory_space<vmem>>, vector<1x20x32xf32>,
    return
  }
  func.func @transform_0(%arg0: i32, %arg1: i32) -> (i32, i32, i32) {
    %c0_i32 = arith.constant 0 : i32
    %c0_i32_0 = arith.constant 0 : i32
    return %arg0, %arg1, %c0_i32 : i32, i32, i32
  }
  func.func @transform_1(%arg0: i32, %arg1: i32) -> (i32, i32, i32) {
    %c0_i32 = arith.constant 0 : i32
    %c0_i32_0 = arith.constant 0 : i32
    return %arg0, %arg1, %c0_i32 : i32, i32, i32
  }
  func.func @transform_2(%arg0: i32, %arg1: i32) -> (i32, i32) {
    %c0_i32 = arith.constant 0 : i32
    %c0_i32_0 = arith.constant 0 : i32
    %c0_i32_1 = arith.constant 0 : i32
    return %c0_i32, %c0_i32_0 : i32, i32
  }
  func.func @transform_3(%arg0: i32, %arg1: i32) -> (i32, i32) {
    %c0_i32 = arith.constant 0 : i32
    %c0_i32_0 = arith.constant 0 : i32
    %c0_i32_1 = arith.constant 0 : i32
    return %c0_i32, %c0_i32_0 : i32, i32
  }
  func.func @transform_4(%arg0: i32, %arg1: i32) -> (i32, i32) {
    %c0_i32 = arith.constant 0 : i32
    %c0_i32_0 = arith.constant 0 : i32
    %c0_i32_1 = arith.constant 0 : i32
    return %c0_i32, %c0_i32_0 : i32, i32
  }
  func.func @transform_5(%arg0: i32, %arg1: i32) -> (i32, i32) {
    %c0_i32 = arith.constant 0 : i32
    %c0_i32_0 = arith.constant 0 : i32
    %c0_i32_1 = arith.constant 0 : i32
    return %c0_i32, %c0_i32_0 : i32, i32
  }
  func.func @transform_6(%arg0: i32, %arg1: i32) -> (i32, i32) {
    %c0_i32 = arith.constant 0 : i32
    %c0_i32_0 = arith.constant 0 : i32
    %c0_i32_1 = arith.constant 0 : i32
    return %c0_i32, %c0_i32_0 : i32, i32
  }
  func.func @transform_7(%arg0: i32, %arg1: i32) -> (i32, i32) {
    %c0_i32 = arith.constant 0 : i32
    %c0_i32_0 = arith.constant 0 : i32
    %c0_i32_1 = arith.constant 0 : i32
    return %c0_i32, %c0_i32_0 : i32, i32
  }
  func.func @transform_8(%arg0: i32, %arg1: i32) -> (i32, i32) {
    %c0_i32 = arith.constant 0 : i32
    %c0_i32_0 = arith.constant 0 : i32
    %c0_i32_1 = arith.constant 0 : i32
    return %c0_i32, %c0_i32_0 : i32, i32
  }
  func.func @transform_9(%arg0: i32, %arg1: i32) -> (i32, i32) {
    %c0_i32 = arith.constant 0 : i32
    %c0_i32_0 = arith.constant 0 : i32
    %c0_i32_1 = arith.constant 0 : i32
    return %c0_i32, %c0_i32_0 : i32, i32
  }
  func.func @transform_10(%arg0: i32, %arg1: i32) -> (i32, i32) {
    %c0_i32 = arith.constant 0 : i32
    %c0_i32_0 = arith.constant 0 : i32
    %c0_i32_1 = arith.constant 0 : i32
    return %c0_i32, %c0_i32_0 : i32, i32
  }
  func.func @transform_11(%arg0: i32, %arg1: i32) -> (i32, i32) {
    %c0_i32 = arith.constant 0 : i32
    %c0_i32_0 = arith.constant 0 : i32
    %c0_i32_1 = arith.constant 0 : i32
    return %c0_i32, %c0_i32_0 : i32, i32
  }
  func.func @transform_12(%arg0: i32, %arg1: i32) -> (i32, i32) {
    %c0_i32 = arith.constant 0 : i32
    %c0_i32_0 = arith.constant 0 : i32
    %c0_i32_1 = arith.constant 0 : i32
    return %c0_i32, %c0_i32_0 : i32, i32
  }
  func.func @transform_13(%arg0: i32, %arg1: i32) -> (i32, i32) {
    %c0_i32 = arith.constant 0 : i32
    %c0_i32_0 = arith.constant 0 : i32
    %c0_i32_1 = arith.constant 0 : i32
    return %c0_i32, %c0_i32_0 : i32, i32
  }
  func.func @transform_14(%arg0: i32, %arg1: i32) -> (i32, i32, i32) {
    %c0_i32 = arith.constant 0 : i32
    %c0_i32_0 = arith.constant 0 : i32
    return %arg0, %arg1, %c0_i32 : i32, i32, i32
  }
  func.func @transform_15(%arg0: i32, %arg1: i32) -> (i32, i32, i32) {
    %c0_i32 = arith.constant 0 : i32
    %c0_i32_0 = arith.constant 0 : i32
    return %arg0, %arg1, %c0_i32 : i32, i32, i32
  }
}

module attributes {stable_mosaic.version = 11 : i64} {
  func.func @_head_kernel(%arg0: i32, %arg1: memref<8x32xf32, #tpu.memory_space<vmem>>, %arg2: memref<1x32xf32, #tpu.memory_space<vmem>>, %arg3: memref<1x32xf32, #tpu.memory_space<vmem>>, %arg4: memref<32x5xbf16, #tpu.memory_space<vmem>>, %arg5: memref<1x5xf32, #tpu.memory_space<vmem>>, %arg6: memref<8x5xf32, #tpu.memory_space<vmem>>) attributes {dimension_semantics = [#tpu.dimension_semantics<parallel>], iteration_bounds = array<i64: 1>, scalar_prefetch = 0 : i64, scratch_operands = 0 : i64, tpu.core_type = #tpu.core_type<tc>, window_params = [{transform_indices = @transform_0, window_bounds = array<i64: 8, 32>}, {pipeline_mode = #tpu.pipeline_mode<synchronous>, transform_indices = @transform_1, window_bounds = array<i64: 1, 32>}, {pipeline_mode = #tpu.pipeline_mode<synchronous>, transform_indices = @transform_2, window_bounds = array<i64: 1, 32>}, {pipeline_mode = #tpu.pipeline_mode<synchronous>, transform_indices = @transform_3, window_bounds = array<i64: 32, 5>}, {pipeline_mode = #tpu.pipeline_mode<synchronous>, transform_indices = @transform_4, window_bounds = array<i64: 1, 5>}, {transform_indices = @transform_5, window_bounds = array<i64: 8, 5>}]} {
    %c0 = arith.constant 0 : index
    %c0_0 = arith.constant 0 : index
    %0 = vector.load %arg1[%c0, %c0_0] : memref<8x32xf32, #tpu.memory_space<vmem>>, vector<8x32xf32>
    %c0_1 = arith.constant 0 : index
    %c0_2 = arith.constant 0 : index
    %1 = vector.load %arg2[%c0_1, %c0_2] : memref<1x32xf32, #tpu.memory_space<vmem>>, vector<1x32xf32>
    %c0_3 = arith.constant 0 : index
    %c0_4 = arith.constant 0 : index
    %2 = vector.load %arg3[%c0_3, %c0_4] : memref<1x32xf32, #tpu.memory_space<vmem>>, vector<1x32xf32>
    %cst = arith.constant dense<0.000000e+00> : vector<8xf32>
    %3 = vector.multi_reduction <add>, %0, %cst [1] : vector<8x32xf32> to vector<8xf32>
    %4 = vector.shape_cast %3 : vector<8xf32> to vector<8x1xf32>
    %cst_5 = arith.constant 3.200000e+01 : f32
    %5 = vector.broadcast %cst_5 : f32 to vector<8x1xf32>
    %6 = arith.divf %4, %5 : vector<8x1xf32>
    %7 = vector.broadcast %6 : vector<8x1xf32> to vector<8x32xf32>
    %8 = arith.subf %0, %7 : vector<8x32xf32>
    %9 = arith.mulf %8, %8 : vector<8x32xf32>
    %cst_6 = arith.constant dense<0.000000e+00> : vector<8xf32>
    %10 = vector.multi_reduction <add>, %9, %cst_6 [1] : vector<8x32xf32> to vector<8xf32>
    %11 = vector.shape_cast %10 : vector<8xf32> to vector<8x1xf32>
    %cst_7 = arith.constant 3.200000e+01 : f32
    %12 = vector.broadcast %cst_7 : f32 to vector<8x1xf32>
    %13 = arith.divf %11, %12 : vector<8x1xf32>
    %14 = vector.broadcast %6 : vector<8x1xf32> to vector<8x32xf32>
    %15 = arith.subf %0, %14 : vector<8x32xf32>
    %cst_8 = arith.constant 9.99999974E-6 : f32
    %16 = vector.broadcast %cst_8 : f32 to vector<8x1xf32>
    %17 = arith.addf %13, %16 : vector<8x1xf32>
    %18 = math.rsqrt %17 : vector<8x1xf32>
    %19 = vector.broadcast %18 : vector<8x1xf32> to vector<8x32xf32>
    %20 = arith.mulf %15, %19 : vector<8x32xf32>
    %21 = vector.broadcast %1 : vector<1x32xf32> to vector<8x32xf32>
    %22 = arith.mulf %20, %21 : vector<8x32xf32>
    %23 = vector.broadcast %2 : vector<1x32xf32> to vector<8x32xf32>
    %24 = arith.addf %22, %23 : vector<8x32xf32>
    %25 = arith.truncf %24 : vector<8x32xf32> to vector<8x32xbf16>
    %c0_9 = arith.constant 0 : index
    %c0_10 = arith.constant 0 : index
    %26 = vector.load %arg4[%c0_9, %c0_10] : memref<32x5xbf16, #tpu.memory_space<vmem>>, vector<32x5xbf16>
    %cst_11 = arith.constant dense<0.000000e+00> : vector<8x5xf32>
    %27 = tpu.matmul %25, %26, %cst_11 {dimension_numbers = #tpu.dot_dimension_numbers<[1], [0], [0], [1], [0, 0, 1, 1], [], []>} : vector<8x32xbf16>, vector<32x5xbf16>, vector<8x5xf32> -> vector<8x5xf32>
    %c0_12 = arith.constant 0 : index
    %c0_13 = arith.constant 0 : index
    %28 = vector.load %arg5[%c0_12, %c0_13] : memref<1x5xf32, #tpu.memory_space<vmem>>, vector<1x5xf32>
    %29 = vector.broadcast %28 : vector<1x5xf32> to vector<8x5xf32>
    %30 = arith.addf %27, %29 : vector<8x5xf32>
    %c0_14 = arith.constant 0 : index
    %c0_15 = arith.constant 0 : index
    %31 = vector.load %arg6[%c0_14, %c0_15] : memref<8x5xf32, #tpu.memory_space<vmem>>, vector<8x5xf32>
    tpu.vector_store %arg6[%c0_14, %c0_15], %30 {strides = array<i32>} : memref<8x5xf32, #tpu.memory_space<vmem>>, vector<8x5xf32>,
    return
  }
  func.func @transform_0(%arg0: i32) -> (i32, i32) {
    %c0_i32 = arith.constant 0 : i32
    %c0_i32_0 = arith.constant 0 : i32
    return %arg0, %c0_i32 : i32, i32
  }
  func.func @transform_1(%arg0: i32) -> (i32, i32) {
    %c0_i32 = arith.constant 0 : i32
    %c0_i32_0 = arith.constant 0 : i32
    %c0_i32_1 = arith.constant 0 : i32
    return %c0_i32, %c0_i32_0 : i32, i32
  }
  func.func @transform_2(%arg0: i32) -> (i32, i32) {
    %c0_i32 = arith.constant 0 : i32
    %c0_i32_0 = arith.constant 0 : i32
    %c0_i32_1 = arith.constant 0 : i32
    return %c0_i32, %c0_i32_0 : i32, i32
  }
  func.func @transform_3(%arg0: i32) -> (i32, i32) {
    %c0_i32 = arith.constant 0 : i32
    %c0_i32_0 = arith.constant 0 : i32
    %c0_i32_1 = arith.constant 0 : i32
    return %c0_i32, %c0_i32_0 : i32, i32
  }
  func.func @transform_4(%arg0: i32) -> (i32, i32) {
    %c0_i32 = arith.constant 0 : i32
    %c0_i32_0 = arith.constant 0 : i32
    %c0_i32_1 = arith.constant 0 : i32
    return %c0_i32, %c0_i32_0 : i32, i32
  }
  func.func @transform_5(%arg0: i32) -> (i32, i32) {
    %c0_i32 = arith.constant 0 : i32
    %c0_i32_0 = arith.constant 0 : i32
    return %arg0, %c0_i32 : i32, i32
  }
}

</mosaic_0001>

<llo_original>
// kernel: video_transformer_forward.6
$region0: #{video_transformer_forward.6}
  #allocation0 [shape = 'u32[]', space=smem, size = 0x4, offset = 0x4, fixed_abs, tag = 'smem constant byte address 0x4 - core index']
  #allocation1 [shape = 'u32[72,128]{1,0:T(1,128)}', space=vmem, size = 0x9000, scoped, tag = 'internal scratch']
  %s0 = inlined_call_operand.vmem [shape: f32[2,16,192], index: 0, kind: input, shape index: {}]
  %s1 = inlined_call_operand.vmem [shape: f32[2,16,192], index: 1, kind: input, shape index: {}]
  %s2 = inlined_call_operand.vmem [shape: f32[4,32], index: 2, kind: input, shape index: {}]
  %s3 = inlined_call_operand.vmem [shape: f32[4,32], index: 3, kind: input, shape index: {}]
  %s4 = inlined_call_operand.vmem [shape: bf16[192,32], index: 4, kind: input, shape index: {}]
  %s5 = inlined_call_operand.vmem [shape: f32[1,32], index: 5, kind: input, shape index: {}]
  %s6 = inlined_call_operand.vmem [shape: f32[2,16,32], index: 6, kind: output, shape index: {0}]
  %s7 = inlined_call_operand.vmem [shape: f32[2,16,32], index: 7, kind: output, shape index: {1}]
  %8 = xla_tuple %s6, %s7
  %s9 = sld [smem:[#allocation0]]
  $region65: #{video_transformer_forward.6} parent=0
    _
  %s11 = ssub.s32 1, %s9
  %s12 = scalar_select 0, %s11, %s9
  loop: start=0, step=1, limit=4
  $region2: #{video_transformer_forward.6} parent=0 // loop_pre_header
    _
  $region3: #{video_transformer_forward.6} parent=0 // loop_header
    %s14 = sphi 0, %s18
    %p15 = scmp.ge.s32.totalorder %s14, 4
    %s21 = sphi 0, %s33
    %s22 = sphi 0, %s29
    %s23 = sphi 0, %s21
    %s24 = sphi 0, %s22
    %s25 = sphi 0, %s23
    %s26 = sphi 0, %s24
    %s38 = sphi 0, %s40
    %s41 = sphi 0, %s38
    %s42 = sphi 0, %s41
    %s58 = sphi 0, %s42
    %s66 = sphi 0, %s68
    %s69 = sphi 0, %s66
    %s70 = sphi 0, %s69
    %s86 = sphi 0, %s70
    %s92 = sphi 0, %s94
    %s95 = sphi 0, %s92
    %s96 = sphi 0, %s95
    %s112 = sphi 0, %s96
    %s116 = sphi 0, %s116
    %s118 = sphi 0, %s116
    %s119 = sphi 0, %s118
    %s133 = sphi 0, %s119
    %s137 = sphi 0, %s137
    %s139 = sphi 0, %s137
    %s140 = sphi 0, %s139
    %s154 = sphi 0, %s140
    %s158 = sphi 0, %s158
    %s160 = sphi 0, %s158
    %s161 = sphi 0, %s160
    %s175 = sphi 0, %s161
    %s183 = sphi 0, %s185
    %s186 = sphi 0, %s183
    %s187 = sphi 0, %s186
    %s203 = sphi 0, %s187
    %s211 = sphi 0, %s213
    %s214 = sphi 0, %s211
    %s215 = sphi 0, %s214
    %s231 = sphi 0, %s215
  $region4: #{video_transformer_forward.6} parent=0 // loop_header_branch
    %17 = sbr.rel (%p15) target = $region8
  $region5: #{video_transformer_forward.6} parent=0 // loop_body
    %s19 = ssub.s32 %s14, 1
    %s20 = ssub.s32 %s14, 2
    %s27 = sadd.s32 1, %s22
    %p28 = scmp.ge.s32.totalorder %s27, 1
    %s29 = scalar_select %p28, 0, %s27
    %s30 = sadd.s32 1, %s21
    %s31 = scalar_select %p28, %s30, %s21
    %p32 = scmp.ge.s32.totalorder %s31, 2
    %s33 = scalar_select %p32, 0, %s31
    %s34 = ssub.s32 %s21, %s33
    %s35 = ssub.s32 %s22, %s29
    %s36 = sor.u32 %s34, %s35
    %p37 = scmp.eq.s32.totalorder %s36, 0
    %s39 = sadd.s32 %s38, 1
    %s40 = scalar_select %p37, %s38, %s39
    %p43 = pneg %p37
    %p44 = scmp.eq.s32.totalorder %s14, 1
    %p45 = por %p43, %p44
    %p46 = scmp.ne.s32.totalorder %s38, %s41
    %p47 = scmp.eq.s32.totalorder %s14, 0
    %p48 = por %p46, %p47
    %p49 = scmp.ne.s32.totalorder %s38, %s41
    %p50 = scmp.eq.s32.totalorder %s19, 1
    %p51 = por %p49, %p50
    %p52 = scmp.ne.s32.totalorder %s41, %s42
    %p53 = scmp.eq.s32.totalorder %s19, 0
    %p54 = por %p52, %p53
    %p55 = scmp.ne.s32.totalorder %s41, %s42
    %p56 = scmp.eq.s32.totalorder %s20, 1
    %p57 = por %p55, %p56
    %p59 = scmp.ne.s32.totalorder %s42, %s58
    %p60 = scmp.eq.s32.totalorder %s20, 0
    %p61 = por %p59, %p60
    %s62 = ssub.s32 %s21, %s33
    %s63 = ssub.s32 %s22, %s29
    %s64 = sor.u32 %s62, %s63
    %p65 = scmp.eq.s32.totalorder %s64, 0
    %s67 = sadd.s32 %s66, 1
    %s68 = scalar_select %p65, %s66, %s67
    %p71 = pneg %p65
    %p72 = scmp.eq.s32.totalorder %s14, 1
    %p73 = por %p71, %p72
    %p74 = scmp.ne.s32.totalorder %s66, %s69
    %p75 = scmp.eq.s32.totalorder %s14, 0
    %p76 = por %p74, %p75
    %p77 = scmp.ne.s32.totalorder %s66, %s69
    %p78 = scmp.eq.s32.totalorder %s19, 1
    %p79 = por %p77, %p78
    %p80 = scmp.ne.s32.totalorder %s69, %s70
    %p81 = scmp.eq.s32.totalorder %s19, 0
    %p82 = por %p80, %p81
    %p83 = scmp.ne.s32.totalorder %s69, %s70
    %p84 = scmp.eq.s32.totalorder %s20, 1
    %p85 = por %p83, %p84
    %p87 = scmp.ne.s32.totalorder %s70, %s86
    %p88 = scmp.eq.s32.totalorder %s20, 0
    %p89 = por %p87, %p88
    %s90 = ssub.s32 %s22, %s29
    %p91 = scmp.eq.s32.totalorder %s90, 0
    %s93 = sadd.s32 %s92, 1
    %s94 = scalar_select %p91, %s92, %s93
    %p97 = pneg %p91
    %p98 = scmp.eq.s32.totalorder %s14, 1
    %p99 = por %p97, %p98
    %p100 = scmp.ne.s32.totalorder %s92, %s95
    %p101 = scmp.eq.s32.totalorder %s14, 0
    %p102 = por %p100, %p101
    %p103 = scmp.ne.s32.totalorder %s92, %s95
    %p104 = scmp.eq.s32.totalorder %s19, 1
    %p105 = por %p103, %p104
    %p106 = scmp.ne.s32.totalorder %s95, %s96
    %p107 = scmp.eq.s32.totalorder %s19, 0
    %p108 = por %p106, %p107
    %p109 = scmp.ne.s32.totalorder %s95, %s96
    %p110 = scmp.eq.s32.totalorder %s20, 1
    %p111 = por %p109, %p110
    %p113 = scmp.ne.s32.totalorder %s96, %s112
    %p114 = scmp.eq.s32.totalorder %s20, 0
    %p115 = por %p113, %p114
    %s117 = sadd.s32 %s116, 1
    %p120 = scmp.eq.s32.totalorder %s14, 1
    %p121 = scmp.ne.s32.totalorder %s116, %s118
    %p122 = scmp.eq.s32.totalorder %s14, 0
    %p123 = por %p121, %p122
    %p124 = scmp.ne.s32.totalorder %s116, %s118
    %p125 = scmp.eq.s32.totalorder %s19, 1
    %p126 = por %p124, %p125
    %p127 = scmp.ne.s32.totalorder %s118, %s119
    %p128 = scmp.eq.s32.totalorder %s19, 0
    %p129 = por %p127, %p128
    %p130 = scmp.ne.s32.totalorder %s118, %s119
    %p131 = scmp.eq.s32.totalorder %s20, 1
    %p132 = por %p130, %p131
    %p134 = scmp.ne.s32.totalorder %s119, %s133
    %p135 = scmp.eq.s32.totalorder %s20, 0
    %p136 = por %p134, %p135
    %s138 = sadd.s32 %s137, 1
    %p141 = scmp.eq.s32.totalorder %s14, 1
    %p142 = scmp.ne.s32.totalorder %s137, %s139
    %p143 = scmp.eq.s32.totalorder %s14, 0
    %p144 = por %p142, %p143
    %p145 = scmp.ne.s32.totalorder %s137, %s139
    %p146 = scmp.eq.s32.totalorder %s19, 1
    %p147 = por %p145, %p146
    %p148 = scmp.ne.s32.totalorder %s139, %s140
    %p149 = scmp.eq.s32.totalorder %s19, 0
    %p150 = por %p148, %p149
    %p151 = scmp.ne.s32.totalorder %s139, %s140
    %p152 = scmp.eq.s32.totalorder %s20, 1
    %p153 = por %p151, %p152
    %p155 = scmp.ne.s32.totalorder %s140, %s154
    %p156 = scmp.eq.s32.totalorder %s20, 0
    %p157 = por %p155, %p156
    %s159 = sadd.s32 %s158, 1
    %p162 = scmp.eq.s32.totalorder %s14, 1
    %p163 = scmp.ne.s32.totalorder %s158, %s160
    %p164 = scmp.eq.s32.totalorder %s14, 0
    %p165 = por %p163, %p164
    %p166 = scmp.ne.s32.totalorder %s158, %s160
    %p167 = scmp.eq.s32.totalorder %s19, 1
    %p168 = por %p166, %p167
    %p169 = scmp.ne.s32.totalorder %s160, %s161
    %p170 = scmp.eq.s32.totalorder %s19, 0
    %p171 = por %p169, %p170
    %p172 = scmp.ne.s32.totalorder %s160, %s161
    %p173 = scmp.eq.s32.totalorder %s20, 1
    %p174 = por %p172, %p173
    %p176 = scmp.ne.s32.totalorder %s161, %s175
    %p177 = scmp.eq.s32.totalorder %s20, 0
    %p178 = por %p176, %p177
    %s179 = ssub.s32 %s21, %s33
    %s180 = ssub.s32 %s22, %s29
    %s181 = sor.u32 %s179, %s180
    %p182 = scmp.eq.s32.totalorder %s181, 0
    %s184 = sadd.s32 %s183, 1
    %s185 = scalar_select %p182, %s183, %s184
    %p188 = pneg %p182
    %p189 = scmp.eq.s32.totalorder %s14, 1
    %p190 = por %p188, %p189
    %p191 = scmp.ne.s32.totalorder %s183, %s186
    %p192 = scmp.eq.s32.totalorder %s14, 0
    %p193 = por %p191, %p192
    %p194 = scmp.ne.s32.totalorder %s183, %s186
    %p195 = scmp.eq.s32.totalorder %s19, 1
    %p196 = por %p194, %p195
    %p197 = scmp.ne.s32.totalorder %s186, %s187
    %p198 = scmp.eq.s32.totalorder %s19, 0
    %p199 = por %p197, %p198
    %p200 = scmp.ne.s32.totalorder %s186, %s187
    %p201 = scmp.eq.s32.totalorder %s20, 1
    %p202 = por %p200, %p201
    %p204 = scmp.ne.s32.totalorder %s187, %s203
    %p205 = scmp.eq.s32.totalorder %s20, 0
    %p206 = por %p204, %p205
    %s207 = ssub.s32 %s21, %s33
    %s208 = ssub.s32 %s22, %s29
    %s209 = sor.u32 %s207, %s208
    %p210 = scmp.eq.s32.totalorder %s209, 0
    %s212 = sadd.s32 %s211, 1
    %s213 = scalar_select %p210, %s211, %s212
    %p216 = pneg %p210
    %p217 = scmp.eq.s32.totalorder %s14, 1
    %p218 = por %p216, %p217
    %p219 = scmp.ne.s32.totalorder %s211, %s214
    %p220 = scmp.eq.s32.totalorder %s14, 0
    %p221 = por %p219, %p220
    %p222 = scmp.ne.s32.totalorder %s211, %s214
    %p223 = scmp.eq.s32.totalorder %s19, 1
    %p224 = por %p222, %p223
    %p225 = scmp.ne.s32.totalorder %s214, %s215
    %p226 = scmp.eq.s32.totalorder %s19, 0
    %p227 = por %p225, %p226
    %p228 = scmp.ne.s32.totalorder %s214, %s215
    %p229 = scmp.eq.s32.totalorder %s20, 1
    %p230 = por %p228, %p229
    %p232 = scmp.ne.s32.totalorder %s215, %s231
    %p233 = scmp.eq.s32.totalorder %s20, 0
    %p234 = por %p232, %p233
    %p235 = scmp.le.s32.totalorder 1, %s14
    %p236 = scmp.lt.s32.totalorder %s14, 3
    %p237 = pnand %p235, %p236
    %p238 = pneg %p237
    // Predicated region
    $region9: #{video_transformer_forward.6} parent=5 // pred_check
      _
    $region10: #{video_transformer_forward.6} parent=5 // pred_check_branch
      %240 = sbr.rel (%p237) target = $region12
    $region11: #{video_transformer_forward.6} parent=5 // pred_region
      %s241 = ssub.s32 %s14, 1
      // Predicated region
      $region13: #{video_transformer_forward.6} parent=11 // pred_check
        %p242 = pneg %p108
      $region14: #{video_transformer_forward.6} parent=11 // pred_check_branch
        %244 = sbr.rel (%p242) target = $region16
      $region15: #{video_transformer_forward.6} parent=11 // pred_region
        %p245 = scmp.lt.s32.totalorder %s24, 0
        %s246 = scalar_select %p245, %s24, 0
        %s247 = smul.addr %s246, 4
        %s248 = scalar_lea.vmem %s2, %s247
      $region16: #{video_transformer_forward.6} parent=11 // pred_fallthru
        _
      // Predicated region
      $region17: #{video_transformer_forward.6} parent=11 // pred_check
        %p249 = pneg %p129
      $region18: #{video_transformer_forward.6} parent=11 // pred_check_branch
        %251 = sbr.rel (%p249) target = $region20
      $region19: #{video_transformer_forward.6} parent=11 // pred_region
        _
      $region20: #{video_transformer_forward.6} parent=11 // pred_fallthru
        _
      // Predicated region
      $region21: #{video_transformer_forward.6} parent=11 // pred_check
        %p252 = pneg %p150
      $region22: #{video_transformer_forward.6} parent=11 // pred_check_branch
        %254 = sbr.rel (%p252) target = $region24
      $region23: #{video_transformer_forward.6} parent=11 // pred_region
        _
      $region24: #{video_transformer_forward.6} parent=11 // pred_fallthru
        _
      // Predicated region
      $region25: #{video_transformer_forward.6} parent=11 // pred_check
        %p255 = pneg %p171
      $region26: #{video_transformer_forward.6} parent=11 // pred_check_branch
        %257 = sbr.rel (%p255) target = $region28
      $region27: #{video_transformer_forward.6} parent=11 // pred_region
        _
      $region28: #{video_transformer_forward.6} parent=11 // pred_fallthru
        _
    $region12: #{video_transformer_forward.6} parent=5 // pred_fallthru
      _
    %p258 = scmp.lt.s32.totalorder %s14, 2
    // Predicated region
    $region29: #{video_transformer_forward.6} parent=5 // pred_check
      %p259 = pneg %p258
    $region30: #{video_transformer_forward.6} parent=5 // pred_check_branch
      %261 = sbr.rel (%p259) target = $region32
    $region31: #{video_transformer_forward.6} parent=5 // pred_region
      // Predicated region
      $region33: #{video_transformer_forward.6} parent=31 // pred_check
        %p262 = pneg %p48
      $region34: #{video_transformer_forward.6} parent=31 // pred_check_branch
        %264 = sbr.rel (%p262) target = $region36
      $region35: #{video_transformer_forward.6} parent=31 // pred_region
        %s265 = smul.u32 2, %s22
        %p266 = scmp.lt.s32.totalorder %s21, 1
        %s267 = scalar_select %p266, %s21, 1
        %p268 = scmp.lt.s32.totalorder %s265, 1
        %s269 = scalar_select %p268, %s265, 1
        %s270 = smul.addr %s269, 2
        %s271 = smul.addr %s267, 4
        %s272 = sadd.s32 %s270, %s271
        %s273 = smul.addr %s272, 8
        %s274 = scalar_lea.vmem %s0, %s273
        %s275 = smul.u32 2, %s22
      $region36: #{video_transformer_forward.6} parent=31 // pred_fallthru
        _
      // Predicated region
      $region37: #{video_transformer_forward.6} parent=31 // pred_check
        %p276 = pneg %p76
      $region38: #{video_transformer_forward.6} parent=31 // pred_check_branch
        %278 = sbr.rel (%p276) target = $region40
      $region39: #{video_transformer_forward.6} parent=31 // pred_region
        %s279 = smul.u32 2, %s22
        %p280 = scmp.lt.s32.totalorder %s21, 1
        %s281 = scalar_select %p280, %s21, 1
        %p282 = scmp.lt.s32.totalorder %s279, 1
        %s283 = scalar_select %p282, %s279, 1
        %s284 = smul.addr %s283, 2
        %s285 = smul.addr %s281, 4
        %s286 = sadd.s32 %s284, %s285
        %s287 = smul.addr %s286, 8
        %s288 = scalar_lea.vmem %s1, %s287
        %s289 = smul.u32 2, %s22
      $region40: #{video_transformer_forward.6} parent=31 // pred_fallthru
        _
    $region32: #{video_transformer_forward.6} parent=5 // pred_fallthru
      _
    %p290 = scmp.le.s32.totalorder 1, %s14
    %p291 = scmp.lt.s32.totalorder %s14, 3
    %p292 = pnand %p290, %p291
    %p293 = pneg %p292
    // Predicated region
    $region41: #{video_transformer_forward.6} parent=5 // pred_check
      _
    $region42: #{video_transformer_forward.6} parent=5 // pred_check_branch
      %295 = sbr.rel (%p292) target = $region44
    $region43: #{video_transformer_forward.6} parent=5 // pred_region
      %s296 = ssub.s32 %s14, 1
      %s297 = smul.u32 2, %s24
      %p298 = scmp.lt.s32.totalorder %s23, 1
      %s299 = scalar_select %p298, %s23, 1
      %p300 = scmp.lt.s32.totalorder %s297, 1
      %s301 = scalar_select %p300, %s297, 1
      %s302 = smul.addr %s301, 2
      %s303 = smul.addr %s299, 4
      %s304 = sadd.s32 %s302, %s303
      %s305 = smul.addr %s304, 8
      %s306 = scalar_lea.vmem %s0, %s305
      %p307 = pneg %p54
      %p308 = pneg %p51
      %s309 = smul.u32 2, %s24
      %p310 = scmp.lt.s32.totalorder %s23, 1
      %s311 = scalar_select %p310, %s23, 1
      %p312 = scmp.lt.s32.totalorder %s309, 1
      %s313 = scalar_select %p312, %s309, 1
      %s314 = smul.addr %s313, 2
      %s315 = smul.addr %s311, 4
      %s316 = sadd.s32 %s314, %s315
      %s317 = smul.addr %s316, 8
      %s318 = scalar_lea.vmem %s1, %s317
      %p319 = pneg %p82
      %p320 = pneg %p79
      %p321 = scmp.lt.s32.totalorder %s24, 0
      %s322 = scalar_select %p321, %s24, 0
      %s323 = smul.addr %s322, 4
      %s324 = scalar_lea.vmem %s2, %s323
      %p325 = pneg %p108
      %p326 = pneg %p105
      %p327 = pneg %p129
      %p328 = pneg %p126
      %p329 = pneg %p150
      %p330 = pneg %p147
      %p331 = pneg %p171
      %p332 = pneg %p168
      %p333 = pneg %p199
      %p334 = pneg %p196
      %s335 = smul.u32 2, %s24
      %p336 = scmp.lt.s32.totalorder %s23, 1
      %s337 = scalar_select %p336, %s23, 1
      %p338 = scmp.lt.s32.totalorder %s335, 1
      %s339 = scalar_select %p338, %s335, 1
      %s340 = smul.addr %s337, 2
      %s341 = sadd.s32 %s339, %s340
      %s342 = smul.addr %s341, 8
      %s343 = scalar_lea.vmem %s6, %s342
      %p344 = pneg %p227
      %p345 = pneg %p224
      %s346 = smul.u32 2, %s24
      %p347 = scmp.lt.s32.totalorder %s23, 1
      %s348 = scalar_select %p347, %s23, 1
      %p349 = scmp.lt.s32.totalorder %s346, 1
      %s350 = scalar_select %p349, %s346, 1
      %s351 = smul.addr %s348, 2
      %s352 = sadd.s32 %s350, %s351
      %s353 = smul.addr %s352, 8
      %s354 = scalar_lea.vmem %s7, %s353
      %s355 = smul.u32 2, %s24
      %p356 = scmp.lt.s32.totalorder %s23, 1
      %s357 = scalar_select %p356, %s23, 1
      %p358 = scmp.lt.s32.totalorder %s355, 1
      %s359 = scalar_select %p358, %s355, 1
      %s360 = smul.addr %s359, 2
      %s361 = smul.addr %s357, 4
      %s362 = sadd.s32 %s360, %s361
      %s363 = smul.addr %s362, 8
      %s364 = scalar_lea.vmem %s0, %s363
      %s365 = smul.u32 2, %s24
      %s366 = smul.u32 2, %s24
      %p367 = scmp.lt.s32.totalorder %s23, 1
      %s368 = scalar_select %p367, %s23, 1
      %p369 = scmp.lt.s32.totalorder %s366, 1
      %s370 = scalar_select %p369, %s366, 1
      %s371 = smul.addr %s370, 2
      %s372 = smul.addr %s368, 4
      %s373 = sadd.s32 %s371, %s372
      %s374 = smul.addr %s373, 8
      %s375 = scalar_lea.vmem %s1, %s374
      %s376 = smul.u32 2, %s24
      %p377 = scmp.lt.s32.totalorder %s24, 0
      %s378 = scalar_select %p377, %s24, 0
      %s379 = smul.addr %s378, 4
      %s380 = scalar_lea.vmem %s2, %s379
      %s381 = smul.u32 2, %s24
      %p382 = scmp.lt.s32.totalorder %s23, 1
      %s383 = scalar_select %p382, %s23, 1
      %p384 = scmp.lt.s32.totalorder %s381, 1
      %s385 = scalar_select %p384, %s381, 1
      %s386 = smul.addr %s383, 2
      %s387 = sadd.s32 %s385, %s386
      %s388 = smul.addr %s387, 8
      %s389 = scalar_lea.vmem %s6, %s388
      %s390 = smul.u32 2, %s24
      %s391 = smul.u32 2, %s24
      %p392 = scmp.lt.s32.totalorder %s23, 1
      %s393 = scalar_select %p392, %s23, 1
      %p394 = scmp.lt.s32.totalorder %s391, 1
      %s395 = scalar_select %p394, %s391, 1
      %s396 = smul.addr %s393, 2
      %s397 = sadd.s32 %s395, %s396
      %s398 = smul.addr %s397, 8
      %s399 = scalar_lea.vmem %s7, %s398
      %s400 = smul.u32 2, %s24
      %v402 = vld [vmem:[%s4] sm:$0xf]
      %v403 = vld [vmem:[%s4 + $0x4] sm:$0xf]
      %v404 = vld [vmem:[%s4 + $0x8] sm:$0xf]
      %v405 = vld [vmem:[%s4 + $0xc] sm:$0xf]
      %v406 = vld [vmem:[%s4 + $0x10] sm:$0xf]
      %v407 = vld [vmem:[%s4 + $0x14] sm:$0xf]
      %v408 = vld [vmem:[%s4 + $0x18] sm:$0xf]
      %v409 = vld [vmem:[%s4 + $0x1c] sm:$0xf]
      %v410 = vld [vmem:[%s4 + $0x20] sm:$0xf]
      %v411 = vld [vmem:[%s4 + $0x24] sm:$0xf]
      %v412 = vld [vmem:[%s4 + $0x28] sm:$0xf]
      %v413 = vld [vmem:[%s4 + $0x2c] sm:$0xf]
      %v414 = vld [vmem:[%s4 + $0x30] sm:$0xf]
      %v415 = vld [vmem:[%s4 + $0x34] sm:$0xf]
      %v416 = vld [vmem:[%s4 + $0x38] sm:$0xf]
      %v417 = vld [vmem:[%s4 + $0x3c] sm:$0xf]
      %v418 = vld [vmem:[%s4 + $0x40] sm:$0xf]
      %v419 = vld [vmem:[%s4 + $0x44] sm:$0xf]
      %v420 = vld [vmem:[%s4 + $0x48] sm:$0xf]
      %v421 = vld [vmem:[%s4 + $0x4c] sm:$0xf]
      %v422 = vld [vmem:[%s4 + $0x50] sm:$0xf]
      %v423 = vld [vmem:[%s4 + $0x54] sm:$0xf]
      %v424 = vld [vmem:[%s4 + $0x58] sm:$0xf]
      %v425 = vld [vmem:[%s4 + $0x5c] sm:$0xf]
      %v426 = vld [vmem:[%s380] sm:$0xf]
      %v428 = vrot.slane %v426, 1
      %v429 = vrot.slane %v426, 2
      %v430 = vrot.slane %v426, 3
      %v431 = vld [vmem:[%s3] sm:$0xf]
      %v432 = vperm.slane %v426, 0
      %v433 = vperm.slane %v428, 0
      %v434 = vperm.slane %v429, 0
      %v435 = vperm.slane %v430, 0
      %v440 = vadd.f32 %v432, %v431
      %v441 = vadd.f32 %v433, %v431
      %v442 = vadd.f32 %v434, %v431
      %v443 = vadd.f32 %v435, %v431
      %v444 = vld [vmem:[%s5] sm:$0x1]
      %v446 = vperm.slane %v444, 0
      %v448 = vrot.slane %v446, 4
      %v450 = vadd.f32 %v440, %v446
      %v451 = vadd.f32 %v441, %v448
      %v452 = vadd.f32 %v442, %v446
      %v453 = vadd.f32 %v443, %v448
      %v454 = vld [vmem:[%s364] sm:$0xff]
      %v455 = vld [vmem:[%s364 + $0x8] sm:$0xff]
      %v456 = vld [vmem:[%s364 + $0x10] sm:$0xff]
      %v457 = vld [vmem:[%s364 + $0x18] sm:$0xff]
      %v458 = vpack.c.bf16 %v456, %v454
      %v459 = vpack.c.bf16 %v457, %v455
      %v484 = vunpack.c.l.b16 %v402
      %v485 = vunpack.c.l.b16 %v403
      %v486 = vunpack.c.l.b16 %v404
      %v487 = vunpack.c.l.b16 %v405
      %v488 = vunpack.c.l.b16 %v406
      %v489 = vunpack.c.l.b16 %v407
      %v490 = vunpack.c.l.b16 %v408
      %v491 = vunpack.c.l.b16 %v409
      %v492 = vunpack.c.l.b16 %v410
      %v493 = vunpack.c.l.b16 %v411
      %v494 = vunpack.c.l.b16 %v412
      %v495 = vunpack.c.l.b16 %v413
      %v496 = vunpack.c.l.b16 %v414
      %v497 = vunpack.c.l.b16 %v415
      %v498 = vunpack.c.l.b16 %v416
      %v499 = vunpack.c.l.b16 %v417
      %v500 = vunpack.c.l.b16 %v418
      %v501 = vunpack.c.l.b16 %v419
      %v502 = vunpack.c.l.b16 %v420
      %v503 = vunpack.c.l.b16 %v421
      %v504 = vunpack.c.l.b16 %v422
      %v505 = vunpack.c.l.b16 %v423
      %v506 = vunpack.c.l.b16 %v424
      %v507 = vunpack.c.l.b16 %v425
      %v508 = vpack.c.b16 %v485, %v484
      %v509 = vpack.c.b16 %v487, %v486
      %v510 = vpack.c.b16 %v489, %v488
      %v511 = vpack.c.b16 %v491, %v490
      %v512 = vpack.c.b16 %v493, %v492
      %v513 = vpack.c.b16 %v495, %v494
      %v514 = vpack.c.b16 %v497, %v496
      %v515 = vpack.c.b16 %v499, %v498
      %v516 = vpack.c.b16 %v501, %v500
      %v517 = vpack.c.b16 %v503, %v502
      %v518 = vpack.c.b16 %v505, %v504
      %v519 = vpack.c.b16 %v507, %v506
      %536 = vst [vmem:[#allocation1] ss:$2 sm:$0xff] %v450
      %s537 = scalar_lea.vmem [#allocation1], 1
      %538 = vst [vmem:[%s537] ss:$2 sm:$0xff] %v451
      %s539 = scalar_lea.vmem [#allocation1], 16
      %540 = vst [vmem:[%s539] ss:$2 sm:$0xff] %v452
      %s541 = scalar_lea.vmem [#allocation1], 17
      %542 = vst [vmem:[%s541] ss:$2 sm:$0xff] %v453
      %v543 = vld.sshfl [vmem:[#allocation1] sm:$0xff pattern:$0x75316420]
      %v544 = vld.sshfl [vmem:[#allocation1 + $0x10] sm:$0xff pattern:$0x75316420]
      %vm547 = vcmask 523264
      %v549 = vsel %vm547, %v459, 0
      %551 = vmatpush.bf16.msra.mxu0 %v515
      %552 = vmatpush.bf16.msra.mxu0 %v514
      %553 = vmatpush.bf16.msra.mxu0 %v513
      %554 = vmatpush.bf16.msra.mxu0 %v512
      %555 = vmatpush.bf16.msra.mxu0 %v511
      %556 = vmatpush.bf16.msra.mxu0 %v510
      %557 = vmatpush.bf16.msra.mxu0 %v509
      %558 = vmatpush.bf16.msra.mxu0 %v508
      %559 = vmatmul.bf16.gmra.mxu0 %v458
      %v560 = vpop.f32.mrf.mxu0
      %v561 = vadd.f32 %v543, %v560
      %v562 = vpop.f32.mrf.mxu0
      %v563 = vadd.f32 %v544, %v562
      %564 = vdwg.mxu0
      %565 = vmatpush.bf16.msra.mxu0 0
      %566 = vmatpush.bf16.msra.mxu0 0
      %567 = vmatpush.bf16.msra.mxu0 0
      %568 = vmatpush.bf16.msra.mxu0 0
      %569 = vmatpush.bf16.msra.mxu0 %v519
      %570 = vmatpush.bf16.msra.mxu0 %v518
      %571 = vmatpush.bf16.msra.mxu0 %v517
      %572 = vmatpush.bf16.msra.mxu0 %v516
      %573 = vmatmul.bf16.gmra.mxu0 %v549
      %v574 = vpop.f32.mrf.mxu0
      %v575 = vadd.f32 %v561, %v574
      %v576 = vpop.f32.mrf.mxu0
      %v577 = vadd.f32 %v563, %v576
      %578 = vdwg.mxu0
      %vm579 = vcmask 261120
      %580 = vst.msk [vmem:[%s389] sm:$0xff] %vm579, %v575
      %581 = vst.msk [vmem:[%s389 + $0x8] sm:$0xff] %vm579, %v577
      %v582 = vld [vmem:[%s375] sm:$0xff]
      %v583 = vld [vmem:[%s375 + $0x8] sm:$0xff]
      %v584 = vld [vmem:[%s375 + $0x10] sm:$0xff]
      %v585 = vld [vmem:[%s375 + $0x18] sm:$0xff]
      %v586 = vpack.c.bf16 %v584, %v582
      %v587 = vpack.c.bf16 %v585, %v583
      %588 = vst [vmem:[#allocation1] ss:$2 sm:$0xff] %v450
      %s589 = scalar_lea.vmem [#allocation1], 1
      %590 = vst [vmem:[%s589] ss:$2 sm:$0xff] %v451
      %s591 = scalar_lea.vmem [#allocation1], 16
      %592 = vst [vmem:[%s591] ss:$2 sm:$0xff] %v452
      %s593 = scalar_lea.vmem [#allocation1], 17
      %594 = vst [vmem:[%s593] ss:$2 sm:$0xff] %v453
      %v595 = vld.sshfl [vmem:[#allocation1] sm:$0xff pattern:$0x75316420]
      %v596 = vld.sshfl [vmem:[#allocation1 + $0x10] sm:$0xff pattern:$0x75316420]
      %v600 = vsel %vm547, %v587, 0
      %602 = vmatpush.bf16.msra.mxu0 %v515
      %603 = vmatpush.bf16.msra.mxu0 %v514
      %604 = vmatpush.bf16.msra.mxu0 %v513
      %605 = vmatpush.bf16.msra.mxu0 %v512
      %606 = vmatpush.bf16.msra.mxu0 %v511
      %607 = vmatpush.bf16.msra.mxu0 %v510
      %608 = vmatpush.bf16.msra.mxu0 %v509
      %609 = vmatpush.bf16.msra.mxu0 %v508
      %610 = vmatmul.bf16.gmra.mxu0 %v586
      %v611 = vpop.f32.mrf.mxu0
      %v612 = vadd.f32 %v595, %v611
      %v613 = vpop.f32.mrf.mxu0
      %v614 = vadd.f32 %v596, %v613
      %615 = vdwg.mxu0
      %616 = vmatpush.bf16.msra.mxu0 0
      %617 = vmatpush.bf16.msra.mxu0 0
      %618 = vmatpush.bf16.msra.mxu0 0
      %619 = vmatpush.bf16.msra.mxu0 0
      %620 = vmatpush.bf16.msra.mxu0 %v519
      %621 = vmatpush.bf16.msra.mxu0 %v518
      %622 = vmatpush.bf16.msra.mxu0 %v517
      %623 = vmatpush.bf16.msra.mxu0 %v516
      %624 = vmatmul.bf16.gmra.mxu0 %v600
      %v625 = vpop.f32.mrf.mxu0
      %v626 = vadd.f32 %v612, %v625
      %v627 = vpop.f32.mrf.mxu0
      %v628 = vadd.f32 %v614, %v627
      %629 = vdwg.mxu0
      %630 = vst.msk [vmem:[%s399] sm:$0xff] %vm579, %v626
      %631 = vst.msk [vmem:[%s399 + $0x8] sm:$0xff] %vm579, %v628
      %s632 = smul.u32 2, %s24
      %p633 = scmp.lt.s32.totalorder %s23, 1
      %s634 = scalar_select %p633, %s23, 1
      %p635 = scmp.lt.s32.totalorder %s632, 1
      %s636 = scalar_select %p635, %s632, 1
      %s637 = smul.addr %s634, 2
      %s638 = sadd.s32 %s636, %s637
      %s639 = smul.addr %s638, 8
      %s640 = scalar_lea.vmem %s6, %s639
      %s641 = smul.u32 2, %s24
      %p642 = scmp.lt.s32.totalorder %s23, 1
      %s643 = scalar_select %p642, %s23, 1
      %p644 = scmp.lt.s32.totalorder %s641, 1
      %s645 = scalar_select %p644, %s641, 1
      %s646 = smul.addr %s643, 2
      %s647 = sadd.s32 %s645, %s646
      %s648 = smul.addr %s647, 8
      %s649 = scalar_lea.vmem %s7, %s648
      // Predicated region
      $region45: #{video_transformer_forward.6} parent=43 // pred_check
        %p650 = pneg %p196
      $region46: #{video_transformer_forward.6} parent=43 // pred_check_branch
        %652 = sbr.rel (%p650) target = $region48
      $region47: #{video_transformer_forward.6} parent=43 // pred_region
        %s653 = smul.u32 2, %s24
      $region48: #{video_transformer_forward.6} parent=43 // pred_fallthru
        _
      // Predicated region
      $region49: #{video_transformer_forward.6} parent=43 // pred_check
        %p654 = pneg %p224
      $region50: #{video_transformer_forward.6} parent=43 // pred_check_branch
        %656 = sbr.rel (%p654) target = $region52
      $region51: #{video_transformer_forward.6} parent=43 // pred_region
        %s657 = smul.u32 2, %s24
      $region52: #{video_transformer_forward.6} parent=43 // pred_fallthru
        _
    $region44: #{video_transformer_forward.6} parent=5 // pred_fallthru
      _
    %p658 = scmp.le.s32.totalorder 2, %s14
    // Predicated region
    $region53: #{video_transformer_forward.6} parent=5 // pred_check
      %p659 = pneg %p658
    $region54: #{video_transformer_forward.6} parent=5 // pred_check_branch
      %661 = sbr.rel (%p659) target = $region56
    $region55: #{video_transformer_forward.6} parent=5 // pred_region
      %s662 = ssub.s32 %s14, 2
      // Predicated region
      $region57: #{video_transformer_forward.6} parent=55 // pred_check
        %p663 = pneg %p202
      $region58: #{video_transformer_forward.6} parent=55 // pred_check_branch
        %665 = sbr.rel (%p663) target = $region60
      $region59: #{video_transformer_forward.6} parent=55 // pred_region
        %s666 = smul.u32 2, %s26
        %p667 = scmp.lt.s32.totalorder %s25, 1
        %s668 = scalar_select %p667, %s25, 1
        %p669 = scmp.lt.s32.totalorder %s666, 1
        %s670 = scalar_select %p669, %s666, 1
        %s671 = smul.addr %s668, 2
        %s672 = sadd.s32 %s670, %s671
        %s673 = smul.addr %s672, 8
        %s674 = scalar_lea.vmem %s6, %s673
      $region60: #{video_transformer_forward.6} parent=55 // pred_fallthru
        _
      // Predicated region
      $region61: #{video_transformer_forward.6} parent=55 // pred_check
        %p675 = pneg %p230
      $region62: #{video_transformer_forward.6} parent=55 // pred_check_branch
        %677 = sbr.rel (%p675) target = $region64
      $region63: #{video_transformer_forward.6} parent=55 // pred_region
        %s678 = smul.u32 2, %s26
        %p679 = scmp.lt.s32.totalorder %s25, 1
        %s680 = scalar_select %p679, %s25, 1
        %p681 = scmp.lt.s32.totalorder %s678, 1
        %s682 = scalar_select %p681, %s678, 1
        %s683 = smul.addr %s680, 2
        %s684 = sadd.s32 %s682, %s683
        %s685 = smul.addr %s684, 8
        %s686 = scalar_lea.vmem %s7, %s685
      $region64: #{video_transformer_forward.6} parent=55 // pred_fallthru
        _
    $region56: #{video_transformer_forward.6} parent=5 // pred_fallthru
      _
  $region6: #{video_transformer_forward.6} parent=0 // loop_footer
    %s18 = sadd.s32 1, %s14
  $region7: #{video_transformer_forward.6} parent=0 // loop_footer_branch
    %13 = sbr.rel target = $region3
  $region8: #{video_transformer_forward.6} parent=0 // loop_exit
    _

// kernel: video_transformer_forward.11
$region0: #{video_transformer_forward.11}
  #allocation0 [shape = 'u32[]', space=smem, size = 0x4, offset = 0x4, fixed_abs, tag = 'smem constant byte address 0x4 - core index']
  #allocation1 [shape = 'u32[72,128]{1,0:T(1,128)}', space=vmem, size = 0x9000, scoped, tag = 'internal scratch']
  %s0 = inlined_call_operand.vmem [shape: f32[8,32], index: 0, kind: input, shape index: {}]
  %s1 = inlined_call_operand.vmem [shape: f32[1,32], index: 1, kind: input, shape index: {}]
  %s2 = inlined_call_operand.vmem [shape: f32[1,32], index: 2, kind: input, shape index: {}]
  %s3 = inlined_call_operand.vmem [shape: bf16[32,5], index: 3, kind: input, shape index: {}]
  %s4 = inlined_call_operand.vmem [shape: f32[1,5], index: 4, kind: input, shape index: {}]
  %s5 = inlined_call_operand.hbm [shape: f32[8,5], index: 5, kind: output, shape index: {}]
  %s6 = sld [smem:[#allocation0]]
  $region30: #{video_transformer_forward.11} parent=0
    _
  %s8 = ssub.s32 1, %s6
  %s9 = scalar_select 0, %s8, %s6
  $region1: #{video_transformer_forward.11} parent=0
    #allocation2 [shape = 'u8[4096]{0}', space=vmem, size = 0x1000, scoped, tag = 'output window, operand 0, single buffered']
    #allocation3 [shape = 's32[1]{0}', space=sflag, size = 0x4, scoped, tag = 'scoped memory for video_transformer_forward.11']
    %10 = vsyncpa [#allocation3], 0
    // Predicated region
    $region2: #{video_transformer_forward.11} parent=1 // pred_check
      _
    $region3: #{video_transformer_forward.11} parent=1 // pred_check_branch
      %12 = sbr.rel (0) target = $region5
    $region4: #{video_transformer_forward.11} parent=1 // pred_region
      _
    $region5: #{video_transformer_forward.11} parent=1 // pred_fallthru
      _
    // Predicated region
    $region6: #{video_transformer_forward.11} parent=1 // pred_check
      _
    $region7: #{video_transformer_forward.11} parent=1 // pred_check_branch
      %14 = sbr.rel (0) target = $region9
    $region8: #{video_transformer_forward.11} parent=1 // pred_region
      _
    $region9: #{video_transformer_forward.11} parent=1 // pred_fallthru
      _
    // Predicated region
    $region10: #{video_transformer_forward.11} parent=1 // pred_check
      _
    $region11: #{video_transformer_forward.11} parent=1 // pred_check_branch
      %16 = sbr.rel (0) target = $region13
    $region12: #{video_transformer_forward.11} parent=1 // pred_region
      _
    $region13: #{video_transformer_forward.11} parent=1 // pred_fallthru
      _
    // Predicated region
    $region14: #{video_transformer_forward.11} parent=1 // pred_check
      _
    $region15: #{video_transformer_forward.11} parent=1 // pred_check_branch
      %18 = sbr.rel (0) target = $region17
    $region16: #{video_transformer_forward.11} parent=1 // pred_region
      _
    $region17: #{video_transformer_forward.11} parent=1 // pred_fallthru
      _
    // Predicated region
    $region18: #{video_transformer_forward.11} parent=1 // pred_check
      _
    $region19: #{video_transformer_forward.11} parent=1 // pred_check_branch
      %20 = sbr.rel (0) target = $region21
    $region20: #{video_transformer_forward.11} parent=1 // pred_region
      _
    $region21: #{video_transformer_forward.11} parent=1 // pred_fallthru
      _
    %v22 = vld [vmem:[%s0] sm:$0xff]
    %v23 = vld [vmem:[%s1] sm:$0x1]
    %v24 = vld [vmem:[%s2] sm:$0x1]
    %vm25 = vcmask 261120
    %v26 = vsel %vm25, %v22, 0.0
    %27 = vadd.xlane.f32.xlu0 %v26
    %v28 = vpop.xlane.xlu0 %27
    %v29 = vrcp.pop 32.0
    %v30 = vmul.f32 32.0, %v29
    %v31 = vsub.f32 1.0, %v30
    %v32 = vmul.f32 %v29, %v31
    %v33 = vadd.f32 %v29, %v32
    %vm34 = vweird.f32 %v29
    %v35 = vsel %vm34, %v29, %v33
    %v36 = vmul.f32 %v28, %v35
    %v37 = vsub.f32 %v22, %v36
    %v38 = vmul.f32 %v37, %v37
    %v39 = vsel %vm25, %v38, 0.0
    %40 = vadd.xlane.f32.xlu0 %v39
    %v41 = vpop.xlane.xlu0 %40
    %v42 = vmul.f32 %v41, %v35
    %v43 = vadd.f32 %v42, 1e-05
    %v44 = vrsqrt.pop %v43
    %v45 = vmul.f32 %v44, %v43
    %v46 = vmul.f32 %v45, %v44
    %v47 = vmul.f32 0.5, %v46
    %v48 = vsub.f32 1.5, %v47
    %v49 = vmul.f32 %v44, %v48
    %vm50 = vweird.f32 %v43
    %vm51 = vweird.f32 %v44
    %vm52 = vmor %vm50, %vm51
    %v53 = vsel %vm52, %v44, %v49
    %v54 = vmul.f32 %v37, %v53
    %v56 = vperm.slane %v23, 0
    %v58 = vmul.f32 %v54, %v56
    %v60 = vperm.slane %v24, 0
    %v62 = vadd.f32 %v58, %v60
    %v63 = vpack.c.bf16 %v62, %v62
    %v64 = vld [vmem:[%s3] sm:$0xf]
    %v65 = vld [vmem:[%s3 + $0x4] sm:$0xf]
    %v66 = vld [vmem:[%s3 + $0x8] sm:$0xf]
    %v67 = vld [vmem:[%s3 + $0xc] sm:$0xf]
    %v68 = vld [vmem:[%s4] sm:$0x1]
    %v70 = vperm.slane %v68, 0
    %v76 = vunpack.c.l.b16 %v64
    %v77 = vunpack.c.l.b16 %v65
    %v78 = vunpack.c.l.b16 %v66
    %v79 = vunpack.c.l.b16 %v67
    %v80 = vpack.c.b16 %v77, %v76
    %v81 = vpack.c.b16 %v79, %v78
    %v85 = vsel %vm25, %v63, 0
    %87 = vmatpush.bf16.msra.mxu0 0
    %88 = vmatpush.bf16.msra.mxu0 0
    %89 = vmatpush.bf16.msra.mxu0 0
    %90 = vmatpush.bf16.msra.mxu0 0
    %91 = vmatpush.bf16.msra.mxu0 0
    %92 = vmatpush.bf16.msra.mxu0 0
    %93 = vmatpush.bf16.msra.mxu0 %v81
    %94 = vmatpush.bf16.msra.mxu0 %v80
    %95 = vmatmul.bf16.gmra.mxu0 %v85
    %v96 = vpop.f32.mrf.mxu0
    %v97 = vadd.f32 %v70, %v96
    %v98 = vpop.f32.mrf.mxu0
    %99 = vdwg.mxu0
    %vm100 = vcmask 39936
    %101 = vst.msk [vmem:[#allocation2] sm:$0xff] %vm100, %v97
    // Predicated region
    $region22: #{video_transformer_forward.11} parent=1 // pred_check
      _
    $region23: #{video_transformer_forward.11} parent=1 // pred_check_branch
      %103 = sbr.rel (0) target = $region25
    $region24: #{video_transformer_forward.11} parent=1 // pred_region
      %105 = vsyncadd [#allocation3], 0
      %s107 = sshll.u32 [#allocation2], 4
      %s108 = int_to_ptr.vmem [resolvable:$true] %s107
      %s109 = sshll.u32 %s5, 4
      %s110 = int_to_ptr.hbm [resolvable:$true] %s109
      %112 = dma.vmem_to_hbm [thread:$0]  %s108, 128, %s110, [#allocation3]
    $region25: #{video_transformer_forward.11} parent=1 // pred_fallthru
      _
    // Predicated region
    $region26: #{video_transformer_forward.11} parent=1 // pred_check
      _
    $region27: #{video_transformer_forward.11} parent=1 // pred_check_branch
      %114 = sbr.rel (0) target = $region29
    $region28: #{video_transformer_forward.11} parent=1 // pred_region
      %116 = dma.done [#allocation3], 128
    $region29: #{video_transformer_forward.11} parent=1 // pred_fallthru
      _
    %117 = vsyncpa [#allocation3], 1

// kernel: video_transformer_forward.8
$region0: #{video_transformer_forward.8}
  #allocation0 [shape = 'u32[]', space=smem, size = 0x4, offset = 0x4, fixed_abs, tag = 'smem constant byte address 0x4 - core index']
  #allocation1 [shape = 'u32[72,128]{1,0:T(1,128)}', space=vmem, size = 0x9000, scoped, tag = 'internal scratch']
  %s0 = inlined_call_operand.vmem [shape: f32[48,32], index: 0, kind: input, shape index: {}]
  %s1 = inlined_call_operand.vmem [shape: f32[48,32], index: 1, kind: input, shape index: {}]
  %s2 = inlined_call_operand.vmem [shape: f32[1,32], index: 2, kind: input, shape index: {}]
  %s3 = inlined_call_operand.vmem [shape: f32[1,32], index: 3, kind: input, shape index: {}]
  %s4 = inlined_call_operand.vmem [shape: bf16[32,128], index: 4, kind: input, shape index: {}]
  %s5 = inlined_call_operand.vmem [shape: f32[1,128], index: 5, kind: input, shape index: {}]
  %s6 = inlined_call_operand.vmem [shape: bf16[128,32], index: 6, kind: input, shape index: {}]
  %s7 = inlined_call_operand.vmem [shape: f32[1,32], index: 7, kind: input, shape index: {}]
  %s8 = inlined_call_operand.vmem [shape: f32[48,32], index: 8, kind: output, shape index: {0}]
  %s9 = inlined_call_operand.vmem [shape: f32[48,32], index: 9, kind: output, shape index: {1}]
  %10 = xla_tuple %s8, %s9
  %s11 = sld [smem:[#allocation0]]
  $region73: #{video_transformer_forward.8} parent=0
    _
  %s13 = ssub.s32 1, %s11
  %s14 = scalar_select 0, %s13, %s11
  loop: start=0, step=1, limit=4
  $region2: #{video_transformer_forward.8} parent=0 // loop_pre_header
    _
  $region3: #{video_transformer_forward.8} parent=0 // loop_header
    %s16 = sphi 0, %s20
    %p17 = scmp.ge.s32.totalorder %s16, 4
    %s26 = sphi 0, %s28
    %s29 = sphi 0, %s26
    %s30 = sphi 0, %s29
    %s46 = sphi 0, %s30
    %s52 = sphi 0, %s54
    %s55 = sphi 0, %s52
    %s56 = sphi 0, %s55
    %s72 = sphi 0, %s56
    %s76 = sphi 0, %s76
    %s78 = sphi 0, %s76
    %s79 = sphi 0, %s78
    %s93 = sphi 0, %s79
    %s97 = sphi 0, %s97
    %s99 = sphi 0, %s97
    %s100 = sphi 0, %s99
    %s114 = sphi 0, %s100
    %s118 = sphi 0, %s118
    %s120 = sphi 0, %s118
    %s121 = sphi 0, %s120
    %s135 = sphi 0, %s121
    %s139 = sphi 0, %s139
    %s141 = sphi 0, %s139
    %s142 = sphi 0, %s141
    %s156 = sphi 0, %s142
    %s160 = sphi 0, %s160
    %s162 = sphi 0, %s160
    %s163 = sphi 0, %s162
    %s177 = sphi 0, %s163
    %s181 = sphi 0, %s181
    %s183 = sphi 0, %s181
    %s184 = sphi 0, %s183
    %s198 = sphi 0, %s184
    %s204 = sphi 0, %s206
    %s207 = sphi 0, %s204
    %s208 = sphi 0, %s207
    %s224 = sphi 0, %s208
    %s230 = sphi 0, %s232
    %s233 = sphi 0, %s230
    %s234 = sphi 0, %s233
    %s250 = sphi 0, %s234
  $region4: #{video_transformer_forward.8} parent=0 // loop_header_branch
    %19 = sbr.rel (%p17) target = $region8
  $region5: #{video_transformer_forward.8} parent=0 // loop_body
    %s21 = ssub.s32 %s16, 1
    %s22 = ssub.s32 %s16, 2
    %s23 = sadd.s32 %s16, 1
    %s24 = ssub.s32 %s16, %s23
    %p25 = scmp.eq.s32.totalorder %s24, 0
    %s27 = sadd.s32 %s26, 1
    %s28 = scalar_select %p25, %s26, %s27
    %p31 = pneg %p25
    %p32 = scmp.eq.s32.totalorder %s16, 1
    %p33 = por %p31, %p32
    %p34 = scmp.ne.s32.totalorder %s26, %s29
    %p35 = scmp.eq.s32.totalorder %s16, 0
    %p36 = por %p34, %p35
    %p37 = scmp.ne.s32.totalorder %s26, %s29
    %p38 = scmp.eq.s32.totalorder %s21, 1
    %p39 = por %p37, %p38
    %p40 = scmp.ne.s32.totalorder %s29, %s30
    %p41 = scmp.eq.s32.totalorder %s21, 0
    %p42 = por %p40, %p41
    %p43 = scmp.ne.s32.totalorder %s29, %s30
    %p44 = scmp.eq.s32.totalorder %s22, 1
    %p45 = por %p43, %p44
    %p47 = scmp.ne.s32.totalorder %s30, %s46
    %p48 = scmp.eq.s32.totalorder %s22, 0
    %p49 = por %p47, %p48
    %s50 = ssub.s32 %s16, %s23
    %p51 = scmp.eq.s32.totalorder %s50, 0
    %s53 = sadd.s32 %s52, 1
    %s54 = scalar_select %p51, %s52, %s53
    %p57 = pneg %p51
    %p58 = scmp.eq.s32.totalorder %s16, 1
    %p59 = por %p57, %p58
    %p60 = scmp.ne.s32.totalorder %s52, %s55
    %p61 = scmp.eq.s32.totalorder %s16, 0
    %p62 = por %p60, %p61
    %p63 = scmp.ne.s32.totalorder %s52, %s55
    %p64 = scmp.eq.s32.totalorder %s21, 1
    %p65 = por %p63, %p64
    %p66 = scmp.ne.s32.totalorder %s55, %s56
    %p67 = scmp.eq.s32.totalorder %s21, 0
    %p68 = por %p66, %p67
    %p69 = scmp.ne.s32.totalorder %s55, %s56
    %p70 = scmp.eq.s32.totalorder %s22, 1
    %p71 = por %p69, %p70
    %p73 = scmp.ne.s32.totalorder %s56, %s72
    %p74 = scmp.eq.s32.totalorder %s22, 0
    %p75 = por %p73, %p74
    %s77 = sadd.s32 %s76, 1
    %p80 = scmp.eq.s32.totalorder %s16, 1
    %p81 = scmp.ne.s32.totalorder %s76, %s78
    %p82 = scmp.eq.s32.totalorder %s16, 0
    %p83 = por %p81, %p82
    %p84 = scmp.ne.s32.totalorder %s76, %s78
    %p85 = scmp.eq.s32.totalorder %s21, 1
    %p86 = por %p84, %p85
    %p87 = scmp.ne.s32.totalorder %s78, %s79
    %p88 = scmp.eq.s32.totalorder %s21, 0
    %p89 = por %p87, %p88
    %p90 = scmp.ne.s32.totalorder %s78, %s79
    %p91 = scmp.eq.s32.totalorder %s22, 1
    %p92 = por %p90, %p91
    %p94 = scmp.ne.s32.totalorder %s79, %s93
    %p95 = scmp.eq.s32.totalorder %s22, 0
    %p96 = por %p94, %p95
    %s98 = sadd.s32 %s97, 1
    %p101 = scmp.eq.s32.totalorder %s16, 1
    %p102 = scmp.ne.s32.totalorder %s97, %s99
    %p103 = scmp.eq.s32.totalorder %s16, 0
    %p104 = por %p102, %p103
    %p105 = scmp.ne.s32.totalorder %s97, %s99
    %p106 = scmp.eq.s32.totalorder %s21, 1
    %p107 = por %p105, %p106
    %p108 = scmp.ne.s32.totalorder %s99, %s100
    %p109 = scmp.eq.s32.totalorder %s21, 0
    %p110 = por %p108, %p109
    %p111 = scmp.ne.s32.totalorder %s99, %s100
    %p112 = scmp.eq.s32.totalorder %s22, 1
    %p113 = por %p111, %p112
    %p115 = scmp.ne.s32.totalorder %s100, %s114
    %p116 = scmp.eq.s32.totalorder %s22, 0
    %p117 = por %p115, %p116
    %s119 = sadd.s32 %s118, 1
    %p122 = scmp.eq.s32.totalorder %s16, 1
    %p123 = scmp.ne.s32.totalorder %s118, %s120
    %p124 = scmp.eq.s32.totalorder %s16, 0
    %p125 = por %p123, %p124
    %p126 = scmp.ne.s32.totalorder %s118, %s120
    %p127 = scmp.eq.s32.totalorder %s21, 1
    %p128 = por %p126, %p127
    %p129 = scmp.ne.s32.totalorder %s120, %s121
    %p130 = scmp.eq.s32.totalorder %s21, 0
    %p131 = por %p129, %p130
    %p132 = scmp.ne.s32.totalorder %s120, %s121
    %p133 = scmp.eq.s32.totalorder %s22, 1
    %p134 = por %p132, %p133
    %p136 = scmp.ne.s32.totalorder %s121, %s135
    %p137 = scmp.eq.s32.totalorder %s22, 0
    %p138 = por %p136, %p137
    %s140 = sadd.s32 %s139, 1
    %p143 = scmp.eq.s32.totalorder %s16, 1
    %p144 = scmp.ne.s32.totalorder %s139, %s141
    %p145 = scmp.eq.s32.totalorder %s16, 0
    %p146 = por %p144, %p145
    %p147 = scmp.ne.s32.totalorder %s139, %s141
    %p148 = scmp.eq.s32.totalorder %s21, 1
    %p149 = por %p147, %p148
    %p150 = scmp.ne.s32.totalorder %s141, %s142
    %p151 = scmp.eq.s32.totalorder %s21, 0
    %p152 = por %p150, %p151
    %p153 = scmp.ne.s32.totalorder %s141, %s142
    %p154 = scmp.eq.s32.totalorder %s22, 1
    %p155 = por %p153, %p154
    %p157 = scmp.ne.s32.totalorder %s142, %s156
    %p158 = scmp.eq.s32.totalorder %s22, 0
    %p159 = por %p157, %p158
    %s161 = sadd.s32 %s160, 1
    %p164 = scmp.eq.s32.totalorder %s16, 1
    %p165 = scmp.ne.s32.totalorder %s160, %s162
    %p166 = scmp.eq.s32.totalorder %s16, 0
    %p167 = por %p165, %p166
    %p168 = scmp.ne.s32.totalorder %s160, %s162
    %p169 = scmp.eq.s32.totalorder %s21, 1
    %p170 = por %p168, %p169
    %p171 = scmp.ne.s32.totalorder %s162, %s163
    %p172 = scmp.eq.s32.totalorder %s21, 0
    %p173 = por %p171, %p172
    %p174 = scmp.ne.s32.totalorder %s162, %s163
    %p175 = scmp.eq.s32.totalorder %s22, 1
    %p176 = por %p174, %p175
    %p178 = scmp.ne.s32.totalorder %s163, %s177
    %p179 = scmp.eq.s32.totalorder %s22, 0
    %p180 = por %p178, %p179
    %s182 = sadd.s32 %s181, 1
    %p185 = scmp.eq.s32.totalorder %s16, 1
    %p186 = scmp.ne.s32.totalorder %s181, %s183
    %p187 = scmp.eq.s32.totalorder %s16, 0
    %p188 = por %p186, %p187
    %p189 = scmp.ne.s32.totalorder %s181, %s183
    %p190 = scmp.eq.s32.totalorder %s21, 1
    %p191 = por %p189, %p190
    %p192 = scmp.ne.s32.totalorder %s183, %s184
    %p193 = scmp.eq.s32.totalorder %s21, 0
    %p194 = por %p192, %p193
    %p195 = scmp.ne.s32.totalorder %s183, %s184
    %p196 = scmp.eq.s32.totalorder %s22, 1
    %p197 = por %p195, %p196
    %p199 = scmp.ne.s32.totalorder %s184, %s198
    %p200 = scmp.eq.s32.totalorder %s22, 0
    %p201 = por %p199, %p200
    %s202 = ssub.s32 %s16, %s23
    %p203 = scmp.eq.s32.totalorder %s202, 0
    %s205 = sadd.s32 %s204, 1
    %s206 = scalar_select %p203, %s204, %s205
    %p209 = pneg %p203
    %p210 = scmp.eq.s32.totalorder %s16, 1
    %p211 = por %p209, %p210
    %p212 = scmp.ne.s32.totalorder %s204, %s207
    %p213 = scmp.eq.s32.totalorder %s16, 0
    %p214 = por %p212, %p213
    %p215 = scmp.ne.s32.totalorder %s204, %s207
    %p216 = scmp.eq.s32.totalorder %s21, 1
    %p217 = por %p215, %p216
    %p218 = scmp.ne.s32.totalorder %s207, %s208
    %p219 = scmp.eq.s32.totalorder %s21, 0
    %p220 = por %p218, %p219
    %p221 = scmp.ne.s32.totalorder %s207, %s208
    %p222 = scmp.eq.s32.totalorder %s22, 1
    %p223 = por %p221, %p222
    %p225 = scmp.ne.s32.totalorder %s208, %s224
    %p226 = scmp.eq.s32.totalorder %s22, 0
    %p227 = por %p225, %p226
    %s228 = ssub.s32 %s16, %s23
    %p229 = scmp.eq.s32.totalorder %s228, 0
    %s231 = sadd.s32 %s230, 1
    %s232 = scalar_select %p229, %s230, %s231
    %p235 = pneg %p229
    %p236 = scmp.eq.s32.totalorder %s16, 1
    %p237 = por %p235, %p236
    %p238 = scmp.ne.s32.totalorder %s230, %s233
    %p239 = scmp.eq.s32.totalorder %s16, 0
    %p240 = por %p238, %p239
    %p241 = scmp.ne.s32.totalorder %s230, %s233
    %p242 = scmp.eq.s32.totalorder %s21, 1
    %p243 = por %p241, %p242
    %p244 = scmp.ne.s32.totalorder %s233, %s234
    %p245 = scmp.eq.s32.totalorder %s21, 0
    %p246 = por %p244, %p245
    %p247 = scmp.ne.s32.totalorder %s233, %s234
    %p248 = scmp.eq.s32.totalorder %s22, 1
    %p249 = por %p247, %p248
    %p251 = scmp.ne.s32.totalorder %s234, %s250
    %p252 = scmp.eq.s32.totalorder %s22, 0
    %p253 = por %p251, %p252
    %p254 = scmp.le.s32.totalorder 1, %s16
    %p255 = scmp.lt.s32.totalorder %s16, 3
    %p256 = pnand %p254, %p255
    %p257 = pneg %p256
    // Predicated region
    $region9: #{video_transformer_forward.8} parent=5 // pred_check
      _
    $region10: #{video_transformer_forward.8} parent=5 // pred_check_branch
      %259 = sbr.rel (%p256) target = $region12
    $region11: #{video_transformer_forward.8} parent=5 // pred_region
      %s260 = ssub.s32 %s16, 1
      // Predicated region
      $region13: #{video_transformer_forward.8} parent=11 // pred_check
        %p261 = pneg %p89
      $region14: #{video_transformer_forward.8} parent=11 // pred_check_branch
        %263 = sbr.rel (%p261) target = $region16
      $region15: #{video_transformer_forward.8} parent=11 // pred_region
        _
      $region16: #{video_transformer_forward.8} parent=11 // pred_fallthru
        _
      // Predicated region
      $region17: #{video_transformer_forward.8} parent=11 // pred_check
        %p264 = pneg %p110
      $region18: #{video_transformer_forward.8} parent=11 // pred_check_branch
        %266 = sbr.rel (%p264) target = $region20
      $region19: #{video_transformer_forward.8} parent=11 // pred_region
        _
      $region20: #{video_transformer_forward.8} parent=11 // pred_fallthru
        _
      // Predicated region
      $region21: #{video_transformer_forward.8} parent=11 // pred_check
        %p267 = pneg %p131
      $region22: #{video_transformer_forward.8} parent=11 // pred_check_branch
        %269 = sbr.rel (%p267) target = $region24
      $region23: #{video_transformer_forward.8} parent=11 // pred_region
        _
      $region24: #{video_transformer_forward.8} parent=11 // pred_fallthru
        _
      // Predicated region
      $region25: #{video_transformer_forward.8} parent=11 // pred_check
        %p270 = pneg %p152
      $region26: #{video_transformer_forward.8} parent=11 // pred_check_branch
        %272 = sbr.rel (%p270) target = $region28
      $region27: #{video_transformer_forward.8} parent=11 // pred_region
        _
      $region28: #{video_transformer_forward.8} parent=11 // pred_fallthru
        _
      // Predicated region
      $region29: #{video_transformer_forward.8} parent=11 // pred_check
        %p273 = pneg %p173
      $region30: #{video_transformer_forward.8} parent=11 // pred_check_branch
        %275 = sbr.rel (%p273) target = $region32
      $region31: #{video_transformer_forward.8} parent=11 // pred_region
        _
      $region32: #{video_transformer_forward.8} parent=11 // pred_fallthru
        _
      // Predicated region
      $region33: #{video_transformer_forward.8} parent=11 // pred_check
        %p276 = pneg %p194
      $region34: #{video_transformer_forward.8} parent=11 // pred_check_branch
        %278 = sbr.rel (%p276) target = $region36
      $region35: #{video_transformer_forward.8} parent=11 // pred_region
        _
      $region36: #{video_transformer_forward.8} parent=11 // pred_fallthru
        _
    $region12: #{video_transformer_forward.8} parent=5 // pred_fallthru
      _
    %p279 = scmp.lt.s32.totalorder %s16, 2
    // Predicated region
    $region37: #{video_transformer_forward.8} parent=5 // pred_check
      %p280 = pneg %p279
    $region38: #{video_transformer_forward.8} parent=5 // pred_check_branch
      %282 = sbr.rel (%p280) target = $region40
    $region39: #{video_transformer_forward.8} parent=5 // pred_region
      // Predicated region
      $region41: #{video_transformer_forward.8} parent=39 // pred_check
        %p283 = pneg %p36
      $region42: #{video_transformer_forward.8} parent=39 // pred_check_branch
        %285 = sbr.rel (%p283) target = $region44
      $region43: #{video_transformer_forward.8} parent=39 // pred_region
        %s286 = smul.u32 3, %s16
        %p287 = scmp.lt.s32.totalorder %s286, 5
        %s288 = scalar_select %p287, %s286, 5
        %s289 = smul.addr %s288, 8
        %s290 = scalar_lea.vmem %s0, %s289
        %s291 = smul.u32 3, %s16
      $region44: #{video_transformer_forward.8} parent=39 // pred_fallthru
        _
      // Predicated region
      $region45: #{video_transformer_forward.8} parent=39 // pred_check
        %p292 = pneg %p62
      $region46: #{video_transformer_forward.8} parent=39 // pred_check_branch
        %294 = sbr.rel (%p292) target = $region48
      $region47: #{video_transformer_forward.8} parent=39 // pred_region
        %s295 = smul.u32 3, %s16
        %p296 = scmp.lt.s32.totalorder %s295, 5
        %s297 = scalar_select %p296, %s295, 5
        %s298 = smul.addr %s297, 8
        %s299 = scalar_lea.vmem %s1, %s298
        %s300 = smul.u32 3, %s16
      $region48: #{video_transformer_forward.8} parent=39 // pred_fallthru
        _
    $region40: #{video_transformer_forward.8} parent=5 // pred_fallthru
      _
    %p301 = scmp.le.s32.totalorder 1, %s16
    %p302 = scmp.lt.s32.totalorder %s16, 3
    %p303 = pnand %p301, %p302
    %p304 = pneg %p303
    // Predicated region
    $region49: #{video_transformer_forward.8} parent=5 // pred_check
      _
    $region50: #{video_transformer_forward.8} parent=5 // pred_check_branch
      %306 = sbr.rel (%p303) target = $region52
    $region51: #{video_transformer_forward.8} parent=5 // pred_region
      %s307 = ssub.s32 %s16, 1
      %s308 = smul.u32 3, %s21
      %p309 = scmp.lt.s32.totalorder %s308, 5
      %s310 = scalar_select %p309, %s308, 5
      %s311 = smul.addr %s310, 8
      %s312 = scalar_lea.vmem %s0, %s311
      %p313 = pneg %p42
      %p314 = pneg %p39
      %s315 = smul.u32 3, %s21
      %p316 = scmp.lt.s32.totalorder %s315, 5
      %s317 = scalar_select %p316, %s315, 5
      %s318 = smul.addr %s317, 8
      %s319 = scalar_lea.vmem %s1, %s318
      %p320 = pneg %p68
      %p321 = pneg %p65
      %p322 = pneg %p89
      %p323 = pneg %p86
      %p324 = pneg %p110
      %p325 = pneg %p107
      %p326 = pneg %p131
      %p327 = pneg %p128
      %p328 = pneg %p152
      %p329 = pneg %p149
      %p330 = pneg %p173
      %p331 = pneg %p170
      %p332 = pneg %p194
      %p333 = pneg %p191
      %p334 = pneg %p220
      %p335 = pneg %p217
      %s336 = smul.u32 3, %s21
      %p337 = scmp.lt.s32.totalorder %s336, 5
      %s338 = scalar_select %p337, %s336, 5
      %s339 = smul.addr %s338, 8
      %s340 = scalar_lea.vmem %s8, %s339
      %p341 = pneg %p246
      %p342 = pneg %p243
      %s343 = smul.u32 3, %s21
      %p344 = scmp.lt.s32.totalorder %s343, 5
      %s345 = scalar_select %p344, %s343, 5
      %s346 = smul.addr %s345, 8
      %s347 = scalar_lea.vmem %s9, %s346
      %s348 = smul.u32 3, %s21
      %p349 = scmp.lt.s32.totalorder %s348, 5
      %s350 = scalar_select %p349, %s348, 5
      %s351 = smul.addr %s350, 8
      %s352 = scalar_lea.vmem %s0, %s351
      %s353 = smul.u32 3, %s21
      %s354 = smul.u32 3, %s21
      %p355 = scmp.lt.s32.totalorder %s354, 5
      %s356 = scalar_select %p355, %s354, 5
      %s357 = smul.addr %s356, 8
      %s358 = scalar_lea.vmem %s1, %s357
      %s359 = smul.u32 3, %s21
      %s360 = smul.u32 3, %s21
      %p361 = scmp.lt.s32.totalorder %s360, 5
      %s362 = scalar_select %p361, %s360, 5
      %s363 = smul.addr %s362, 8
      %s364 = scalar_lea.vmem %s8, %s363
      %s365 = smul.u32 3, %s21
      %s366 = smul.u32 3, %s21
      %p367 = scmp.lt.s32.totalorder %s366, 5
      %s368 = scalar_select %p367, %s366, 5
      %s369 = smul.addr %s368, 8
      %s370 = scalar_lea.vmem %s9, %s369
      %s371 = smul.u32 3, %s21
      %v373 = vld [vmem:[%s2] sm:$0x1]
      %v374 = vld [vmem:[%s3] sm:$0x1]
      %v375 = vld [vmem:[%s4] sm:$0xf]
      %v376 = vld [vmem:[%s4 + $0x4] sm:$0xf]
      %v377 = vld [vmem:[%s4 + $0x8] sm:$0xf]
      %v378 = vld [vmem:[%s4 + $0xc] sm:$0xf]
      %v379 = vld [vmem:[%s5] sm:$0x1]
      %v380 = vld [vmem:[%s6] sm:$0xf]
      %v381 = vld [vmem:[%s6 + $0x4] sm:$0xf]
      %v382 = vld [vmem:[%s6 + $0x8] sm:$0xf]
      %v383 = vld [vmem:[%s6 + $0xc] sm:$0xf]
      %v384 = vld [vmem:[%s6 + $0x10] sm:$0xf]
      %v385 = vld [vmem:[%s6 + $0x14] sm:$0xf]
      %v386 = vld [vmem:[%s6 + $0x18] sm:$0xf]
      %v387 = vld [vmem:[%s6 + $0x1c] sm:$0xf]
      %v388 = vld [vmem:[%s6 + $0x20] sm:$0xf]
      %v389 = vld [vmem:[%s6 + $0x24] sm:$0xf]
      %v390 = vld [vmem:[%s6 + $0x28] sm:$0xf]
      %v391 = vld [vmem:[%s6 + $0x2c] sm:$0xf]
      %v392 = vld [vmem:[%s6 + $0x30] sm:$0xf]
      %v393 = vld [vmem:[%s6 + $0x34] sm:$0xf]
      %v394 = vld [vmem:[%s6 + $0x38] sm:$0xf]
      %v395 = vld [vmem:[%s6 + $0x3c] sm:$0xf]
      %v396 = vld [vmem:[%s7] sm:$0x1]
      %v397 = vld [vmem:[%s352] sm:$0xff]
      %v398 = vld [vmem:[%s352 + $0x8] sm:$0xff]
      %v399 = vld [vmem:[%s352 + $0x10] sm:$0xff]
      %vm400 = vcmask 261120
      %v401 = vsel %vm400, %v397, 0.0
      %402 = vadd.xlane.f32.xlu0 %v401
      %v403 = vpop.xlane.xlu0 %402
      %v404 = vsel %vm400, %v398, 0.0
      %405 = vadd.xlane.f32.xlu0 %v404
      %v406 = vpop.xlane.xlu0 %405
      %v407 = vsel %vm400, %v399, 0.0
      %408 = vadd.xlane.f32.xlu0 %v407
      %v409 = vpop.xlane.xlu0 %408
      %v410 = vrcp.pop 32.0
      %v411 = vmul.f32 32.0, %v410
      %v412 = vsub.f32 1.0, %v411
      %v413 = vmul.f32 %v410, %v412
      %v414 = vadd.f32 %v410, %v413
      %vm415 = vweird.f32 %v410
      %v416 = vsel %vm415, %v410, %v414
      %v417 = vmul.f32 %v403, %v416
      %v418 = vmul.f32 %v406, %v416
      %v419 = vmul.f32 %v409, %v416
      %v420 = vsub.f32 %v397, %v417
      %v421 = vsub.f32 %v398, %v418
      %v422 = vsub.f32 %v399, %v419
      %v423 = vmul.f32 %v420, %v420
      %v424 = vmul.f32 %v421, %v421
      %v425 = vmul.f32 %v422, %v422
      %v426 = vsel %vm400, %v423, 0.0
      %427 = vadd.xlane.f32.xlu0 %v426
      %v428 = vpop.xlane.xlu0 %427
      %v429 = vsel %vm400, %v424, 0.0
      %430 = vadd.xlane.f32.xlu0 %v429
      %v431 = vpop.xlane.xlu0 %430
      %v432 = vsel %vm400, %v425, 0.0
      %433 = vadd.xlane.f32.xlu0 %v432
      %v434 = vpop.xlane.xlu0 %433
      %v435 = vmul.f32 %v428, %v416
      %v436 = vmul.f32 %v431, %v416
      %v437 = vmul.f32 %v434, %v416
      %v438 = vadd.f32 %v435, 1e-05
      %v439 = vadd.f32 %v436, 1e-05
      %v440 = vadd.f32 %v437, 1e-05
      %v441 = vrsqrt.pop %v438
      %v442 = vmul.f32 %v441, %v438
      %v443 = vmul.f32 %v442, %v441
      %v444 = vmul.f32 0.5, %v443
      %v445 = vsub.f32 1.5, %v444
      %v446 = vmul.f32 %v441, %v445
      %vm447 = vweird.f32 %v438
      %vm448 = vweird.f32 %v441
      %vm449 = vmor %vm447, %vm448
      %v450 = vsel %vm449, %v441, %v446
      %v451 = vrsqrt.pop %v439
      %v452 = vmul.f32 %v451, %v439
      %v453 = vmul.f32 %v452, %v451
      %v454 = vmul.f32 0.5, %v453
      %v455 = vsub.f32 1.5, %v454
      %v456 = vmul.f32 %v451, %v455
      %vm457 = vweird.f32 %v439
      %vm458 = vweird.f32 %v451
      %vm459 = vmor %vm457, %vm458
      %v460 = vsel %vm459, %v451, %v456
      %v461 = vrsqrt.pop %v440
      %v462 = vmul.f32 %v461, %v440
      %v463 = vmul.f32 %v462, %v461
      %v464 = vmul.f32 0.5, %v463
      %v465 = vsub.f32 1.5, %v464
      %v466 = vmul.f32 %v461, %v465
      %vm467 = vweird.f32 %v440
      %vm468 = vweird.f32 %v461
      %vm469 = vmor %vm467, %vm468
      %v470 = vsel %vm469, %v461, %v466
      %v471 = vmul.f32 %v420, %v450
      %v472 = vmul.f32 %v421, %v460
      %v473 = vmul.f32 %v422, %v470
      %v475 = vperm.slane %v373, 0
      %v477 = vmul.f32 %v471, %v475
      %v478 = vmul.f32 %v472, %v475
      %v479 = vmul.f32 %v473, %v475
      %v481 = vperm.slane %v374, 0
      %v483 = vadd.f32 %v477, %v481
      %v484 = vadd.f32 %v478, %v481
      %v485 = vadd.f32 %v479, %v481
      %v486 = vpack.c.bf16 %v484, %v483
      %v487 = vpack.c.bf16 %v485, %v485
      %v489 = vperm.slane %v379, 0
      %v495 = vunpack.c.l.b16 %v375
      %v496 = vunpack.c.l.b16 %v376
      %v497 = vunpack.c.l.b16 %v377
      %v498 = vunpack.c.l.b16 %v378
      %v499 = vpack.c.b16 %v496, %v495
      %v500 = vpack.c.b16 %v498, %v497
      %v504 = vsel %vm400, %v486, 0
      %v507 = vsel %vm400, %v487, 0
      %509 = vmatpush.bf16.msra.mxu0 0
      %510 = vmatpush.bf16.msra.mxu0 0
      %511 = vmatpush.bf16.msra.mxu0 0
      %512 = vmatpush.bf16.msra.mxu0 0
      %513 = vmatpush.bf16.msra.mxu0 0
      %514 = vmatpush.bf16.msra.mxu0 0
      %515 = vmatpush.bf16.msra.mxu0 %v500
      %516 = vmatpush.bf16.msra.mxu0 %v499
      %517 = vmatmul.bf16.gmra.mxu0 %v504
      %v518 = vpop.f32.mrf.mxu0
      %v519 = vadd.f32 %v489, %v518
      %v520 = vpop.f32.mrf.mxu0
      %v521 = vadd.f32 %v489, %v520
      %522 = vmatmul.bf16.gmra.mxu0 %v507
      %v523 = vpop.f32.mrf.mxu0
      %v524 = vadd.f32 %v489, %v523
      %v525 = vpop.f32.mrf.mxu0
      %526 = vdwg.mxu0
      %v527 = vmul.f32 %v519, 0.5
      %v528 = vmul.f32 %v521, 0.5
      %v529 = vmul.f32 %v524, 0.5
      %v530 = vmul.f32 %v519, %v519
      %v531 = vmul.f32 %v521, %v521
      %v532 = vmul.f32 %v524, %v524
      %v533 = vmul.f32 %v530, %v519
      %v534 = vmul.f32 %v531, %v521
      %v535 = vmul.f32 %v532, %v524
      %v536 = vmul.f32 %v533, 0.044715
      %v537 = vmul.f32 %v534, 0.044715
      %v538 = vmul.f32 %v535, 0.044715
      %v539 = vadd.f32 %v519, %v536
      %v540 = vadd.f32 %v521, %v537
      %v541 = vadd.f32 %v524, %v538
      %v542 = vmul.f32 %v539, 0.7978846
      %v543 = vmul.f32 %v540, 0.7978846
      %v544 = vmul.f32 %v541, 0.7978846
      %v545 = vtanh.pop %v542
      %v546 = vtanh.pop %v543
      %v547 = vtanh.pop %v544
      %v548 = vadd.f32 %v545, 1.0
      %v549 = vadd.f32 %v546, 1.0
      %v550 = vadd.f32 %v547, 1.0
      %v551 = vmul.f32 %v527, %v548
      %v552 = vmul.f32 %v528, %v549
      %v553 = vmul.f32 %v529, %v550
      %v554 = vpack.c.bf16 %v552, %v551
      %v555 = vpack.c.bf16 %v553, %v553
      %v557 = vperm.slane %v396, 0
      %v575 = vunpack.c.l.b16 %v380
      %v576 = vunpack.c.l.b16 %v381
      %v577 = vunpack.c.l.b16 %v382
      %v578 = vunpack.c.l.b16 %v383
      %v579 = vunpack.c.l.b16 %v384
      %v580 = vunpack.c.l.b16 %v385
      %v581 = vunpack.c.l.b16 %v386
      %v582 = vunpack.c.l.b16 %v387
      %v583 = vunpack.c.l.b16 %v388
      %v584 = vunpack.c.l.b16 %v389
      %v585 = vunpack.c.l.b16 %v390
      %v586 = vunpack.c.l.b16 %v391
      %v587 = vunpack.c.l.b16 %v392
      %v588 = vunpack.c.l.b16 %v393
      %v589 = vunpack.c.l.b16 %v394
      %v590 = vunpack.c.l.b16 %v395
      %v591 = vpack.c.b16 %v576, %v575
      %v592 = vpack.c.b16 %v578, %v577
      %v593 = vpack.c.b16 %v580, %v579
      %v594 = vpack.c.b16 %v582, %v581
      %v595 = vpack.c.b16 %v584, %v583
      %v596 = vpack.c.b16 %v586, %v585
      %v597 = vpack.c.b16 %v588, %v587
      %v598 = vpack.c.b16 %v590, %v589
      %607 = vmatpush.bf16.msra.mxu0 %v598
      %608 = vmatpush.bf16.msra.mxu0 %v597
      %609 = vmatpush.bf16.msra.mxu0 %v596
      %610 = vmatpush.bf16.msra.mxu0 %v595
      %611 = vmatpush.bf16.msra.mxu0 %v594
      %612 = vmatpush.bf16.msra.mxu0 %v593
      %613 = vmatpush.bf16.msra.mxu0 %v592
      %614 = vmatpush.bf16.msra.mxu0 %v591
      %615 = vmatmul.bf16.gmra.mxu0 %v554
      %v616 = vpop.f32.mrf.mxu0
      %v617 = vadd.f32 %v557, %v616
      %v618 = vpop.f32.mrf.mxu0
      %v619 = vadd.f32 %v557, %v618
      %620 = vmatmul.bf16.gmra.mxu0 %v555
      %v621 = vpop.f32.mrf.mxu0
      %v622 = vadd.f32 %v557, %v621
      %v623 = vpop.f32.mrf.mxu0
      %624 = vdwg.mxu0
      %v625 = vadd.f32 %v397, %v617
      %v626 = vadd.f32 %v398, %v619
      %v627 = vadd.f32 %v399, %v622
      %628 = vst.msk [vmem:[%s364] sm:$0xff] %vm400, %v625
      %629 = vst.msk [vmem:[%s364 + $0x8] sm:$0xff] %vm400, %v626
      %630 = vst.msk [vmem:[%s364 + $0x10] sm:$0xff] %vm400, %v627
      %v631 = vld [vmem:[%s358] sm:$0xff]
      %v632 = vld [vmem:[%s358 + $0x8] sm:$0xff]
      %v633 = vld [vmem:[%s358 + $0x10] sm:$0xff]
      %v634 = vsel %vm400, %v631, 0.0
      %635 = vadd.xlane.f32.xlu0 %v634
      %v636 = vpop.xlane.xlu0 %635
      %v637 = vsel %vm400, %v632, 0.0
      %638 = vadd.xlane.f32.xlu0 %v637
      %v639 = vpop.xlane.xlu0 %638
      %v640 = vsel %vm400, %v633, 0.0
      %641 = vadd.xlane.f32.xlu0 %v640
      %v642 = vpop.xlane.xlu0 %641
      %v643 = vmul.f32 %v636, %v416
      %v644 = vmul.f32 %v639, %v416
      %v645 = vmul.f32 %v642, %v416
      %v646 = vsub.f32 %v631, %v643
      %v647 = vsub.f32 %v632, %v644
      %v648 = vsub.f32 %v633, %v645
      %v649 = vmul.f32 %v646, %v646
      %v650 = vmul.f32 %v647, %v647
      %v651 = vmul.f32 %v648, %v648
      %v652 = vsel %vm400, %v649, 0.0
      %653 = vadd.xlane.f32.xlu0 %v652
      %v654 = vpop.xlane.xlu0 %653
      %v655 = vsel %vm400, %v650, 0.0
      %656 = vadd.xlane.f32.xlu0 %v655
      %v657 = vpop.xlane.xlu0 %656
      %v658 = vsel %vm400, %v651, 0.0
      %659 = vadd.xlane.f32.xlu0 %v658
      %v660 = vpop.xlane.xlu0 %659
      %v661 = vmul.f32 %v654, %v416
      %v662 = vmul.f32 %v657, %v416
      %v663 = vmul.f32 %v660, %v416
      %v664 = vadd.f32 %v661, 1e-05
      %v665 = vadd.f32 %v662, 1e-05
      %v666 = vadd.f32 %v663, 1e-05
      %v667 = vrsqrt.pop %v664
      %v668 = vmul.f32 %v667, %v664
      %v669 = vmul.f32 %v668, %v667
      %v670 = vmul.f32 0.5, %v669
      %v671 = vsub.f32 1.5, %v670
      %v672 = vmul.f32 %v667, %v671
      %vm673 = vweird.f32 %v664
      %vm674 = vweird.f32 %v667
      %vm675 = vmor %vm673, %vm674
      %v676 = vsel %vm675, %v667, %v672
      %v677 = vrsqrt.pop %v665
      %v678 = vmul.f32 %v677, %v665
      %v679 = vmul.f32 %v678, %v677
      %v680 = vmul.f32 0.5, %v679
      %v681 = vsub.f32 1.5, %v680
      %v682 = vmul.f32 %v677, %v681
      %vm683 = vweird.f32 %v665
      %vm684 = vweird.f32 %v677
      %vm685 = vmor %vm683, %vm684
      %v686 = vsel %vm685, %v677, %v682
      %v687 = vrsqrt.pop %v666
      %v688 = vmul.f32 %v687, %v666
      %v689 = vmul.f32 %v688, %v687
      %v690 = vmul.f32 0.5, %v689
      %v691 = vsub.f32 1.5, %v690
      %v692 = vmul.f32 %v687, %v691
      %vm693 = vweird.f32 %v666
      %vm694 = vweird.f32 %v687
      %vm695 = vmor %vm693, %vm694
      %v696 = vsel %vm695, %v687, %v692
      %v697 = vmul.f32 %v646, %v676
      %v698 = vmul.f32 %v647, %v686
      %v699 = vmul.f32 %v648, %v696
      %v700 = vmul.f32 %v697, %v475
      %v701 = vmul.f32 %v698, %v475
      %v702 = vmul.f32 %v699, %v475
      %v703 = vadd.f32 %v700, %v481
      %v704 = vadd.f32 %v701, %v481
      %v705 = vadd.f32 %v702, %v481
      %v706 = vpack.c.bf16 %v704, %v703
      %v707 = vpack.c.bf16 %v705, %v705
      %v709 = vsel %vm400, %v706, 0
      %v712 = vsel %vm400, %v707, 0
      %714 = vmatpush.bf16.msra.mxu0 0
      %715 = vmatpush.bf16.msra.mxu0 0
      %716 = vmatpush.bf16.msra.mxu0 0
      %717 = vmatpush.bf16.msra.mxu0 0
      %718 = vmatpush.bf16.msra.mxu0 0
      %719 = vmatpush.bf16.msra.mxu0 0
      %720 = vmatpush.bf16.msra.mxu0 %v500
      %721 = vmatpush.bf16.msra.mxu0 %v499
      %722 = vmatmul.bf16.gmra.mxu0 %v709
      %v723 = vpop.f32.mrf.mxu0
      %v724 = vadd.f32 %v489, %v723
      %v725 = vpop.f32.mrf.mxu0
      %v726 = vadd.f32 %v489, %v725
      %727 = vmatmul.bf16.gmra.mxu0 %v712
      %v728 = vpop.f32.mrf.mxu0
      %v729 = vadd.f32 %v489, %v728
      %v730 = vpop.f32.mrf.mxu0
      %731 = vdwg.mxu0
      %v732 = vmul.f32 %v724, 0.5
      %v733 = vmul.f32 %v726, 0.5
      %v734 = vmul.f32 %v729, 0.5
      %v735 = vmul.f32 %v724, %v724
      %v736 = vmul.f32 %v726, %v726
      %v737 = vmul.f32 %v729, %v729
      %v738 = vmul.f32 %v735, %v724
      %v739 = vmul.f32 %v736, %v726
      %v740 = vmul.f32 %v737, %v729
      %v741 = vmul.f32 %v738, 0.044715
      %v742 = vmul.f32 %v739, 0.044715
      %v743 = vmul.f32 %v740, 0.044715
      %v744 = vadd.f32 %v724, %v741
      %v745 = vadd.f32 %v726, %v742
      %v746 = vadd.f32 %v729, %v743
      %v747 = vmul.f32 %v744, 0.7978846
      %v748 = vmul.f32 %v745, 0.7978846
      %v749 = vmul.f32 %v746, 0.7978846
      %v750 = vtanh.pop %v747
      %v751 = vtanh.pop %v748
      %v752 = vtanh.pop %v749
      %v753 = vadd.f32 %v750, 1.0
      %v754 = vadd.f32 %v751, 1.0
      %v755 = vadd.f32 %v752, 1.0
      %v756 = vmul.f32 %v732, %v753
      %v757 = vmul.f32 %v733, %v754
      %v758 = vmul.f32 %v734, %v755
      %v759 = vpack.c.bf16 %v757, %v756
      %v760 = vpack.c.bf16 %v758, %v758
      %761 = vmatpush.bf16.msra.mxu0 %v598
      %762 = vmatpush.bf16.msra.mxu0 %v597
      %763 = vmatpush.bf16.msra.mxu0 %v596
      %764 = vmatpush.bf16.msra.mxu0 %v595
      %765 = vmatpush.bf16.msra.mxu0 %v594
      %766 = vmatpush.bf16.msra.mxu0 %v593
      %767 = vmatpush.bf16.msra.mxu0 %v592
      %768 = vmatpush.bf16.msra.mxu0 %v591
      %769 = vmatmul.bf16.gmra.mxu0 %v759
      %v770 = vpop.f32.mrf.mxu0
      %v771 = vadd.f32 %v557, %v770
      %v772 = vpop.f32.mrf.mxu0
      %v773 = vadd.f32 %v557, %v772
      %774 = vmatmul.bf16.gmra.mxu0 %v760
      %v775 = vpop.f32.mrf.mxu0
      %v776 = vadd.f32 %v557, %v775
      %v777 = vpop.f32.mrf.mxu0
      %778 = vdwg.mxu0
      %v779 = vadd.f32 %v631, %v771
      %v780 = vadd.f32 %v632, %v773
      %v781 = vadd.f32 %v633, %v776
      %782 = vst.msk [vmem:[%s370] sm:$0xff] %vm400, %v779
      %783 = vst.msk [vmem:[%s370 + $0x8] sm:$0xff] %vm400, %v780
      %784 = vst.msk [vmem:[%s370 + $0x10] sm:$0xff] %vm400, %v781
      %s785 = smul.u32 3, %s21
      %p786 = scmp.lt.s32.totalorder %s785, 5
      %s787 = scalar_select %p786, %s785, 5
      %s788 = smul.addr %s787, 8
      %s789 = scalar_lea.vmem %s8, %s788
      %s790 = smul.u32 3, %s21
      %p791 = scmp.lt.s32.totalorder %s790, 5
      %s792 = scalar_select %p791, %s790, 5
      %s793 = smul.addr %s792, 8
      %s794 = scalar_lea.vmem %s9, %s793
      // Predicated region
      $region53: #{video_transformer_forward.8} parent=51 // pred_check
        %p795 = pneg %p217
      $region54: #{video_transformer_forward.8} parent=51 // pred_check_branch
        %797 = sbr.rel (%p795) target = $region56
      $region55: #{video_transformer_forward.8} parent=51 // pred_region
        %s798 = smul.u32 3, %s21
      $region56: #{video_transformer_forward.8} parent=51 // pred_fallthru
        _
      // Predicated region
      $region57: #{video_transformer_forward.8} parent=51 // pred_check
        %p799 = pneg %p243
      $region58: #{video_transformer_forward.8} parent=51 // pred_check_branch
        %801 = sbr.rel (%p799) target = $region60
      $region59: #{video_transformer_forward.8} parent=51 // pred_region
        %s802 = smul.u32 3, %s21
      $region60: #{video_transformer_forward.8} parent=51 // pred_fallthru
        _
    $region52: #{video_transformer_forward.8} parent=5 // pred_fallthru
      _
    %p803 = scmp.le.s32.totalorder 2, %s16
    // Predicated region
    $region61: #{video_transformer_forward.8} parent=5 // pred_check
      %p804 = pneg %p803
    $region62: #{video_transformer_forward.8} parent=5 // pred_check_branch
      %806 = sbr.rel (%p804) target = $region64
    $region63: #{video_transformer_forward.8} parent=5 // pred_region
      %s807 = ssub.s32 %s16, 2
      // Predicated region
      $region65: #{video_transformer_forward.8} parent=63 // pred_check
        %p808 = pneg %p223
      $region66: #{video_transformer_forward.8} parent=63 // pred_check_branch
        %810 = sbr.rel (%p808) target = $region68
      $region67: #{video_transformer_forward.8} parent=63 // pred_region
        %s811 = smul.u32 3, %s22
        %p812 = scmp.lt.s32.totalorder %s811, 5
        %s813 = scalar_select %p812, %s811, 5
        %s814 = smul.addr %s813, 8
        %s815 = scalar_lea.vmem %s8, %s814
      $region68: #{video_transformer_forward.8} parent=63 // pred_fallthru
        _
      // Predicated region
      $region69: #{video_transformer_forward.8} parent=63 // pred_check
        %p816 = pneg %p249
      $region70: #{video_transformer_forward.8} parent=63 // pred_check_branch
        %818 = sbr.rel (%p816) target = $region72
      $region71: #{video_transformer_forward.8} parent=63 // pred_region
        %s819 = smul.u32 3, %s22
        %p820 = scmp.lt.s32.totalorder %s819, 5
        %s821 = scalar_select %p820, %s819, 5
        %s822 = smul.addr %s821, 8
        %s823 = scalar_lea.vmem %s9, %s822
      $region72: #{video_transformer_forward.8} parent=63 // pred_fallthru
        _
    $region64: #{video_transformer_forward.8} parent=5 // pred_fallthru
      _
  $region6: #{video_transformer_forward.8} parent=0 // loop_footer
    %s20 = sadd.s32 1, %s16
  $region7: #{video_transformer_forward.8} parent=0 // loop_footer_branch
    %15 = sbr.rel target = $region3
  $region8: #{video_transformer_forward.8} parent=0 // loop_exit
    _

// kernel: video_transformer_forward.7
$region0: #{video_transformer_forward.7}
  #allocation0 [shape = 'u32[]', space=smem, size = 0x4, offset = 0x4, fixed_abs, tag = 'smem constant byte address 0x4 - core index']
  #allocation1 [shape = 'u32[72,128]{1,0:T(1,128)}', space=vmem, size = 0x9000, scoped, tag = 'internal scratch']
  #allocation2 [shape = 'bf16[20,64]{1,0:T(8,128)(2,1)}', space=vmem, size = 0x1800, scoped, tag = 'scratch operand']
  %s0 = inlined_call_operand.vmem [shape: f32[2,20,32], index: 0, kind: input, shape index: {}]
  %s1 = inlined_call_operand.vmem [shape: f32[2,20,32], index: 1, kind: input, shape index: {}]
  %s2 = inlined_call_operand.vmem [shape: f32[1,32], index: 2, kind: input, shape index: {}]
  %s3 = inlined_call_operand.vmem [shape: f32[1,32], index: 3, kind: input, shape index: {}]
  %s4 = inlined_call_operand.vmem [shape: f32[1,32], index: 4, kind: input, shape index: {}]
  %s5 = inlined_call_operand.vmem [shape: f32[1,32], index: 5, kind: input, shape index: {}]
  %s6 = inlined_call_operand.vmem [shape: bf16[32,96], index: 6, kind: input, shape index: {}]
  %s7 = inlined_call_operand.vmem [shape: f32[1,96], index: 7, kind: input, shape index: {}]
  %s8 = inlined_call_operand.vmem [shape: bf16[32,96], index: 8, kind: input, shape index: {}]
  %s9 = inlined_call_operand.vmem [shape: f32[1,96], index: 9, kind: input, shape index: {}]
  %s10 = inlined_call_operand.vmem [shape: bf16[32,32], index: 10, kind: input, shape index: {}]
  %s11 = inlined_call_operand.vmem [shape: f32[1,32], index: 11, kind: input, shape index: {}]
  %s12 = inlined_call_operand.vmem [shape: bf16[32,32], index: 12, kind: input, shape index: {}]
  %s13 = inlined_call_operand.vmem [shape: f32[1,32], index: 13, kind: input, shape index: {}]
  %s14 = inlined_call_operand.vmem [shape: f32[2,20,32], index: 14, kind: output, shape index: {0}]
  %s15 = inlined_call_operand.vmem [shape: f32[2,20,32], index: 15, kind: output, shape index: {1}]
  %16 = xla_tuple %s14, %s15
  %s17 = sld [smem:[#allocation0]]
  $region97: #{video_transformer_forward.7} parent=0
    _
  %s19 = ssub.s32 1, %s17
  %s20 = scalar_select 0, %s19, %s17
  loop: start=0, step=1, limit=4
  $region2: #{video_transformer_forward.7} parent=0 // loop_pre_header
    _
  $region3: #{video_transformer_forward.7} parent=0 // loop_header
    %s22 = sphi 0, %s26
    %p23 = scmp.ge.s32.totalorder %s22, 4
    %s29 = sphi 0, %s41
    %s30 = sphi 0, %s37
    %s31 = sphi 0, %s29
    %s32 = sphi 0, %s30
    %s33 = sphi 0, %s31
    %s34 = sphi 0, %s32
    %s46 = sphi 0, %s48
    %s49 = sphi 0, %s46
    %s50 = sphi 0, %s49
    %s66 = sphi 0, %s50
    %s74 = sphi 0, %s76
    %s77 = sphi 0, %s74
    %s78 = sphi 0, %s77
    %s94 = sphi 0, %s78
    %s98 = sphi 0, %s98
    %s100 = sphi 0, %s98
    %s101 = sphi 0, %s100
    %s115 = sphi 0, %s101
    %s119 = sphi 0, %s119
    %s121 = sphi 0, %s119
    %s122 = sphi 0, %s121
    %s136 = sphi 0, %s122
    %s140 = sphi 0, %s140
    %s142 = sphi 0, %s140
    %s143 = sphi 0, %s142
    %s157 = sphi 0, %s143
    %s161 = sphi 0, %s161
    %s163 = sphi 0, %s161
    %s164 = sphi 0, %s163
    %s178 = sphi 0, %s164
    %s182 = sphi 0, %s182
    %s184 = sphi 0, %s182
    %s185 = sphi 0, %s184
    %s199 = sphi 0, %s185
    %s203 = sphi 0, %s203
    %s205 = sphi 0, %s203
    %s206 = sphi 0, %s205
    %s220 = sphi 0, %s206
    %s224 = sphi 0, %s224
    %s226 = sphi 0, %s224
    %s227 = sphi 0, %s226
    %s241 = sphi 0, %s227
    %s245 = sphi 0, %s245
    %s247 = sphi 0, %s245
    %s248 = sphi 0, %s247
    %s262 = sphi 0, %s248
    %s266 = sphi 0, %s266
    %s268 = sphi 0, %s266
    %s269 = sphi 0, %s268
    %s283 = sphi 0, %s269
    %s287 = sphi 0, %s287
    %s289 = sphi 0, %s287
    %s290 = sphi 0, %s289
    %s304 = sphi 0, %s290
    %s308 = sphi 0, %s308
    %s310 = sphi 0, %s308
    %s311 = sphi 0, %s310
    %s325 = sphi 0, %s311
    %s329 = sphi 0, %s329
    %s331 = sphi 0, %s329
    %s332 = sphi 0, %s331
    %s346 = sphi 0, %s332
    %s354 = sphi 0, %s356
    %s357 = sphi 0, %s354
    %s358 = sphi 0, %s357
    %s374 = sphi 0, %s358
    %s382 = sphi 0, %s384
    %s385 = sphi 0, %s382
    %s386 = sphi 0, %s385
    %s402 = sphi 0, %s386
  $region4: #{video_transformer_forward.7} parent=0 // loop_header_branch
    %25 = sbr.rel (%p23) target = $region8
  $region5: #{video_transformer_forward.7} parent=0 // loop_body
    %s27 = ssub.s32 %s22, 1
    %s28 = ssub.s32 %s22, 2
    %s35 = sadd.s32 1, %s30
    %p36 = scmp.ge.s32.totalorder %s35, 1
    %s37 = scalar_select %p36, 0, %s35
    %s38 = sadd.s32 1, %s29
    %s39 = scalar_select %p36, %s38, %s29
    %p40 = scmp.ge.s32.totalorder %s39, 2
    %s41 = scalar_select %p40, 0, %s39
    %s42 = ssub.s32 %s29, %s41
    %s43 = ssub.s32 %s30, %s37
    %s44 = sor.u32 %s42, %s43
    %p45 = scmp.eq.s32.totalorder %s44, 0
    %s47 = sadd.s32 %s46, 1
    %s48 = scalar_select %p45, %s46, %s47
    %p51 = pneg %p45
    %p52 = scmp.eq.s32.totalorder %s22, 1
    %p53 = por %p51, %p52
    %p54 = scmp.ne.s32.totalorder %s46, %s49
    %p55 = scmp.eq.s32.totalorder %s22, 0
    %p56 = por %p54, %p55
    %p57 = scmp.ne.s32.totalorder %s46, %s49
    %p58 = scmp.eq.s32.totalorder %s27, 1
    %p59 = por %p57, %p58
    %p60 = scmp.ne.s32.totalorder %s49, %s50
    %p61 = scmp.eq.s32.totalorder %s27, 0
    %p62 = por %p60, %p61
    %p63 = scmp.ne.s32.totalorder %s49, %s50
    %p64 = scmp.eq.s32.totalorder %s28, 1
    %p65 = por %p63, %p64
    %p67 = scmp.ne.s32.totalorder %s50, %s66
    %p68 = scmp.eq.s32.totalorder %s28, 0
    %p69 = por %p67, %p68
    %s70 = ssub.s32 %s29, %s41
    %s71 = ssub.s32 %s30, %s37
    %s72 = sor.u32 %s70, %s71
    %p73 = scmp.eq.s32.totalorder %s72, 0
    %s75 = sadd.s32 %s74, 1
    %s76 = scalar_select %p73, %s74, %s75
    %p79 = pneg %p73
    %p80 = scmp.eq.s32.totalorder %s22, 1
    %p81 = por %p79, %p80
    %p82 = scmp.ne.s32.totalorder %s74, %s77
    %p83 = scmp.eq.s32.totalorder %s22, 0
    %p84 = por %p82, %p83
    %p85 = scmp.ne.s32.totalorder %s74, %s77
    %p86 = scmp.eq.s32.totalorder %s27, 1
    %p87 = por %p85, %p86
    %p88 = scmp.ne.s32.totalorder %s77, %s78
    %p89 = scmp.eq.s32.totalorder %s27, 0
    %p90 = por %p88, %p89
    %p91 = scmp.ne.s32.totalorder %s77, %s78
    %p92 = scmp.eq.s32.totalorder %s28, 1
    %p93 = por %p91, %p92
    %p95 = scmp.ne.s32.totalorder %s78, %s94
    %p96 = scmp.eq.s32.totalorder %s28, 0
    %p97 = por %p95, %p96
    %s99 = sadd.s32 %s98, 1
    %p102 = scmp.eq.s32.totalorder %s22, 1
    %p103 = scmp.ne.s32.totalorder %s98, %s100
    %p104 = scmp.eq.s32.totalorder %s22, 0
    %p105 = por %p103, %p104
    %p106 = scmp.ne.s32.totalorder %s98, %s100
    %p107 = scmp.eq.s32.totalorder %s27, 1
    %p108 = por %p106, %p107
    %p109 = scmp.ne.s32.totalorder %s100, %s101
    %p110 = scmp.eq.s32.totalorder %s27, 0
    %p111 = por %p109, %p110
    %p112 = scmp.ne.s32.totalorder %s100, %s101
    %p113 = scmp.eq.s32.totalorder %s28, 1
    %p114 = por %p112, %p113
    %p116 = scmp.ne.s32.totalorder %s101, %s115
    %p117 = scmp.eq.s32.totalorder %s28, 0
    %p118 = por %p116, %p117
    %s120 = sadd.s32 %s119, 1
    %p123 = scmp.eq.s32.totalorder %s22, 1
    %p124 = scmp.ne.s32.totalorder %s119, %s121
    %p125 = scmp.eq.s32.totalorder %s22, 0
    %p126 = por %p124, %p125
    %p127 = scmp.ne.s32.totalorder %s119, %s121
    %p128 = scmp.eq.s32.totalorder %s27, 1
    %p129 = por %p127, %p128
    %p130 = scmp.ne.s32.totalorder %s121, %s122
    %p131 = scmp.eq.s32.totalorder %s27, 0
    %p132 = por %p130, %p131
    %p133 = scmp.ne.s32.totalorder %s121, %s122
    %p134 = scmp.eq.s32.totalorder %s28, 1
    %p135 = por %p133, %p134
    %p137 = scmp.ne.s32.totalorder %s122, %s136
    %p138 = scmp.eq.s32.totalorder %s28, 0
    %p139 = por %p137, %p138
    %s141 = sadd.s32 %s140, 1
    %p144 = scmp.eq.s32.totalorder %s22, 1
    %p145 = scmp.ne.s32.totalorder %s140, %s142
    %p146 = scmp.eq.s32.totalorder %s22, 0
    %p147 = por %p145, %p146
    %p148 = scmp.ne.s32.totalorder %s140, %s142
    %p149 = scmp.eq.s32.totalorder %s27, 1
    %p150 = por %p148, %p149
    %p151 = scmp.ne.s32.totalorder %s142, %s143
    %p152 = scmp.eq.s32.totalorder %s27, 0
    %p153 = por %p151, %p152
    %p154 = scmp.ne.s32.totalorder %s142, %s143
    %p155 = scmp.eq.s32.totalorder %s28, 1
    %p156 = por %p154, %p155
    %p158 = scmp.ne.s32.totalorder %s143, %s157
    %p159 = scmp.eq.s32.totalorder %s28, 0
    %p160 = por %p158, %p159
    %s162 = sadd.s32 %s161, 1
    %p165 = scmp.eq.s32.totalorder %s22, 1
    %p166 = scmp.ne.s32.totalorder %s161, %s163
    %p167 = scmp.eq.s32.totalorder %s22, 0
    %p168 = por %p166, %p167
    %p169 = scmp.ne.s32.totalorder %s161, %s163
    %p170 = scmp.eq.s32.totalorder %s27, 1
    %p171 = por %p169, %p170
    %p172 = scmp.ne.s32.totalorder %s163, %s164
    %p173 = scmp.eq.s32.totalorder %s27, 0
    %p174 = por %p172, %p173
    %p175 = scmp.ne.s32.totalorder %s163, %s164
    %p176 = scmp.eq.s32.totalorder %s28, 1
    %p177 = por %p175, %p176
    %p179 = scmp.ne.s32.totalorder %s164, %s178
    %p180 = scmp.eq.s32.totalorder %s28, 0
    %p181 = por %p179, %p180
    %s183 = sadd.s32 %s182, 1
    %p186 = scmp.eq.s32.totalorder %s22, 1
    %p187 = scmp.ne.s32.totalorder %s182, %s184
    %p188 = scmp.eq.s32.totalorder %s22, 0
    %p189 = por %p187, %p188
    %p190 = scmp.ne.s32.totalorder %s182, %s184
    %p191 = scmp.eq.s32.totalorder %s27, 1
    %p192 = por %p190, %p191
    %p193 = scmp.ne.s32.totalorder %s184, %s185
    %p194 = scmp.eq.s32.totalorder %s27, 0
    %p195 = por %p193, %p194
    %p196 = scmp.ne.s32.totalorder %s184, %s185
    %p197 = scmp.eq.s32.totalorder %s28, 1
    %p198 = por %p196, %p197
    %p200 = scmp.ne.s32.totalorder %s185, %s199
    %p201 = scmp.eq.s32.totalorder %s28, 0
    %p202 = por %p200, %p201
    %s204 = sadd.s32 %s203, 1
    %p207 = scmp.eq.s32.totalorder %s22, 1
    %p208 = scmp.ne.s32.totalorder %s203, %s205
    %p209 = scmp.eq.s32.totalorder %s22, 0
    %p210 = por %p208, %p209
    %p211 = scmp.ne.s32.totalorder %s203, %s205
    %p212 = scmp.eq.s32.totalorder %s27, 1
    %p213 = por %p211, %p212
    %p214 = scmp.ne.s32.totalorder %s205, %s206
    %p215 = scmp.eq.s32.totalorder %s27, 0
    %p216 = por %p214, %p215
    %p217 = scmp.ne.s32.totalorder %s205, %s206
    %p218 = scmp.eq.s32.totalorder %s28, 1
    %p219 = por %p217, %p218
    %p221 = scmp.ne.s32.totalorder %s206, %s220
    %p222 = scmp.eq.s32.totalorder %s28, 0
    %p223 = por %p221, %p222
    %s225 = sadd.s32 %s224, 1
    %p228 = scmp.eq.s32.totalorder %s22, 1
    %p229 = scmp.ne.s32.totalorder %s224, %s226
    %p230 = scmp.eq.s32.totalorder %s22, 0
    %p231 = por %p229, %p230
    %p232 = scmp.ne.s32.totalorder %s224, %s226
    %p233 = scmp.eq.s32.totalorder %s27, 1
    %p234 = por %p232, %p233
    %p235 = scmp.ne.s32.totalorder %s226, %s227
    %p236 = scmp.eq.s32.totalorder %s27, 0
    %p237 = por %p235, %p236
    %p238 = scmp.ne.s32.totalorder %s226, %s227
    %p239 = scmp.eq.s32.totalorder %s28, 1
    %p240 = por %p238, %p239
    %p242 = scmp.ne.s32.totalorder %s227, %s241
    %p243 = scmp.eq.s32.totalorder %s28, 0
    %p244 = por %p242, %p243
    %s246 = sadd.s32 %s245, 1
    %p249 = scmp.eq.s32.totalorder %s22, 1
    %p250 = scmp.ne.s32.totalorder %s245, %s247
    %p251 = scmp.eq.s32.totalorder %s22, 0
    %p252 = por %p250, %p251
    %p253 = scmp.ne.s32.totalorder %s245, %s247
    %p254 = scmp.eq.s32.totalorder %s27, 1
    %p255 = por %p253, %p254
    %p256 = scmp.ne.s32.totalorder %s247, %s248
    %p257 = scmp.eq.s32.totalorder %s27, 0
    %p258 = por %p256, %p257
    %p259 = scmp.ne.s32.totalorder %s247, %s248
    %p260 = scmp.eq.s32.totalorder %s28, 1
    %p261 = por %p259, %p260
    %p263 = scmp.ne.s32.totalorder %s248, %s262
    %p264 = scmp.eq.s32.totalorder %s28, 0
    %p265 = por %p263, %p264
    %s267 = sadd.s32 %s266, 1
    %p270 = scmp.eq.s32.totalorder %s22, 1
    %p271 = scmp.ne.s32.totalorder %s266, %s268
    %p272 = scmp.eq.s32.totalorder %s22, 0
    %p273 = por %p271, %p272
    %p274 = scmp.ne.s32.totalorder %s266, %s268
    %p275 = scmp.eq.s32.totalorder %s27, 1
    %p276 = por %p274, %p275
    %p277 = scmp.ne.s32.totalorder %s268, %s269
    %p278 = scmp.eq.s32.totalorder %s27, 0
    %p279 = por %p277, %p278
    %p280 = scmp.ne.s32.totalorder %s268, %s269
    %p281 = scmp.eq.s32.totalorder %s28, 1
    %p282 = por %p280, %p281
    %p284 = scmp.ne.s32.totalorder %s269, %s283
    %p285 = scmp.eq.s32.totalorder %s28, 0
    %p286 = por %p284, %p285
    %s288 = sadd.s32 %s287, 1
    %p291 = scmp.eq.s32.totalorder %s22, 1
    %p292 = scmp.ne.s32.totalorder %s287, %s289
    %p293 = scmp.eq.s32.totalorder %s22, 0
    %p294 = por %p292, %p293
    %p295 = scmp.ne.s32.totalorder %s287, %s289
    %p296 = scmp.eq.s32.totalorder %s27, 1
    %p297 = por %p295, %p296
    %p298 = scmp.ne.s32.totalorder %s289, %s290
    %p299 = scmp.eq.s32.totalorder %s27, 0
    %p300 = por %p298, %p299
    %p301 = scmp.ne.s32.totalorder %s289, %s290
    %p302 = scmp.eq.s32.totalorder %s28, 1
    %p303 = por %p301, %p302
    %p305 = scmp.ne.s32.totalorder %s290, %s304
    %p306 = scmp.eq.s32.totalorder %s28, 0
    %p307 = por %p305, %p306
    %s309 = sadd.s32 %s308, 1
    %p312 = scmp.eq.s32.totalorder %s22, 1
    %p313 = scmp.ne.s32.totalorder %s308, %s310
    %p314 = scmp.eq.s32.totalorder %s22, 0
    %p315 = por %p313, %p314
    %p316 = scmp.ne.s32.totalorder %s308, %s310
    %p317 = scmp.eq.s32.totalorder %s27, 1
    %p318 = por %p316, %p317
    %p319 = scmp.ne.s32.totalorder %s310, %s311
    %p320 = scmp.eq.s32.totalorder %s27, 0
    %p321 = por %p319, %p320
    %p322 = scmp.ne.s32.totalorder %s310, %s311
    %p323 = scmp.eq.s32.totalorder %s28, 1
    %p324 = por %p322, %p323
    %p326 = scmp.ne.s32.totalorder %s311, %s325
    %p327 = scmp.eq.s32.totalorder %s28, 0
    %p328 = por %p326, %p327
    %s330 = sadd.s32 %s329, 1
    %p333 = scmp.eq.s32.totalorder %s22, 1
    %p334 = scmp.ne.s32.totalorder %s329, %s331
    %p335 = scmp.eq.s32.totalorder %s22, 0
    %p336 = por %p334, %p335
    %p337 = scmp.ne.s32.totalorder %s329, %s331
    %p338 = scmp.eq.s32.totalorder %s27, 1
    %p339 = por %p337, %p338
    %p340 = scmp.ne.s32.totalorder %s331, %s332
    %p341 = scmp.eq.s32.totalorder %s27, 0
    %p342 = por %p340, %p341
    %p343 = scmp.ne.s32.totalorder %s331, %s332
    %p344 = scmp.eq.s32.totalorder %s28, 1
    %p345 = por %p343, %p344
    %p347 = scmp.ne.s32.totalorder %s332, %s346
    %p348 = scmp.eq.s32.totalorder %s28, 0
    %p349 = por %p347, %p348
    %s350 = ssub.s32 %s29, %s41
    %s351 = ssub.s32 %s30, %s37
    %s352 = sor.u32 %s350, %s351
    %p353 = scmp.eq.s32.totalorder %s352, 0
    %s355 = sadd.s32 %s354, 1
    %s356 = scalar_select %p353, %s354, %s355
    %p359 = pneg %p353
    %p360 = scmp.eq.s32.totalorder %s22, 1
    %p361 = por %p359, %p360
    %p362 = scmp.ne.s32.totalorder %s354, %s357
    %p363 = scmp.eq.s32.totalorder %s22, 0
    %p364 = por %p362, %p363
    %p365 = scmp.ne.s32.totalorder %s354, %s357
    %p366 = scmp.eq.s32.totalorder %s27, 1
    %p367 = por %p365, %p366
    %p368 = scmp.ne.s32.totalorder %s357, %s358
    %p369 = scmp.eq.s32.totalorder %s27, 0
    %p370 = por %p368, %p369
    %p371 = scmp.ne.s32.totalorder %s357, %s358
    %p372 = scmp.eq.s32.totalorder %s28, 1
    %p373 = por %p371, %p372
    %p375 = scmp.ne.s32.totalorder %s358, %s374
    %p376 = scmp.eq.s32.totalorder %s28, 0
    %p377 = por %p375, %p376
    %s378 = ssub.s32 %s29, %s41
    %s379 = ssub.s32 %s30, %s37
    %s380 = sor.u32 %s378, %s379
    %p381 = scmp.eq.s32.totalorder %s380, 0
    %s383 = sadd.s32 %s382, 1
    %s384 = scalar_select %p381, %s382, %s383
    %p387 = pneg %p381
    %p388 = scmp.eq.s32.totalorder %s22, 1
    %p389 = por %p387, %p388
    %p390 = scmp.ne.s32.totalorder %s382, %s385
    %p391 = scmp.eq.s32.totalorder %s22, 0
    %p392 = por %p390, %p391
    %p393 = scmp.ne.s32.totalorder %s382, %s385
    %p394 = scmp.eq.s32.totalorder %s27, 1
    %p395 = por %p393, %p394
    %p396 = scmp.ne.s32.totalorder %s385, %s386
    %p397 = scmp.eq.s32.totalorder %s27, 0
    %p398 = por %p396, %p397
    %p399 = scmp.ne.s32.totalorder %s385, %s386
    %p400 = scmp.eq.s32.totalorder %s28, 1
    %p401 = por %p399, %p400
    %p403 = scmp.ne.s32.totalorder %s386, %s402
    %p404 = scmp.eq.s32.totalorder %s28, 0
    %p405 = por %p403, %p404
    %p406 = scmp.le.s32.totalorder 1, %s22
    %p407 = scmp.lt.s32.totalorder %s22, 3
    %p408 = pnand %p406, %p407
    %p409 = pneg %p408
    // Predicated region
    $region9: #{video_transformer_forward.7} parent=5 // pred_check
      _
    $region10: #{video_transformer_forward.7} parent=5 // pred_check_branch
      %411 = sbr.rel (%p408) target = $region12
    $region11: #{video_transformer_forward.7} parent=5 // pred_region
      %s412 = ssub.s32 %s22, 1
      // Predicated region
      $region13: #{video_transformer_forward.7} parent=11 // pred_check
        %p413 = pneg %p111
      $region14: #{video_transformer_forward.7} parent=11 // pred_check_branch
        %415 = sbr.rel (%p413) target = $region16
      $region15: #{video_transformer_forward.7} parent=11 // pred_region
        _
      $region16: #{video_transformer_forward.7} parent=11 // pred_fallthru
        _
      // Predicated region
      $region17: #{video_transformer_forward.7} parent=11 // pred_check
        %p416 = pneg %p132
      $region18: #{video_transformer_forward.7} parent=11 // pred_check_branch
        %418 = sbr.rel (%p416) target = $region20
      $region19: #{video_transformer_forward.7} parent=11 // pred_region
        _
      $region20: #{video_transformer_forward.7} parent=11 // pred_fallthru
        _
      // Predicated region
      $region21: #{video_transformer_forward.7} parent=11 // pred_check
        %p419 = pneg %p153
      $region22: #{video_transformer_forward.7} parent=11 // pred_check_branch
        %421 = sbr.rel (%p419) target = $region24
      $region23: #{video_transformer_forward.7} parent=11 // pred_region
        _
      $region24: #{video_transformer_forward.7} parent=11 // pred_fallthru
        _
      // Predicated region
      $region25: #{video_transformer_forward.7} parent=11 // pred_check
        %p422 = pneg %p174
      $region26: #{video_transformer_forward.7} parent=11 // pred_check_branch
        %424 = sbr.rel (%p422) target = $region28
      $region27: #{video_transformer_forward.7} parent=11 // pred_region
        _
      $region28: #{video_transformer_forward.7} parent=11 // pred_fallthru
        _
      // Predicated region
      $region29: #{video_transformer_forward.7} parent=11 // pred_check
        %p425 = pneg %p195
      $region30: #{video_transformer_forward.7} parent=11 // pred_check_branch
        %427 = sbr.rel (%p425) target = $region32
      $region31: #{video_transformer_forward.7} parent=11 // pred_region
        _
      $region32: #{video_transformer_forward.7} parent=11 // pred_fallthru
        _
      // Predicated region
      $region33: #{video_transformer_forward.7} parent=11 // pred_check
        %p428 = pneg %p216
      $region34: #{video_transformer_forward.7} parent=11 // pred_check_branch
        %430 = sbr.rel (%p428) target = $region36
      $region35: #{video_transformer_forward.7} parent=11 // pred_region
        _
      $region36: #{video_transformer_forward.7} parent=11 // pred_fallthru
        _
      // Predicated region
      $region37: #{video_transformer_forward.7} parent=11 // pred_check
        %p431 = pneg %p237
      $region38: #{video_transformer_forward.7} parent=11 // pred_check_branch
        %433 = sbr.rel (%p431) target = $region40
      $region39: #{video_transformer_forward.7} parent=11 // pred_region
        _
      $region40: #{video_transformer_forward.7} parent=11 // pred_fallthru
        _
      // Predicated region
      $region41: #{video_transformer_forward.7} parent=11 // pred_check
        %p434 = pneg %p258
      $region42: #{video_transformer_forward.7} parent=11 // pred_check_branch
        %436 = sbr.rel (%p434) target = $region44
      $region43: #{video_transformer_forward.7} parent=11 // pred_region
        _
      $region44: #{video_transformer_forward.7} parent=11 // pred_fallthru
        _
      // Predicated region
      $region45: #{video_transformer_forward.7} parent=11 // pred_check
        %p437 = pneg %p279
      $region46: #{video_transformer_forward.7} parent=11 // pred_check_branch
        %439 = sbr.rel (%p437) target = $region48
      $region47: #{video_transformer_forward.7} parent=11 // pred_region
        _
      $region48: #{video_transformer_forward.7} parent=11 // pred_fallthru
        _
      // Predicated region
      $region49: #{video_transformer_forward.7} parent=11 // pred_check
        %p440 = pneg %p300
      $region50: #{video_transformer_forward.7} parent=11 // pred_check_branch
        %442 = sbr.rel (%p440) target = $region52
      $region51: #{video_transformer_forward.7} parent=11 // pred_region
        _
      $region52: #{video_transformer_forward.7} parent=11 // pred_fallthru
        _
      // Predicated region
      $region53: #{video_transformer_forward.7} parent=11 // pred_check
        %p443 = pneg %p321
      $region54: #{video_transformer_forward.7} parent=11 // pred_check_branch
        %445 = sbr.rel (%p443) target = $region56
      $region55: #{video_transformer_forward.7} parent=11 // pred_region
        _
      $region56: #{video_transformer_forward.7} parent=11 // pred_fallthru
        _
      // Predicated region
      $region57: #{video_transformer_forward.7} parent=11 // pred_check
        %p446 = pneg %p342
      $region58: #{video_transformer_forward.7} parent=11 // pred_check_branch
        %448 = sbr.rel (%p446) target = $region60
      $region59: #{video_transformer_forward.7} parent=11 // pred_region
        _
      $region60: #{video_transformer_forward.7} parent=11 // pred_fallthru
        _
    $region12: #{video_transformer_forward.7} parent=5 // pred_fallthru
      _
    %p449 = scmp.lt.s32.totalorder %s22, 2
    // Predicated region
    $region61: #{video_transformer_forward.7} parent=5 // pred_check
      %p450 = pneg %p449
    $region62: #{video_transformer_forward.7} parent=5 // pred_check_branch
      %452 = sbr.rel (%p450) target = $region64
    $region63: #{video_transformer_forward.7} parent=5 // pred_region
      // Predicated region
      $region65: #{video_transformer_forward.7} parent=63 // pred_check
        %p453 = pneg %p56
      $region66: #{video_transformer_forward.7} parent=63 // pred_check_branch
        %455 = sbr.rel (%p453) target = $region68
      $region67: #{video_transformer_forward.7} parent=63 // pred_region
        %s456 = smul.u32 3, %s30
        %p457 = scmp.lt.s32.totalorder %s29, 1
        %s458 = scalar_select %p457, %s29, 1
        %p459 = scmp.lt.s32.totalorder %s456, 2
        %s460 = scalar_select %p459, %s456, 2
        %s461 = smul.addr %s458, 3
        %s462 = sadd.s32 %s460, %s461
        %s463 = smul.addr %s462, 8
        %s464 = scalar_lea.vmem %s0, %s463
        %s465 = smul.u32 3, %s30
      $region68: #{video_transformer_forward.7} parent=63 // pred_fallthru
        _
      // Predicated region
      $region69: #{video_transformer_forward.7} parent=63 // pred_check
        %p466 = pneg %p84
      $region70: #{video_transformer_forward.7} parent=63 // pred_check_branch
        %468 = sbr.rel (%p466) target = $region72
      $region71: #{video_transformer_forward.7} parent=63 // pred_region
        %s469 = smul.u32 3, %s30
        %p470 = scmp.lt.s32.totalorder %s29, 1
        %s471 = scalar_select %p470, %s29, 1
        %p472 = scmp.lt.s32.totalorder %s469, 2
        %s473 = scalar_select %p472, %s469, 2
        %s474 = smul.addr %s471, 3
        %s475 = sadd.s32 %s473, %s474
        %s476 = smul.addr %s475, 8
        %s477 = scalar_lea.vmem %s1, %s476
        %s478 = smul.u32 3, %s30
      $region72: #{video_transformer_forward.7} parent=63 // pred_fallthru
        _
    $region64: #{video_transformer_forward.7} parent=5 // pred_fallthru
      _
    %p479 = scmp.le.s32.totalorder 1, %s22
    %p480 = scmp.lt.s32.totalorder %s22, 3
    %p481 = pnand %p479, %p480
    %p482 = pneg %p481
    // Predicated region
    $region73: #{video_transformer_forward.7} parent=5 // pred_check
      _
    $region74: #{video_transformer_forward.7} parent=5 // pred_check_branch
      %484 = sbr.rel (%p481) target = $region76
    $region75: #{video_transformer_forward.7} parent=5 // pred_region
      %s485 = ssub.s32 %s22, 1
      %s486 = smul.u32 3, %s32
      %p487 = scmp.lt.s32.totalorder %s31, 1
      %s488 = scalar_select %p487, %s31, 1
      %p489 = scmp.lt.s32.totalorder %s486, 2
      %s490 = scalar_select %p489, %s486, 2
      %s491 = smul.addr %s488, 3
      %s492 = sadd.s32 %s490, %s491
      %s493 = smul.addr %s492, 8
      %s494 = scalar_lea.vmem %s0, %s493
      %p495 = pneg %p62
      %p496 = pneg %p59
      %s497 = smul.u32 3, %s32
      %p498 = scmp.lt.s32.totalorder %s31, 1
      %s499 = scalar_select %p498, %s31, 1
      %p500 = scmp.lt.s32.totalorder %s497, 2
      %s501 = scalar_select %p500, %s497, 2
      %s502 = smul.addr %s499, 3
      %s503 = sadd.s32 %s501, %s502
      %s504 = smul.addr %s503, 8
      %s505 = scalar_lea.vmem %s1, %s504
      %p506 = pneg %p90
      %p507 = pneg %p87
      %p508 = pneg %p111
      %p509 = pneg %p108
      %p510 = pneg %p132
      %p511 = pneg %p129
      %p512 = pneg %p153
      %p513 = pneg %p150
      %p514 = pneg %p174
      %p515 = pneg %p171
      %p516 = pneg %p195
      %p517 = pneg %p192
      %p518 = pneg %p216
      %p519 = pneg %p213
      %p520 = pneg %p237
      %p521 = pneg %p234
      %p522 = pneg %p258
      %p523 = pneg %p255
      %p524 = pneg %p279
      %p525 = pneg %p276
      %p526 = pneg %p300
      %p527 = pneg %p297
      %p528 = pneg %p321
      %p529 = pneg %p318
      %p530 = pneg %p342
      %p531 = pneg %p339
      %p532 = pneg %p370
      %p533 = pneg %p367
      %s534 = smul.u32 3, %s32
      %p535 = scmp.lt.s32.totalorder %s31, 1
      %s536 = scalar_select %p535, %s31, 1
      %p537 = scmp.lt.s32.totalorder %s534, 2
      %s538 = scalar_select %p537, %s534, 2
      %s539 = smul.addr %s536, 3
      %s540 = sadd.s32 %s538, %s539
      %s541 = smul.addr %s540, 8
      %s542 = scalar_lea.vmem %s14, %s541
      %p543 = pneg %p398
      %p544 = pneg %p395
      %s545 = smul.u32 3, %s32
      %p546 = scmp.lt.s32.totalorder %s31, 1
      %s547 = scalar_select %p546, %s31, 1
      %p548 = scmp.lt.s32.totalorder %s545, 2
      %s549 = scalar_select %p548, %s545, 2
      %s550 = smul.addr %s547, 3
      %s551 = sadd.s32 %s549, %s550
      %s552 = smul.addr %s551, 8
      %s553 = scalar_lea.vmem %s15, %s552
      %s554 = smul.u32 3, %s32
      %p555 = scmp.lt.s32.totalorder %s31, 1
      %s556 = scalar_select %p555, %s31, 1
      %p557 = scmp.lt.s32.totalorder %s554, 2
      %s558 = scalar_select %p557, %s554, 2
      %s559 = smul.addr %s556, 3
      %s560 = sadd.s32 %s558, %s559
      %s561 = smul.addr %s560, 8
      %s562 = scalar_lea.vmem %s0, %s561
      %s563 = smul.u32 3, %s32
      %s564 = smul.u32 3, %s32
      %p565 = scmp.lt.s32.totalorder %s31, 1
      %s566 = scalar_select %p565, %s31, 1
      %p567 = scmp.lt.s32.totalorder %s564, 2
      %s568 = scalar_select %p567, %s564, 2
      %s569 = smul.addr %s566, 3
      %s570 = sadd.s32 %s568, %s569
      %s571 = smul.addr %s570, 8
      %s572 = scalar_lea.vmem %s1, %s571
      %s573 = smul.u32 3, %s32
      %s574 = smul.u32 3, %s32
      %p575 = scmp.lt.s32.totalorder %s31, 1
      %s576 = scalar_select %p575, %s31, 1
      %p577 = scmp.lt.s32.totalorder %s574, 2
      %s578 = scalar_select %p577, %s574, 2
      %s579 = smul.addr %s576, 3
      %s580 = sadd.s32 %s578, %s579
      %s581 = smul.addr %s580, 8
      %s582 = scalar_lea.vmem %s14, %s581
      %s583 = smul.u32 3, %s32
      %s584 = smul.u32 3, %s32
      %p585 = scmp.lt.s32.totalorder %s31, 1
      %s586 = scalar_select %p585, %s31, 1
      %p587 = scmp.lt.s32.totalorder %s584, 2
      %s588 = scalar_select %p587, %s584, 2
      %s589 = smul.addr %s586, 3
      %s590 = sadd.s32 %s588, %s589
      %s591 = smul.addr %s590, 8
      %s592 = scalar_lea.vmem %s15, %s591
      %s593 = smul.u32 3, %s32
      %v595 = vld [vmem:[%s562] sm:$0xff]
      %v596 = vld [vmem:[%s562 + $0x8] sm:$0xff]
      %v597 = vld [vmem:[%s562 + $0x10] sm:$0xf]
      %v598 = vld [vmem:[%s572] sm:$0xff]
      %v599 = vld [vmem:[%s572 + $0x8] sm:$0xff]
      %v600 = vld [vmem:[%s572 + $0x10] sm:$0xf]
      %v601 = vld [vmem:[%s2] sm:$0x1]
      %v602 = vld [vmem:[%s3] sm:$0x1]
      %vm603 = vcmask 261120
      %v604 = vsel %vm603, %v595, 0.0
      %605 = vadd.xlane.f32.xlu0 %v604
      %v606 = vpop.xlane.xlu0 %605
      %v607 = vsel %vm603, %v596, 0.0
      %608 = vadd.xlane.f32.xlu0 %v607
      %v609 = vpop.xlane.xlu0 %608
      %vm610 = vcmask 257024
      %v611 = vsel %vm610, %v597, 0.0
      %612 = vadd.xlane.f32.xlu0 %v611
      %v613 = vpop.xlane.xlu0 %612
      %v614 = vrcp.pop 32.0
      %v615 = vmul.f32 32.0, %v614
      %v616 = vsub.f32 1.0, %v615
      %v617 = vmul.f32 %v614, %v616
      %v618 = vadd.f32 %v614, %v617
      %vm619 = vweird.f32 %v614
      %v620 = vsel %vm619, %v614, %v618
      %v621 = vmul.f32 %v606, %v620
      %v622 = vmul.f32 %v609, %v620
      %v623 = vmul.f32 %v613, %v620
      %v624 = vsub.f32 %v595, %v621
      %v625 = vsub.f32 %v596, %v622
      %v626 = vsub.f32 %v597, %v623
      %v627 = vmul.f32 %v624, %v624
      %v628 = vmul.f32 %v625, %v625
      %v629 = vmul.f32 %v626, %v626
      %v630 = vsel %vm603, %v627, 0.0
      %631 = vadd.xlane.f32.xlu0 %v630
      %v632 = vpop.xlane.xlu0 %631
      %v633 = vsel %vm603, %v628, 0.0
      %634 = vadd.xlane.f32.xlu0 %v633
      %v635 = vpop.xlane.xlu0 %634
      %v636 = vsel %vm610, %v629, 0.0
      %637 = vadd.xlane.f32.xlu0 %v636
      %v638 = vpop.xlane.xlu0 %637
      %v639 = vmul.f32 %v632, %v620
      %v640 = vmul.f32 %v635, %v620
      %v641 = vmul.f32 %v638, %v620
      %v642 = vadd.f32 %v639, 1e-05
      %v643 = vadd.f32 %v640, 1e-05
      %v644 = vadd.f32 %v641, 1e-05
      %v645 = vrsqrt.pop %v642
      %v646 = vmul.f32 %v645, %v642
      %v647 = vmul.f32 %v646, %v645
      %v648 = vmul.f32 0.5, %v647
      %v649 = vsub.f32 1.5, %v648
      %v650 = vmul.f32 %v645, %v649
      %vm651 = vweird.f32 %v642
      %vm652 = vweird.f32 %v645
      %vm653 = vmor %vm651, %vm652
      %v654 = vsel %vm653, %v645, %v650
      %v655 = vrsqrt.pop %v643
      %v656 = vmul.f32 %v655, %v643
      %v657 = vmul.f32 %v656, %v655
      %v658 = vmul.f32 0.5, %v657
      %v659 = vsub.f32 1.5, %v658
      %v660 = vmul.f32 %v655, %v659
      %vm661 = vweird.f32 %v643
      %vm662 = vweird.f32 %v655
      %vm663 = vmor %vm661, %vm662
      %v664 = vsel %vm663, %v655, %v660
      %v665 = vrsqrt.pop %v644
      %v666 = vmul.f32 %v665, %v644
      %v667 = vmul.f32 %v666, %v665
      %v668 = vmul.f32 0.5, %v667
      %v669 = vsub.f32 1.5, %v668
      %v670 = vmul.f32 %v665, %v669
      %vm671 = vweird.f32 %v644
      %vm672 = vweird.f32 %v665
      %vm673 = vmor %vm671, %vm672
      %v674 = vsel %vm673, %v665, %v670
      %v675 = vmul.f32 %v624, %v654
      %v676 = vmul.f32 %v625, %v664
      %v677 = vmul.f32 %v626, %v674
      %v679 = vperm.slane %v601, 0
      %v681 = vmul.f32 %v675, %v679
      %v682 = vmul.f32 %v676, %v679
      %v683 = vmul.f32 %v677, %v679
      %v685 = vperm.slane %v602, 0
      %v687 = vadd.f32 %v681, %v685
      %v688 = vadd.f32 %v682, %v685
      %v689 = vadd.f32 %v683, %v685
      %v690 = vpack.c.bf16 %v688, %v687
      %v691 = vpack.c.bf16 %v689, %v689
      %v692 = vld [vmem:[%s4] sm:$0x1]
      %v693 = vld [vmem:[%s5] sm:$0x1]
      %v694 = vsel %vm603, %v598, 0.0
      %695 = vadd.xlane.f32.xlu0 %v694
      %v696 = vpop.xlane.xlu0 %695
      %v697 = vsel %vm603, %v599, 0.0
      %698 = vadd.xlane.f32.xlu0 %v697
      %v699 = vpop.xlane.xlu0 %698
      %v700 = vsel %vm610, %v600, 0.0
      %701 = vadd.xlane.f32.xlu0 %v700
      %v702 = vpop.xlane.xlu0 %701
      %v703 = vmul.f32 %v696, %v620
      %v704 = vmul.f32 %v699, %v620
      %v705 = vmul.f32 %v702, %v620
      %v706 = vsub.f32 %v598, %v703
      %v707 = vsub.f32 %v599, %v704
      %v708 = vsub.f32 %v600, %v705
      %v709 = vmul.f32 %v706, %v706
      %v710 = vmul.f32 %v707, %v707
      %v711 = vmul.f32 %v708, %v708
      %v712 = vsel %vm603, %v709, 0.0
      %713 = vadd.xlane.f32.xlu0 %v712
      %v714 = vpop.xlane.xlu0 %713
      %v715 = vsel %vm603, %v710, 0.0
      %716 = vadd.xlane.f32.xlu0 %v715
      %v717 = vpop.xlane.xlu0 %716
      %v718 = vsel %vm610, %v711, 0.0
      %719 = vadd.xlane.f32.xlu0 %v718
      %v720 = vpop.xlane.xlu0 %719
      %v721 = vmul.f32 %v714, %v620
      %v722 = vmul.f32 %v717, %v620
      %v723 = vmul.f32 %v720, %v620
      %v724 = vadd.f32 %v721, 1e-05
      %v725 = vadd.f32 %v722, 1e-05
      %v726 = vadd.f32 %v723, 1e-05
      %v727 = vrsqrt.pop %v724
      %v728 = vmul.f32 %v727, %v724
      %v729 = vmul.f32 %v728, %v727
      %v730 = vmul.f32 0.5, %v729
      %v731 = vsub.f32 1.5, %v730
      %v732 = vmul.f32 %v727, %v731
      %vm733 = vweird.f32 %v724
      %vm734 = vweird.f32 %v727
      %vm735 = vmor %vm733, %vm734
      %v736 = vsel %vm735, %v727, %v732
      %v737 = vrsqrt.pop %v725
      %v738 = vmul.f32 %v737, %v725
      %v739 = vmul.f32 %v738, %v737
      %v740 = vmul.f32 0.5, %v739
      %v741 = vsub.f32 1.5, %v740
      %v742 = vmul.f32 %v737, %v741
      %vm743 = vweird.f32 %v725
      %vm744 = vweird.f32 %v737
      %vm745 = vmor %vm743, %vm744
      %v746 = vsel %vm745, %v737, %v742
      %v747 = vrsqrt.pop %v726
      %v748 = vmul.f32 %v747, %v726
      %v749 = vmul.f32 %v748, %v747
      %v750 = vmul.f32 0.5, %v749
      %v751 = vsub.f32 1.5, %v750
      %v752 = vmul.f32 %v747, %v751
      %vm753 = vweird.f32 %v726
      %vm754 = vweird.f32 %v747
      %vm755 = vmor %vm753, %vm754
      %v756 = vsel %vm755, %v747, %v752
      %v757 = vmul.f32 %v706, %v736
      %v758 = vmul.f32 %v707, %v746
      %v759 = vmul.f32 %v708, %v756
      %v761 = vperm.slane %v692, 0
      %v763 = vmul.f32 %v757, %v761
      %v764 = vmul.f32 %v758, %v761
      %v765 = vmul.f32 %v759, %v761
      %v767 = vperm.slane %v693, 0
      %v769 = vadd.f32 %v763, %v767
      %v770 = vadd.f32 %v764, %v767
      %v771 = vadd.f32 %v765, %v767
      %v772 = vpack.c.bf16 %v770, %v769
      %v773 = vpack.c.bf16 %v771, %v771
      %v774 = vld [vmem:[%s6] sm:$0xf]
      %v775 = vld [vmem:[%s6 + $0x4] sm:$0xf]
      %v776 = vld [vmem:[%s6 + $0x8] sm:$0xf]
      %v777 = vld [vmem:[%s6 + $0xc] sm:$0xf]
      %v778 = vld [vmem:[%s7] sm:$0x1]
      %v780 = vperm.slane %v778, 0
      %v786 = vunpack.c.l.b16 %v774
      %v787 = vunpack.c.l.b16 %v775
      %v788 = vunpack.c.l.b16 %v776
      %v789 = vunpack.c.l.b16 %v777
      %v790 = vpack.c.b16 %v787, %v786
      %v791 = vpack.c.b16 %v789, %v788
      %v795 = vsel %vm603, %v690, 0
      %v798 = vsel %vm603, %v691, 0
      %800 = vmatpush.bf16.msra.mxu0 0
      %801 = vmatpush.bf16.msra.mxu0 0
      %802 = vmatpush.bf16.msra.mxu0 0
      %803 = vmatpush.bf16.msra.mxu0 0
      %804 = vmatpush.bf16.msra.mxu0 0
      %805 = vmatpush.bf16.msra.mxu0 0
      %806 = vmatpush.bf16.msra.mxu0 %v791
      %807 = vmatpush.bf16.msra.mxu0 %v790
      %808 = vmatmul.bf16.gmra.mxu0 %v795
      %v809 = vpop.f32.mrf.mxu0
      %v810 = vadd.f32 %v780, %v809
      %v811 = vpop.f32.mrf.mxu0
      %v812 = vadd.f32 %v780, %v811
      %813 = vmatmul.bf16.gmra.mxu0 %v798
      %v814 = vpop.f32.mrf.mxu0
      %v815 = vadd.f32 %v780, %v814
      %v816 = vpop.f32.mrf.mxu0
      %817 = vdwg.mxu0
      %v818 = vpack.c.bf16 %v810, %v810
      %v819 = vpack.c.bf16 %v812, %v812
      %v820 = vpack.c.bf16 %v815, %v815
      %v824 = vrot.slane %v818, 2
      %v825 = vrot.slane %v819, 2
      %v826 = vrot.slane %v820, 2
      %vm827 = vcmask 1041408
      %v830 = vsel %vm827, %v818, %v824
      %vm831 = vcmask 1043458
      %v832 = vsel %vm831, %v818, %v824
      %v834 = vrot.slane %v832, 2
      %v837 = vsel %vm827, %v819, %v825
      %v838 = vsel %vm831, %v819, %v825
      %v840 = vrot.slane %v838, 2
      %v843 = vsel %vm827, %v820, %v826
      %v844 = vld [vmem:[%s8] sm:$0xf]
      %v845 = vld [vmem:[%s8 + $0x4] sm:$0xf]
      %v846 = vld [vmem:[%s8 + $0x8] sm:$0xf]
      %v847 = vld [vmem:[%s8 + $0xc] sm:$0xf]
      %v848 = vld [vmem:[%s9] sm:$0x1]
      %v850 = vperm.slane %v848, 0
      %v856 = vunpack.c.l.b16 %v844
      %v857 = vunpack.c.l.b16 %v845
      %v858 = vunpack.c.l.b16 %v846
      %v859 = vunpack.c.l.b16 %v847
      %v860 = vpack.c.b16 %v857, %v856
      %v861 = vpack.c.b16 %v859, %v858
      %v865 = vsel %vm603, %v772, 0
      %v868 = vsel %vm603, %v773, 0
      %870 = vmatpush.bf16.msra.mxu0 0
      %871 = vmatpush.bf16.msra.mxu0 0
      %872 = vmatpush.bf16.msra.mxu0 0
      %873 = vmatpush.bf16.msra.mxu0 0
      %874 = vmatpush.bf16.msra.mxu0 0
      %875 = vmatpush.bf16.msra.mxu0 0
      %876 = vmatpush.bf16.msra.mxu0 %v861
      %877 = vmatpush.bf16.msra.mxu0 %v860
      %878 = vmatmul.bf16.gmra.mxu0 %v865
      %v879 = vpop.f32.mrf.mxu0
      %v880 = vadd.f32 %v850, %v879
      %v881 = vpop.f32.mrf.mxu0
      %v882 = vadd.f32 %v850, %v881
      %883 = vmatmul.bf16.gmra.mxu0 %v868
      %v884 = vpop.f32.mrf.mxu0
      %v885 = vadd.f32 %v850, %v884
      %v886 = vpop.f32.mrf.mxu0
      %887 = vdwg.mxu0
      %v888 = vpack.c.bf16 %v880, %v880
      %v889 = vpack.c.bf16 %v882, %v882
      %v890 = vpack.c.bf16 %v885, %v885
      %v894 = vrot.slane %v888, 2
      %v895 = vrot.slane %v889, 2
      %v896 = vrot.slane %v890, 2
      %v899 = vsel %vm827, %v888, %v894
      %v900 = vsel %vm831, %v888, %v894
      %v902 = vrot.slane %v900, 2
      %v905 = vsel %vm827, %v889, %v895
      %v906 = vsel %vm831, %v889, %v895
      %v908 = vrot.slane %v906, 2
      %v911 = vsel %vm827, %v890, %v896
      %912 = vst [vmem:[#allocation1] ss:$4 sm:$0xff] %v899
      %v913 = vld.sshfl [vmem:[#allocation1] sm:$0xff pattern:$0x73625140]
      %915 = vrot.lane.b32.xlu0 %v913, 96
      %v916 = vpop.permute.xlu0 %915
      %vm917 = vcmask 64512
      %v918 = vsel %vm917, %v899, 0
      %v921 = vsel %vm917, %v916, 0
      %923 = vmatpush.bf16.xpose.msra.mxu0 0
      %924 = vmatpush.bf16.xpose.msra.mxu0 0
      %925 = vmatpush.bf16.xpose.msra.mxu0 0
      %926 = vmatpush.bf16.xpose.msra.mxu0 0
      %927 = vmatpush.bf16.xpose.msra.mxu0 0
      %928 = vmatpush.bf16.xpose.msra.mxu0 0
      %929 = vmatpush.bf16.xpose.msra.mxu0 0
      %930 = vmatpush.bf16.xpose.msra.mxu0 %v921
      %931 = vmatmul.bf16.gmra.mxu0 %v918
      %v932 = vpop.f32.mrf.mxu0
      %v933 = vadd.f32 0.0, %v932
      %v934 = vpop.f32.mrf.mxu0
      %935 = vdwg.mxu0
      %937 = vst [vmem:[#allocation1] ss:$4 sm:$0xff] %v902
      %v938 = vld.sshfl [vmem:[#allocation1] sm:$0xff pattern:$0x73625140]
      %940 = vrot.lane.b32.xlu0 %v938, 96
      %v941 = vpop.permute.xlu0 %940
      %v942 = vsel %vm917, %v902, 0
      %v945 = vsel %vm917, %v941, 0
      %947 = vmatpush.bf16.xpose.msra.mxu0 0
      %948 = vmatpush.bf16.xpose.msra.mxu0 0
      %949 = vmatpush.bf16.xpose.msra.mxu0 0
      %950 = vmatpush.bf16.xpose.msra.mxu0 0
      %951 = vmatpush.bf16.xpose.msra.mxu0 0
      %952 = vmatpush.bf16.xpose.msra.mxu0 0
      %953 = vmatpush.bf16.xpose.msra.mxu0 0
      %954 = vmatpush.bf16.xpose.msra.mxu0 %v945
      %955 = vmatmul.bf16.gmra.mxu0 %v942
      %v956 = vpop.f32.mrf.mxu0
      %v957 = vadd.f32 0.0, %v956
      %v958 = vpop.f32.mrf.mxu0
      %959 = vdwg.mxu0
      %960 = vst [vmem:[#allocation1] ss:$4 sm:$0xff] %v905
      %v961 = vld.sshfl [vmem:[#allocation1] sm:$0xff pattern:$0x73625140]
      %963 = vrot.lane.b32.xlu0 %v961, 96
      %v964 = vpop.permute.xlu0 %963
      %v965 = vsel %vm917, %v905, 0
      %v968 = vsel %vm917, %v964, 0
      %970 = vmatpush.bf16.xpose.msra.mxu0 0
      %971 = vmatpush.bf16.xpose.msra.mxu0 0
      %972 = vmatpush.bf16.xpose.msra.mxu0 0
      %973 = vmatpush.bf16.xpose.msra.mxu0 0
      %974 = vmatpush.bf16.xpose.msra.mxu0 0
      %975 = vmatpush.bf16.xpose.msra.mxu0 0
      %976 = vmatpush.bf16.xpose.msra.mxu0 0
      %977 = vmatpush.bf16.xpose.msra.mxu0 %v968
      %978 = vmatmul.bf16.gmra.mxu0 %v965
      %v979 = vpop.f32.mrf.mxu0
      %v980 = vadd.f32 0.0, %v979
      %v981 = vpop.f32.mrf.mxu0
      %982 = vdwg.mxu0
      %984 = vst [vmem:[#allocation1] ss:$4 sm:$0xff] %v908
      %v985 = vld.sshfl [vmem:[#allocation1] sm:$0xff pattern:$0x73625140]
      %987 = vrot.lane.b32.xlu0 %v985, 96
      %v988 = vpop.permute.xlu0 %987
      %v989 = vsel %vm917, %v908, 0
      %v992 = vsel %vm917, %v988, 0
      %994 = vmatpush.bf16.xpose.msra.mxu0 0
      %995 = vmatpush.bf16.xpose.msra.mxu0 0
      %996 = vmatpush.bf16.xpose.msra.mxu0 0
      %997 = vmatpush.bf16.xpose.msra.mxu0 0
      %998 = vmatpush.bf16.xpose.msra.mxu0 0
      %999 = vmatpush.bf16.xpose.msra.mxu0 0
      %1000 = vmatpush.bf16.xpose.msra.mxu0 0
      %1001 = vmatpush.bf16.xpose.msra.mxu0 %v992
      %1002 = vmatmul.bf16.gmra.mxu0 %v989
      %v1003 = vpop.f32.mrf.mxu0
      %v1004 = vadd.f32 0.0, %v1003
      %v1005 = vpop.f32.mrf.mxu0
      %1006 = vdwg.mxu0
      %1007 = vst [vmem:[#allocation1] ss:$4 sm:$0xff] %v911
      %v1008 = vld.sshfl [vmem:[#allocation1] sm:$0xff pattern:$0x73625140]
      %1010 = vrot.lane.b32.xlu0 %v1008, 96
      %v1011 = vpop.permute.xlu0 %1010
      %v1012 = vsel %vm917, %v911, 0
      %v1015 = vsel %vm917, %v1011, 0
      %1017 = vmatpush.bf16.xpose.msra.mxu0 0
      %1018 = vmatpush.bf16.xpose.msra.mxu0 0
      %1019 = vmatpush.bf16.xpose.msra.mxu0 0
      %1020 = vmatpush.bf16.xpose.msra.mxu0 0
      %1021 = vmatpush.bf16.xpose.msra.mxu0 0
      %1022 = vmatpush.bf16.xpose.msra.mxu0 0
      %1023 = vmatpush.bf16.xpose.msra.mxu0 0
      %1024 = vmatpush.bf16.xpose.msra.mxu0 %v1015
      %1025 = vmatmul.bf16.gmra.mxu0 %v1012
      %v1026 = vpop.f32.mrf.mxu0
      %v1027 = vadd.f32 0.0, %v1026
      %v1028 = vpop.f32.mrf.mxu0
      %1029 = vdwg.mxu0
      %1030 = vst [vmem:[#allocation1] ss:$4 sm:$0xff] %v830
      %v1031 = vld.sshfl [vmem:[#allocation1] sm:$0xff pattern:$0x73625140]
      %1033 = vrot.lane.b32.xlu0 %v1031, 96
      %v1034 = vpop.permute.xlu0 %1033
      %v1035 = vsel %vm917, %v830, 0
      %v1038 = vsel %vm917, %v1034, 0
      %1040 = vmatpush.bf16.xpose.msra.mxu0 0
      %1041 = vmatpush.bf16.xpose.msra.mxu0 0
      %1042 = vmatpush.bf16.xpose.msra.mxu0 0
      %1043 = vmatpush.bf16.xpose.msra.mxu0 0
      %1044 = vmatpush.bf16.xpose.msra.mxu0 0
      %1045 = vmatpush.bf16.xpose.msra.mxu0 0
      %1046 = vmatpush.bf16.xpose.msra.mxu0 0
      %1047 = vmatpush.bf16.xpose.msra.mxu0 %v1038
      %1048 = vmatmul.bf16.gmra.mxu0 %v1035
      %v1049 = vpop.f32.mrf.mxu0
      %v1050 = vadd.f32 %v933, %v1049
      %v1051 = vpop.f32.mrf.mxu0
      %1052 = vdwg.mxu0
      %1054 = vst [vmem:[#allocation1] ss:$4 sm:$0xff] %v834
      %v1055 = vld.sshfl [vmem:[#allocation1] sm:$0xff pattern:$0x73625140]
      %1057 = vrot.lane.b32.xlu0 %v1055, 96
      %v1058 = vpop.permute.xlu0 %1057
      %v1059 = vsel %vm917, %v834, 0
      %v1062 = vsel %vm917, %v1058, 0
      %1064 = vmatpush.bf16.xpose.msra.mxu0 0
      %1065 = vmatpush.bf16.xpose.msra.mxu0 0
      %1066 = vmatpush.bf16.xpose.msra.mxu0 0
      %1067 = vmatpush.bf16.xpose.msra.mxu0 0
      %1068 = vmatpush.bf16.xpose.msra.mxu0 0
      %1069 = vmatpush.bf16.xpose.msra.mxu0 0
      %1070 = vmatpush.bf16.xpose.msra.mxu0 0
      %1071 = vmatpush.bf16.xpose.msra.mxu0 %v1062
      %1072 = vmatmul.bf16.gmra.mxu0 %v1059
      %v1073 = vpop.f32.mrf.mxu0
      %v1074 = vadd.f32 %v957, %v1073
      %v1075 = vpop.f32.mrf.mxu0
      %1076 = vdwg.mxu0
      %1077 = vst [vmem:[#allocation1] ss:$4 sm:$0xff] %v837
      %v1078 = vld.sshfl [vmem:[#allocation1] sm:$0xff pattern:$0x73625140]
      %1080 = vrot.lane.b32.xlu0 %v1078, 96
      %v1081 = vpop.permute.xlu0 %1080
      %v1082 = vsel %vm917, %v837, 0
      %v1085 = vsel %vm917, %v1081, 0
      %1087 = vmatpush.bf16.xpose.msra.mxu0 0
      %1088 = vmatpush.bf16.xpose.msra.mxu0 0
      %1089 = vmatpush.bf16.xpose.msra.mxu0 0
      %1090 = vmatpush.bf16.xpose.msra.mxu0 0
      %1091 = vmatpush.bf16.xpose.msra.mxu0 0
      %1092 = vmatpush.bf16.xpose.msra.mxu0 0
      %1093 = vmatpush.bf16.xpose.msra.mxu0 0
      %1094 = vmatpush.bf16.xpose.msra.mxu0 %v1085
      %1095 = vmatmul.bf16.gmra.mxu0 %v1082
      %v1096 = vpop.f32.mrf.mxu0
      %v1097 = vadd.f32 %v980, %v1096
      %v1098 = vpop.f32.mrf.mxu0
      %1099 = vdwg.mxu0
      %1101 = vst [vmem:[#allocation1] ss:$4 sm:$0xff] %v840
      %v1102 = vld.sshfl [vmem:[#allocation1] sm:$0xff pattern:$0x73625140]
      %1104 = vrot.lane.b32.xlu0 %v1102, 96
      %v1105 = vpop.permute.xlu0 %1104
      %v1106 = vsel %vm917, %v840, 0
      %v1109 = vsel %vm917, %v1105, 0
      %1111 = vmatpush.bf16.xpose.msra.mxu0 0
      %1112 = vmatpush.bf16.xpose.msra.mxu0 0
      %1113 = vmatpush.bf16.xpose.msra.mxu0 0
      %1114 = vmatpush.bf16.xpose.msra.mxu0 0
      %1115 = vmatpush.bf16.xpose.msra.mxu0 0
      %1116 = vmatpush.bf16.xpose.msra.mxu0 0
      %1117 = vmatpush.bf16.xpose.msra.mxu0 0
      %1118 = vmatpush.bf16.xpose.msra.mxu0 %v1109
      %1119 = vmatmul.bf16.gmra.mxu0 %v1106
      %v1120 = vpop.f32.mrf.mxu0
      %v1121 = vadd.f32 %v1004, %v1120
      %v1122 = vpop.f32.mrf.mxu0
      %1123 = vdwg.mxu0
      %1124 = vst [vmem:[#allocation1] ss:$4 sm:$0xff] %v843
      %v1125 = vld.sshfl [vmem:[#allocation1] sm:$0xff pattern:$0x73625140]
      %1127 = vrot.lane.b32.xlu0 %v1125, 96
      %v1128 = vpop.permute.xlu0 %1127
      %v1129 = vsel %vm917, %v843, 0
      %v1132 = vsel %vm917, %v1128, 0
      %1134 = vmatpush.bf16.xpose.msra.mxu0 0
      %1135 = vmatpush.bf16.xpose.msra.mxu0 0
      %1136 = vmatpush.bf16.xpose.msra.mxu0 0
      %1137 = vmatpush.bf16.xpose.msra.mxu0 0
      %1138 = vmatpush.bf16.xpose.msra.mxu0 0
      %1139 = vmatpush.bf16.xpose.msra.mxu0 0
      %1140 = vmatpush.bf16.xpose.msra.mxu0 0
      %1141 = vmatpush.bf16.xpose.msra.mxu0 %v1132
      %1142 = vmatmul.bf16.gmra.mxu0 %v1129
      %v1143 = vpop.f32.mrf.mxu0
      %v1144 = vadd.f32 %v1027, %v1143
      %v1145 = vpop.f32.mrf.mxu0
      %1146 = vdwg.mxu0
      %vm1147 = vcmask 27648
      %v1148 = vsel %vm1147, %v1050, -inf
      %1149 = vmax.xlane.f32.xlu0 %v1148
      %v1150 = vpop.xlane.xlu0 %1149
      %v1151 = vsel %vm1147, %v1074, -inf
      %1152 = vmax.xlane.f32.xlu0 %v1151
      %v1153 = vpop.xlane.xlu0 %1152
      %v1154 = vsel %vm1147, %v1097, -inf
      %1155 = vmax.xlane.f32.xlu0 %v1154
      %v1156 = vpop.xlane.xlu0 %1155
      %v1157 = vsel %vm1147, %v1121, -inf
      %1158 = vmax.xlane.f32.xlu0 %v1157
      %v1159 = vpop.xlane.xlu0 %1158
      %v1160 = vsel %vm1147, %v1144, -inf
      %1161 = vmax.xlane.f32.xlu0 %v1160
      %v1162 = vpop.xlane.xlu0 %1161
      %v1163 = vsub.f32 %v1050, %v1150
      %v1164 = vsub.f32 %v1074, %v1153
      %v1165 = vsub.f32 %v1097, %v1156
      %v1166 = vsub.f32 %v1121, %v1159
      %v1167 = vsub.f32 %v1144, %v1162
      %v1168 = vmul.f32 %v1163, 1.442695
      %v1169 = vpow.pop %v1168
      %v1170 = vmul.f32 %v1164, 1.442695
      %v1171 = vpow.pop %v1170
      %v1172 = vmul.f32 %v1165, 1.442695
      %v1173 = vpow.pop %v1172
      %v1174 = vmul.f32 %v1166, 1.442695
      %v1175 = vpow.pop %v1174
      %v1176 = vmul.f32 %v1167, 1.442695
      %v1177 = vpow.pop %v1176
      %v1178 = vsel %vm1147, %v1169, 0.0
      %1179 = vadd.xlane.f32.xlu0 %v1178
      %v1180 = vpop.xlane.xlu0 %1179
      %v1181 = vsel %vm1147, %v1171, 0.0
      %1182 = vadd.xlane.f32.xlu0 %v1181
      %v1183 = vpop.xlane.xlu0 %1182
      %v1184 = vsel %vm1147, %v1173, 0.0
      %1185 = vadd.xlane.f32.xlu0 %v1184
      %v1186 = vpop.xlane.xlu0 %1185
      %v1187 = vsel %vm1147, %v1175, 0.0
      %1188 = vadd.xlane.f32.xlu0 %v1187
      %v1189 = vpop.xlane.xlu0 %1188
      %v1190 = vsel %vm1147, %v1177, 0.0
      %1191 = vadd.xlane.f32.xlu0 %v1190
      %v1192 = vpop.xlane.xlu0 %1191
      %v1193 = vrcp.pop %v1180
      %v1194 = vrcp.pop %v1183
      %v1195 = vrcp.pop %v1186
      %v1196 = vrcp.pop %v1189
      %v1197 = vrcp.pop %v1192
      %v1198 = vmul.f32 %v1169, %v1193
      %v1199 = vmul.f32 %v1171, %v1194
      %v1200 = vmul.f32 %v1173, %v1195
      %v1201 = vmul.f32 %v1175, %v1196
      %v1202 = vmul.f32 %v1177, %v1197
      %v1203 = vpack.c.bf16 %v1198, %v1198
      %v1204 = vpack.c.bf16 %v1199, %v1199
      %v1205 = vpack.c.bf16 %v1200, %v1200
      %v1206 = vpack.c.bf16 %v1201, %v1201
      %v1207 = vpack.c.bf16 %v1202, %v1202
      %1208 = vst [vmem:[#allocation1] ss:$4 sm:$0xff] %v830
      %v1209 = vld.sshfl [vmem:[#allocation1] sm:$0xff pattern:$0x73625140]
      %1211 = vrot.lane.b32.xlu0 %v1209, 64
      %v1212 = vpop.permute.xlu0 %1211
      %vm1213 = vcmask 31744
      %v1215 = vsel %vm1213, %v1203, 0
      %v1218 = vsel %vm827, %v1212, 0
      %1220 = vmatpush.bf16.msra.mxu0 0
      %1221 = vmatpush.bf16.msra.mxu0 0
      %1222 = vmatpush.bf16.msra.mxu0 0
      %1223 = vmatpush.bf16.msra.mxu0 0
      %1224 = vmatpush.bf16.msra.mxu0 0
      %1225 = vmatpush.bf16.msra.mxu0 0
      %1226 = vmatpush.bf16.msra.mxu0 0
      %1227 = vmatpush.bf16.msra.mxu0 %v1218
      %1228 = vmatmul.bf16.gmra.mxu0 %v1215
      %v1229 = vpop.f32.mrf.mxu0
      %v1230 = vadd.f32 0.0, %v1229
      %v1231 = vpop.f32.mrf.mxu0
      %1232 = vdwg.mxu0
      %1233 = vst [vmem:[#allocation1] ss:$4 sm:$0xff] %v834
      %v1234 = vld.sshfl [vmem:[#allocation1] sm:$0xff pattern:$0x73625140]
      %1236 = vrot.lane.b32.xlu0 %v1234, 64
      %v1237 = vpop.permute.xlu0 %1236
      %v1239 = vsel %vm1213, %v1204, 0
      %v1242 = vsel %vm827, %v1237, 0
      %1244 = vmatpush.bf16.msra.mxu0 0
      %1245 = vmatpush.bf16.msra.mxu0 0
      %1246 = vmatpush.bf16.msra.mxu0 0
      %1247 = vmatpush.bf16.msra.mxu0 0
      %1248 = vmatpush.bf16.msra.mxu0 0
      %1249 = vmatpush.bf16.msra.mxu0 0
      %1250 = vmatpush.bf16.msra.mxu0 0
      %1251 = vmatpush.bf16.msra.mxu0 %v1242
      %1252 = vmatmul.bf16.gmra.mxu0 %v1239
      %v1253 = vpop.f32.mrf.mxu0
      %v1254 = vadd.f32 0.0, %v1253
      %v1255 = vpop.f32.mrf.mxu0
      %1256 = vdwg.mxu0
      %1257 = vst [vmem:[#allocation1] ss:$4 sm:$0xff] %v837
      %v1258 = vld.sshfl [vmem:[#allocation1] sm:$0xff pattern:$0x73625140]
      %1260 = vrot.lane.b32.xlu0 %v1258, 64
      %v1261 = vpop.permute.xlu0 %1260
      %v1263 = vsel %vm1213, %v1205, 0
      %v1266 = vsel %vm827, %v1261, 0
      %1268 = vmatpush.bf16.msra.mxu0 0
      %1269 = vmatpush.bf16.msra.mxu0 0
      %1270 = vmatpush.bf16.msra.mxu0 0
      %1271 = vmatpush.bf16.msra.mxu0 0
      %1272 = vmatpush.bf16.msra.mxu0 0
      %1273 = vmatpush.bf16.msra.mxu0 0
      %1274 = vmatpush.bf16.msra.mxu0 0
      %1275 = vmatpush.bf16.msra.mxu0 %v1266
      %1276 = vmatmul.bf16.gmra.mxu0 %v1263
      %v1277 = vpop.f32.mrf.mxu0
      %v1278 = vadd.f32 0.0, %v1277
      %v1279 = vpop.f32.mrf.mxu0
      %1280 = vdwg.mxu0
      %1281 = vst [vmem:[#allocation1] ss:$4 sm:$0xff] %v840
      %v1282 = vld.sshfl [vmem:[#allocation1] sm:$0xff pattern:$0x73625140]
      %1284 = vrot.lane.b32.xlu0 %v1282, 64
      %v1285 = vpop.permute.xlu0 %1284
      %v1287 = vsel %vm1213, %v1206, 0
      %v1290 = vsel %vm827, %v1285, 0
      %1292 = vmatpush.bf16.msra.mxu0 0
      %1293 = vmatpush.bf16.msra.mxu0 0
      %1294 = vmatpush.bf16.msra.mxu0 0
      %1295 = vmatpush.bf16.msra.mxu0 0
      %1296 = vmatpush.bf16.msra.mxu0 0
      %1297 = vmatpush.bf16.msra.mxu0 0
      %1298 = vmatpush.bf16.msra.mxu0 0
      %1299 = vmatpush.bf16.msra.mxu0 %v1290
      %1300 = vmatmul.bf16.gmra.mxu0 %v1287
      %v1301 = vpop.f32.mrf.mxu0
      %v1302 = vadd.f32 0.0, %v1301
      %v1303 = vpop.f32.mrf.mxu0
      %1304 = vdwg.mxu0
      %1305 = vst [vmem:[#allocation1] ss:$4 sm:$0xff] %v843
      %v1306 = vld.sshfl [vmem:[#allocation1] sm:$0xff pattern:$0x73625140]
      %1308 = vrot.lane.b32.xlu0 %v1306, 64
      %v1309 = vpop.permute.xlu0 %1308
      %v1311 = vsel %vm1213, %v1207, 0
      %v1314 = vsel %vm827, %v1309, 0
      %1316 = vmatpush.bf16.msra.mxu0 0
      %1317 = vmatpush.bf16.msra.mxu0 0
      %1318 = vmatpush.bf16.msra.mxu0 0
      %1319 = vmatpush.bf16.msra.mxu0 0
      %1320 = vmatpush.bf16.msra.mxu0 0
      %1321 = vmatpush.bf16.msra.mxu0 0
      %1322 = vmatpush.bf16.msra.mxu0 0
      %1323 = vmatpush.bf16.msra.mxu0 %v1314
      %1324 = vmatmul.bf16.gmra.mxu0 %v1311
      %v1325 = vpop.f32.mrf.mxu0
      %v1326 = vadd.f32 0.0, %v1325
      %v1327 = vpop.f32.mrf.mxu0
      %1328 = vdwg.mxu0
      %1329 = vst [vmem:[#allocation1] ss:$4 sm:$0xff] %v899
      %v1330 = vld.sshfl [vmem:[#allocation1] sm:$0xff pattern:$0x73625140]
      %1332 = vrot.lane.b32.xlu0 %v1330, 64
      %v1333 = vpop.permute.xlu0 %1332
      %v1335 = vsel %vm827, %v1333, 0
      %1337 = vmatpush.bf16.msra.mxu0 0
      %1338 = vmatpush.bf16.msra.mxu0 0
      %1339 = vmatpush.bf16.msra.mxu0 0
      %1340 = vmatpush.bf16.msra.mxu0 0
      %1341 = vmatpush.bf16.msra.mxu0 0
      %1342 = vmatpush.bf16.msra.mxu0 0
      %1343 = vmatpush.bf16.msra.mxu0 0
      %1344 = vmatpush.bf16.msra.mxu0 %v1335
      %1345 = vmatmul.bf16.gmra.mxu0 %v1215
      %v1346 = vpop.f32.mrf.mxu0
      %v1347 = vadd.f32 0.0, %v1346
      %v1348 = vpop.f32.mrf.mxu0
      %1349 = vdwg.mxu0
      %1350 = vst [vmem:[#allocation1] ss:$4 sm:$0xff] %v902
      %v1351 = vld.sshfl [vmem:[#allocation1] sm:$0xff pattern:$0x73625140]
      %1353 = vrot.lane.b32.xlu0 %v1351, 64
      %v1354 = vpop.permute.xlu0 %1353
      %v1356 = vsel %vm827, %v1354, 0
      %1358 = vmatpush.bf16.msra.mxu0 0
      %1359 = vmatpush.bf16.msra.mxu0 0
      %1360 = vmatpush.bf16.msra.mxu0 0
      %1361 = vmatpush.bf16.msra.mxu0 0
      %1362 = vmatpush.bf16.msra.mxu0 0
      %1363 = vmatpush.bf16.msra.mxu0 0
      %1364 = vmatpush.bf16.msra.mxu0 0
      %1365 = vmatpush.bf16.msra.mxu0 %v1356
      %1366 = vmatmul.bf16.gmra.mxu0 %v1239
      %v1367 = vpop.f32.mrf.mxu0
      %v1368 = vadd.f32 0.0, %v1367
      %v1369 = vpop.f32.mrf.mxu0
      %1370 = vdwg.mxu0
      %1371 = vst [vmem:[#allocation1] ss:$4 sm:$0xff] %v905
      %v1372 = vld.sshfl [vmem:[#allocation1] sm:$0xff pattern:$0x73625140]
      %1374 = vrot.lane.b32.xlu0 %v1372, 64
      %v1375 = vpop.permute.xlu0 %1374
      %v1377 = vsel %vm827, %v1375, 0
      %1379 = vmatpush.bf16.msra.mxu0 0
      %1380 = vmatpush.bf16.msra.mxu0 0
      %1381 = vmatpush.bf16.msra.mxu0 0
      %1382 = vmatpush.bf16.msra.mxu0 0
      %1383 = vmatpush.bf16.msra.mxu0 0
      %1384 = vmatpush.bf16.msra.mxu0 0
      %1385 = vmatpush.bf16.msra.mxu0 0
      %1386 = vmatpush.bf16.msra.mxu0 %v1377
      %1387 = vmatmul.bf16.gmra.mxu0 %v1263
      %v1388 = vpop.f32.mrf.mxu0
      %v1389 = vadd.f32 0.0, %v1388
      %v1390 = vpop.f32.mrf.mxu0
      %1391 = vdwg.mxu0
      %1392 = vst [vmem:[#allocation1] ss:$4 sm:$0xff] %v908
      %v1393 = vld.sshfl [vmem:[#allocation1] sm:$0xff pattern:$0x73625140]
      %1395 = vrot.lane.b32.xlu0 %v1393, 64
      %v1396 = vpop.permute.xlu0 %1395
      %v1398 = vsel %vm827, %v1396, 0
      %1400 = vmatpush.bf16.msra.mxu0 0
      %1401 = vmatpush.bf16.msra.mxu0 0
      %1402 = vmatpush.bf16.msra.mxu0 0
      %1403 = vmatpush.bf16.msra.mxu0 0
      %1404 = vmatpush.bf16.msra.mxu0 0
      %1405 = vmatpush.bf16.msra.mxu0 0
      %1406 = vmatpush.bf16.msra.mxu0 0
      %1407 = vmatpush.bf16.msra.mxu0 %v1398
      %1408 = vmatmul.bf16.gmra.mxu0 %v1287
      %v1409 = vpop.f32.mrf.mxu0
      %v1410 = vadd.f32 0.0, %v1409
      %v1411 = vpop.f32.mrf.mxu0
      %1412 = vdwg.mxu0
      %1413 = vst [vmem:[#allocation1] ss:$4 sm:$0xff] %v911
      %v1414 = vld.sshfl [vmem:[#allocation1] sm:$0xff pattern:$0x73625140]
      %1416 = vrot.lane.b32.xlu0 %v1414, 64
      %v1417 = vpop.permute.xlu0 %1416
      %v1419 = vsel %vm827, %v1417, 0
      %1421 = vmatpush.bf16.msra.mxu0 0
      %1422 = vmatpush.bf16.msra.mxu0 0
      %1423 = vmatpush.bf16.msra.mxu0 0
      %1424 = vmatpush.bf16.msra.mxu0 0
      %1425 = vmatpush.bf16.msra.mxu0 0
      %1426 = vmatpush.bf16.msra.mxu0 0
      %1427 = vmatpush.bf16.msra.mxu0 0
      %1428 = vmatpush.bf16.msra.mxu0 %v1419
      %1429 = vmatmul.bf16.gmra.mxu0 %v1311
      %v1430 = vpop.f32.mrf.mxu0
      %v1431 = vadd.f32 0.0, %v1430
      %v1432 = vpop.f32.mrf.mxu0
      %1433 = vdwg.mxu0
      %1439 = vst [vmem:[#allocation1] ss:$2 sm:$0xff] %v1230
      %s1440 = scalar_lea.vmem [#allocation1], 1
      %1441 = vst [vmem:[%s1440] ss:$2 sm:$0xff] %v1254
      %s1442 = scalar_lea.vmem [#allocation1], 16
      %1443 = vst [vmem:[%s1442] ss:$2 sm:$0xff] %v1278
      %s1444 = scalar_lea.vmem [#allocation1], 17
      %1445 = vst [vmem:[%s1444] ss:$2 sm:$0xff] %v1302
      %s1446 = scalar_lea.vmem [#allocation1], 32
      %1447 = vst [vmem:[%s1446] ss:$2 sm:$0xff] %v1326
      %v1448 = vld.sshfl [vmem:[#allocation1] sm:$0xff pattern:$0x75316420]
      %v1449 = vld.sshfl [vmem:[#allocation1 + $0x10] sm:$0xff pattern:$0x75316420]
      %v1450 = vld.sshfl [vmem:[#allocation1 + $0x20] sm:$0xff pattern:$0x75316420]
      %v1454 = vpack.c.bf16 %v1448, %v1448
      %v1455 = vpack.c.bf16 %v1449, %v1449
      %v1456 = vpack.c.bf16 %v1450, %v1450
      %vm1457 = vcmask 60416
      %1458 = vst.msk [vmem:[#allocation2] sm:$0xf] %vm1457, %v1454
      %1459 = vst.msk [vmem:[#allocation2 + $0x4] sm:$0xf] %vm1457, %v1455
      %vm1460 = vcmask 58368
      %1461 = vst.msk [vmem:[#allocation2 + $0x8] sm:$0x3] %vm1460, %v1456
      %1467 = vst [vmem:[#allocation1] ss:$2 sm:$0xff] %v1347
      %s1468 = scalar_lea.vmem [#allocation1], 1
      %1469 = vst [vmem:[%s1468] ss:$2 sm:$0xff] %v1368
      %s1470 = scalar_lea.vmem [#allocation1], 16
      %1471 = vst [vmem:[%s1470] ss:$2 sm:$0xff] %v1389
      %s1472 = scalar_lea.vmem [#allocation1], 17
      %1473 = vst [vmem:[%s1472] ss:$2 sm:$0xff] %v1410
      %s1474 = scalar_lea.vmem [#allocation1], 32
      %1475 = vst [vmem:[%s1474] ss:$2 sm:$0xff] %v1431
      %v1476 = vld.sshfl [vmem:[#allocation1] sm:$0xff pattern:$0x75316420]
      %v1477 = vld.sshfl [vmem:[#allocation1 + $0x10] sm:$0xff pattern:$0x75316420]
      %v1478 = vld.sshfl [vmem:[#allocation1 + $0x20] sm:$0xff pattern:$0x75316420]
      %v1482 = vpack.c.bf16 %v1476, %v1476
      %v1483 = vpack.c.bf16 %v1477, %v1477
      %v1484 = vpack.c.bf16 %v1478, %v1478
      %1488 = vrot.lane.b32.xlu0 %v1482, 8
      %v1489 = vpop.permute.xlu0 %1488
      %1490 = vrot.lane.b32.xlu0 %v1483, 8
      %v1491 = vpop.permute.xlu0 %1490
      %1492 = vrot.lane.b32.xlu0 %v1484, 8
      %v1493 = vpop.permute.xlu0 %1492
      %vm1497 = vcmask 126016
      %1498 = vst.msk [vmem:[#allocation2] sm:$0xf] %vm1497, %v1489
      %1499 = vst.msk [vmem:[#allocation2 + $0x4] sm:$0xf] %vm1497, %v1491
      %vm1500 = vcmask 123968
      %1501 = vst.msk [vmem:[#allocation2 + $0x8] sm:$0x3] %vm1500, %v1493
      %1502 = vst [vmem:[#allocation1] ss:$4 sm:$0xff] %v899
      %v1503 = vld.sshfl [vmem:[#allocation1] sm:$0xff pattern:$0x73625140]
      %1505 = vrot.lane.b32.xlu0 %v1503, 120
      %v1506 = vpop.permute.xlu0 %1505
      %1507 = vst [vmem:[#allocation1] ss:$4 sm:$0xff] %v899
      %v1508 = vld.sshfl [vmem:[#allocation1] sm:$0xff pattern:$0x73625140]
      %1510 = vrot.lane.b32.xlu0 %v1508, 88
      %v1511 = vpop.permute.xlu0 %1510
      %v1513 = vsel %vm917, %v1506, 0
      %v1516 = vsel %vm917, %v1511, 0
      %1518 = vmatpush.bf16.xpose.msra.mxu0 0
      %1519 = vmatpush.bf16.xpose.msra.mxu0 0
      %1520 = vmatpush.bf16.xpose.msra.mxu0 0
      %1521 = vmatpush.bf16.xpose.msra.mxu0 0
      %1522 = vmatpush.bf16.xpose.msra.mxu0 0
      %1523 = vmatpush.bf16.xpose.msra.mxu0 0
      %1524 = vmatpush.bf16.xpose.msra.mxu0 0
      %1525 = vmatpush.bf16.xpose.msra.mxu0 %v1516
      %1526 = vmatmul.bf16.gmra.mxu0 %v1513
      %v1527 = vpop.f32.mrf.mxu0
      %v1528 = vadd.f32 0.0, %v1527
      %v1529 = vpop.f32.mrf.mxu0
      %1530 = vdwg.mxu0
      %1531 = vst [vmem:[#allocation1] ss:$4 sm:$0xff] %v902
      %v1532 = vld.sshfl [vmem:[#allocation1] sm:$0xff pattern:$0x73625140]
      %1534 = vrot.lane.b32.xlu0 %v1532, 120
      %v1535 = vpop.permute.xlu0 %1534
      %1536 = vst [vmem:[#allocation1] ss:$4 sm:$0xff] %v902
      %v1537 = vld.sshfl [vmem:[#allocation1] sm:$0xff pattern:$0x73625140]
      %1539 = vrot.lane.b32.xlu0 %v1537, 88
      %v1540 = vpop.permute.xlu0 %1539
      %v1542 = vsel %vm917, %v1535, 0
      %v1545 = vsel %vm917, %v1540, 0
      %1547 = vmatpush.bf16.xpose.msra.mxu0 0
      %1548 = vmatpush.bf16.xpose.msra.mxu0 0
      %1549 = vmatpush.bf16.xpose.msra.mxu0 0
      %1550 = vmatpush.bf16.xpose.msra.mxu0 0
      %1551 = vmatpush.bf16.xpose.msra.mxu0 0
      %1552 = vmatpush.bf16.xpose.msra.mxu0 0
      %1553 = vmatpush.bf16.xpose.msra.mxu0 0
      %1554 = vmatpush.bf16.xpose.msra.mxu0 %v1545
      %1555 = vmatmul.bf16.gmra.mxu0 %v1542
      %v1556 = vpop.f32.mrf.mxu0
      %v1557 = vadd.f32 0.0, %v1556
      %v1558 = vpop.f32.mrf.mxu0
      %1559 = vdwg.mxu0
      %1560 = vst [vmem:[#allocation1] ss:$4 sm:$0xff] %v905
      %v1561 = vld.sshfl [vmem:[#allocation1] sm:$0xff pattern:$0x73625140]
      %1563 = vrot.lane.b32.xlu0 %v1561, 120
      %v1564 = vpop.permute.xlu0 %1563
      %1565 = vst [vmem:[#allocation1] ss:$4 sm:$0xff] %v905
      %v1566 = vld.sshfl [vmem:[#allocation1] sm:$0xff pattern:$0x73625140]
      %1568 = vrot.lane.b32.xlu0 %v1566, 88
      %v1569 = vpop.permute.xlu0 %1568
      %v1571 = vsel %vm917, %v1564, 0
      %v1574 = vsel %vm917, %v1569, 0
      %1576 = vmatpush.bf16.xpose.msra.mxu0 0
      %1577 = vmatpush.bf16.xpose.msra.mxu0 0
      %1578 = vmatpush.bf16.xpose.msra.mxu0 0
      %1579 = vmatpush.bf16.xpose.msra.mxu0 0
      %1580 = vmatpush.bf16.xpose.msra.mxu0 0
      %1581 = vmatpush.bf16.xpose.msra.mxu0 0
      %1582 = vmatpush.bf16.xpose.msra.mxu0 0
      %1583 = vmatpush.bf16.xpose.msra.mxu0 %v1574
      %1584 = vmatmul.bf16.gmra.mxu0 %v1571
      %v1585 = vpop.f32.mrf.mxu0
      %v1586 = vadd.f32 0.0, %v1585
      %v1587 = vpop.f32.mrf.mxu0
      %1588 = vdwg.mxu0
      %1589 = vst [vmem:[#allocation1] ss:$4 sm:$0xff] %v908
      %v1590 = vld.sshfl [vmem:[#allocation1] sm:$0xff pattern:$0x73625140]
      %1592 = vrot.lane.b32.xlu0 %v1590, 120
      %v1593 = vpop.permute.xlu0 %1592
      %1594 = vst [vmem:[#allocation1] ss:$4 sm:$0xff] %v908
      %v1595 = vld.sshfl [vmem:[#allocation1] sm:$0xff pattern:$0x73625140]
      %1597 = vrot.lane.b32.xlu0 %v1595, 88
      %v1598 = vpop.permute.xlu0 %1597
      %v1600 = vsel %vm917, %v1593, 0
      %v1603 = vsel %vm917, %v1598, 0
      %1605 = vmatpush.bf16.xpose.msra.mxu0 0
      %1606 = vmatpush.bf16.xpose.msra.mxu0 0
      %1607 = vmatpush.bf16.xpose.msra.mxu0 0
      %1608 = vmatpush.bf16.xpose.msra.mxu0 0
      %1609 = vmatpush.bf16.xpose.msra.mxu0 0
      %1610 = vmatpush.bf16.xpose.msra.mxu0 0
      %1611 = vmatpush.bf16.xpose.msra.mxu0 0
      %1612 = vmatpush.bf16.xpose.msra.mxu0 %v1603
      %1613 = vmatmul.bf16.gmra.mxu0 %v1600
      %v1614 = vpop.f32.mrf.mxu0
      %v1615 = vadd.f32 0.0, %v1614
      %v1616 = vpop.f32.mrf.mxu0
      %1617 = vdwg.mxu0
      %1618 = vst [vmem:[#allocation1] ss:$4 sm:$0xff] %v911
      %v1619 = vld.sshfl [vmem:[#allocation1] sm:$0xff pattern:$0x73625140]
      %1621 = vrot.lane.b32.xlu0 %v1619, 120
      %v1622 = vpop.permute.xlu0 %1621
      %1623 = vst [vmem:[#allocation1] ss:$4 sm:$0xff] %v911
      %v1624 = vld.sshfl [vmem:[#allocation1] sm:$0xff pattern:$0x73625140]
      %1626 = vrot.lane.b32.xlu0 %v1624, 88
      %v1627 = vpop.permute.xlu0 %1626
      %v1629 = vsel %vm917, %v1622, 0
      %v1632 = vsel %vm917, %v1627, 0
      %1634 = vmatpush.bf16.xpose.msra.mxu0 0
      %1635 = vmatpush.bf16.xpose.msra.mxu0 0
      %1636 = vmatpush.bf16.xpose.msra.mxu0 0
      %1637 = vmatpush.bf16.xpose.msra.mxu0 0
      %1638 = vmatpush.bf16.xpose.msra.mxu0 0
      %1639 = vmatpush.bf16.xpose.msra.mxu0 0
      %1640 = vmatpush.bf16.xpose.msra.mxu0 0
      %1641 = vmatpush.bf16.xpose.msra.mxu0 %v1632
      %1642 = vmatmul.bf16.gmra.mxu0 %v1629
      %v1643 = vpop.f32.mrf.mxu0
      %v1644 = vadd.f32 0.0, %v1643
      %v1645 = vpop.f32.mrf.mxu0
      %1646 = vdwg.mxu0
      %1647 = vst [vmem:[#allocation1] ss:$4 sm:$0xff] %v830
      %v1648 = vld.sshfl [vmem:[#allocation1] sm:$0xff pattern:$0x73625140]
      %1650 = vrot.lane.b32.xlu0 %v1648, 120
      %v1651 = vpop.permute.xlu0 %1650
      %1652 = vst [vmem:[#allocation1] ss:$4 sm:$0xff] %v830
      %v1653 = vld.sshfl [vmem:[#allocation1] sm:$0xff pattern:$0x73625140]
      %1655 = vrot.lane.b32.xlu0 %v1653, 88
      %v1656 = vpop.permute.xlu0 %1655
      %v1658 = vsel %vm917, %v1651, 0
      %v1661 = vsel %vm917, %v1656, 0
      %1663 = vmatpush.bf16.xpose.msra.mxu0 0
      %1664 = vmatpush.bf16.xpose.msra.mxu0 0
      %1665 = vmatpush.bf16.xpose.msra.mxu0 0
      %1666 = vmatpush.bf16.xpose.msra.mxu0 0
      %1667 = vmatpush.bf16.xpose.msra.mxu0 0
      %1668 = vmatpush.bf16.xpose.msra.mxu0 0
      %1669 = vmatpush.bf16.xpose.msra.mxu0 0
      %1670 = vmatpush.bf16.xpose.msra.mxu0 %v1661
      %1671 = vmatmul.bf16.gmra.mxu0 %v1658
      %v1672 = vpop.f32.mrf.mxu0
      %v1673 = vadd.f32 %v1528, %v1672
      %v1674 = vpop.f32.mrf.mxu0
      %1675 = vdwg.mxu0
      %1676 = vst [vmem:[#allocation1] ss:$4 sm:$0xff] %v834
      %v1677 = vld.sshfl [vmem:[#allocation1] sm:$0xff pattern:$0x73625140]
      %1679 = vrot.lane.b32.xlu0 %v1677, 120
      %v1680 = vpop.permute.xlu0 %1679
      %1681 = vst [vmem:[#allocation1] ss:$4 sm:$0xff] %v834
      %v1682 = vld.sshfl [vmem:[#allocation1] sm:$0xff pattern:$0x73625140]
      %1684 = vrot.lane.b32.xlu0 %v1682, 88
      %v1685 = vpop.permute.xlu0 %1684
      %v1687 = vsel %vm917, %v1680, 0
      %v1690 = vsel %vm917, %v1685, 0
      %1692 = vmatpush.bf16.xpose.msra.mxu0 0
      %1693 = vmatpush.bf16.xpose.msra.mxu0 0
      %1694 = vmatpush.bf16.xpose.msra.mxu0 0
      %1695 = vmatpush.bf16.xpose.msra.mxu0 0
      %1696 = vmatpush.bf16.xpose.msra.mxu0 0
      %1697 = vmatpush.bf16.xpose.msra.mxu0 0
      %1698 = vmatpush.bf16.xpose.msra.mxu0 0
      %1699 = vmatpush.bf16.xpose.msra.mxu0 %v1690
      %1700 = vmatmul.bf16.gmra.mxu0 %v1687
      %v1701 = vpop.f32.mrf.mxu0
      %v1702 = vadd.f32 %v1557, %v1701
      %v1703 = vpop.f32.mrf.mxu0
      %1704 = vdwg.mxu0
      %1705 = vst [vmem:[#allocation1] ss:$4 sm:$0xff] %v837
      %v1706 = vld.sshfl [vmem:[#allocation1] sm:$0xff pattern:$0x73625140]
      %1708 = vrot.lane.b32.xlu0 %v1706, 120
      %v1709 = vpop.permute.xlu0 %1708
      %1710 = vst [vmem:[#allocation1] ss:$4 sm:$0xff] %v837
      %v1711 = vld.sshfl [vmem:[#allocation1] sm:$0xff pattern:$0x73625140]
      %1713 = vrot.lane.b32.xlu0 %v1711, 88
      %v1714 = vpop.permute.xlu0 %1713
      %v1716 = vsel %vm917, %v1709, 0
      %v1719 = vsel %vm917, %v1714, 0
      %1721 = vmatpush.bf16.xpose.msra.mxu0 0
      %1722 = vmatpush.bf16.xpose.msra.mxu0 0
      %1723 = vmatpush.bf16.xpose.msra.mxu0 0
      %1724 = vmatpush.bf16.xpose.msra.mxu0 0
      %1725 = vmatpush.bf16.xpose.msra.mxu0 0
      %1726 = vmatpush.bf16.xpose.msra.mxu0 0
      %1727 = vmatpush.bf16.xpose.msra.mxu0 0
      %1728 = vmatpush.bf16.xpose.msra.mxu0 %v1719
      %1729 = vmatmul.bf16.gmra.mxu0 %v1716
      %v1730 = vpop.f32.mrf.mxu0
      %v1731 = vadd.f32 %v1586, %v1730
      %v1732 = vpop.f32.mrf.mxu0
      %1733 = vdwg.mxu0
      %1734 = vst [vmem:[#allocation1] ss:$4 sm:$0xff] %v840
      %v1735 = vld.sshfl [vmem:[#allocation1] sm:$0xff pattern:$0x73625140]
      %1737 = vrot.lane.b32.xlu0 %v1735, 120
      %v1738 = vpop.permute.xlu0 %1737
      %1739 = vst [vmem:[#allocation1] ss:$4 sm:$0xff] %v840
      %v1740 = vld.sshfl [vmem:[#allocation1] sm:$0xff pattern:$0x73625140]
      %1742 = vrot.lane.b32.xlu0 %v1740, 88
      %v1743 = vpop.permute.xlu0 %1742
      %v1745 = vsel %vm917, %v1738, 0
      %v1748 = vsel %vm917, %v1743, 0
      %1750 = vmatpush.bf16.xpose.msra.mxu0 0
      %1751 = vmatpush.bf16.xpose.msra.mxu0 0
      %1752 = vmatpush.bf16.xpose.msra.mxu0 0
      %1753 = vmatpush.bf16.xpose.msra.mxu0 0
      %1754 = vmatpush.bf16.xpose.msra.mxu0 0
      %1755 = vmatpush.bf16.xpose.msra.mxu0 0
      %1756 = vmatpush.bf16.xpose.msra.mxu0 0
      %1757 = vmatpush.bf16.xpose.msra.mxu0 %v1748
      %1758 = vmatmul.bf16.gmra.mxu0 %v1745
      %v1759 = vpop.f32.mrf.mxu0
      %v1760 = vadd.f32 %v1615, %v1759
      %v1761 = vpop.f32.mrf.mxu0
      %1762 = vdwg.mxu0
      %1763 = vst [vmem:[#allocation1] ss:$4 sm:$0xff] %v843
      %v1764 = vld.sshfl [vmem:[#allocation1] sm:$0xff pattern:$0x73625140]
      %1766 = vrot.lane.b32.xlu0 %v1764, 120
      %v1767 = vpop.permute.xlu0 %1766
      %1768 = vst [vmem:[#allocation1] ss:$4 sm:$0xff] %v843
      %v1769 = vld.sshfl [vmem:[#allocation1] sm:$0xff pattern:$0x73625140]
      %1771 = vrot.lane.b32.xlu0 %v1769, 88
      %v1772 = vpop.permute.xlu0 %1771
      %v1774 = vsel %vm917, %v1767, 0
      %v1777 = vsel %vm917, %v1772, 0
      %1779 = vmatpush.bf16.xpose.msra.mxu0 0
      %1780 = vmatpush.bf16.xpose.msra.mxu0 0
      %1781 = vmatpush.bf16.xpose.msra.mxu0 0
      %1782 = vmatpush.bf16.xpose.msra.mxu0 0
      %1783 = vmatpush.bf16.xpose.msra.mxu0 0
      %1784 = vmatpush.bf16.xpose.msra.mxu0 0
      %1785 = vmatpush.bf16.xpose.msra.mxu0 0
      %1786 = vmatpush.bf16.xpose.msra.mxu0 %v1777
      %1787 = vmatmul.bf16.gmra.mxu0 %v1774
      %v1788 = vpop.f32.mrf.mxu0
      %v1789 = vadd.f32 %v1644, %v1788
      %v1790 = vpop.f32.mrf.mxu0
      %1791 = vdwg.mxu0
      %v1792 = vsel %vm1147, %v1673, -inf
      %1793 = vmax.xlane.f32.xlu0 %v1792
      %v1794 = vpop.xlane.xlu0 %1793
      %v1795 = vsel %vm1147, %v1702, -inf
      %1796 = vmax.xlane.f32.xlu0 %v1795
      %v1797 = vpop.xlane.xlu0 %1796
      %v1798 = vsel %vm1147, %v1731, -inf
      %1799 = vmax.xlane.f32.xlu0 %v1798
      %v1800 = vpop.xlane.xlu0 %1799
      %v1801 = vsel %vm1147, %v1760, -inf
      %1802 = vmax.xlane.f32.xlu0 %v1801
      %v1803 = vpop.xlane.xlu0 %1802
      %v1804 = vsel %vm1147, %v1789, -inf
      %1805 = vmax.xlane.f32.xlu0 %v1804
      %v1806 = vpop.xlane.xlu0 %1805
      %v1807 = vsub.f32 %v1673, %v1794
      %v1808 = vsub.f32 %v1702, %v1797
      %v1809 = vsub.f32 %v1731, %v1800
      %v1810 = vsub.f32 %v1760, %v1803
      %v1811 = vsub.f32 %v1789, %v1806
      %v1812 = vmul.f32 %v1807, 1.442695
      %v1813 = vpow.pop %v1812
      %v1814 = vmul.f32 %v1808, 1.442695
      %v1815 = vpow.pop %v1814
      %v1816 = vmul.f32 %v1809, 1.442695
      %v1817 = vpow.pop %v1816
      %v1818 = vmul.f32 %v1810, 1.442695
      %v1819 = vpow.pop %v1818
      %v1820 = vmul.f32 %v1811, 1.442695
      %v1821 = vpow.pop %v1820
      %v1822 = vsel %vm1147, %v1813, 0.0
      %1823 = vadd.xlane.f32.xlu0 %v1822
      %v1824 = vpop.xlane.xlu0 %1823
      %v1825 = vsel %vm1147, %v1815, 0.0
      %1826 = vadd.xlane.f32.xlu0 %v1825
      %v1827 = vpop.xlane.xlu0 %1826
      %v1828 = vsel %vm1147, %v1817, 0.0
      %1829 = vadd.xlane.f32.xlu0 %v1828
      %v1830 = vpop.xlane.xlu0 %1829
      %v1831 = vsel %vm1147, %v1819, 0.0
      %1832 = vadd.xlane.f32.xlu0 %v1831
      %v1833 = vpop.xlane.xlu0 %1832
      %v1834 = vsel %vm1147, %v1821, 0.0
      %1835 = vadd.xlane.f32.xlu0 %v1834
      %v1836 = vpop.xlane.xlu0 %1835
      %v1837 = vrcp.pop %v1824
      %v1838 = vrcp.pop %v1827
      %v1839 = vrcp.pop %v1830
      %v1840 = vrcp.pop %v1833
      %v1841 = vrcp.pop %v1836
      %v1842 = vmul.f32 %v1813, %v1837
      %v1843 = vmul.f32 %v1815, %v1838
      %v1844 = vmul.f32 %v1817, %v1839
      %v1845 = vmul.f32 %v1819, %v1840
      %v1846 = vmul.f32 %v1821, %v1841
      %v1847 = vpack.c.bf16 %v1842, %v1842
      %v1848 = vpack.c.bf16 %v1843, %v1843
      %v1849 = vpack.c.bf16 %v1844, %v1844
      %v1850 = vpack.c.bf16 %v1845, %v1845
      %v1851 = vpack.c.bf16 %v1846, %v1846
      %1852 = vst [vmem:[#allocation1] ss:$4 sm:$0xff] %v830
      %v1853 = vld.sshfl [vmem:[#allocation1] sm:$0xff pattern:$0x73625140]
      %1855 = vrot.lane.b32.xlu0 %v1853, 56
      %v1856 = vpop.permute.xlu0 %1855
      %v1858 = vsel %vm1213, %v1847, 0
      %v1861 = vsel %vm827, %v1856, 0
      %1863 = vmatpush.bf16.msra.mxu0 0
      %1864 = vmatpush.bf16.msra.mxu0 0
      %1865 = vmatpush.bf16.msra.mxu0 0
      %1866 = vmatpush.bf16.msra.mxu0 0
      %1867 = vmatpush.bf16.msra.mxu0 0
      %1868 = vmatpush.bf16.msra.mxu0 0
      %1869 = vmatpush.bf16.msra.mxu0 0
      %1870 = vmatpush.bf16.msra.mxu0 %v1861
      %1871 = vmatmul.bf16.gmra.mxu0 %v1858
      %v1872 = vpop.f32.mrf.mxu0
      %v1873 = vadd.f32 0.0, %v1872
      %v1874 = vpop.f32.mrf.mxu0
      %1875 = vdwg.mxu0
      %1876 = vst [vmem:[#allocation1] ss:$4 sm:$0xff] %v834
      %v1877 = vld.sshfl [vmem:[#allocation1] sm:$0xff pattern:$0x73625140]
      %1879 = vrot.lane.b32.xlu0 %v1877, 56
      %v1880 = vpop.permute.xlu0 %1879
      %v1882 = vsel %vm1213, %v1848, 0
      %v1885 = vsel %vm827, %v1880, 0
      %1887 = vmatpush.bf16.msra.mxu0 0
      %1888 = vmatpush.bf16.msra.mxu0 0
      %1889 = vmatpush.bf16.msra.mxu0 0
      %1890 = vmatpush.bf16.msra.mxu0 0
      %1891 = vmatpush.bf16.msra.mxu0 0
      %1892 = vmatpush.bf16.msra.mxu0 0
      %1893 = vmatpush.bf16.msra.mxu0 0
      %1894 = vmatpush.bf16.msra.mxu0 %v1885
      %1895 = vmatmul.bf16.gmra.mxu0 %v1882
      %v1896 = vpop.f32.mrf.mxu0
      %v1897 = vadd.f32 0.0, %v1896
      %v1898 = vpop.f32.mrf.mxu0
      %1899 = vdwg.mxu0
      %1900 = vst [vmem:[#allocation1] ss:$4 sm:$0xff] %v837
      %v1901 = vld.sshfl [vmem:[#allocation1] sm:$0xff pattern:$0x73625140]
      %1903 = vrot.lane.b32.xlu0 %v1901, 56
      %v1904 = vpop.permute.xlu0 %1903
      %v1906 = vsel %vm1213, %v1849, 0
      %v1909 = vsel %vm827, %v1904, 0
      %1911 = vmatpush.bf16.msra.mxu0 0
      %1912 = vmatpush.bf16.msra.mxu0 0
      %1913 = vmatpush.bf16.msra.mxu0 0
      %1914 = vmatpush.bf16.msra.mxu0 0
      %1915 = vmatpush.bf16.msra.mxu0 0
      %1916 = vmatpush.bf16.msra.mxu0 0
      %1917 = vmatpush.bf16.msra.mxu0 0
      %1918 = vmatpush.bf16.msra.mxu0 %v1909
      %1919 = vmatmul.bf16.gmra.mxu0 %v1906
      %v1920 = vpop.f32.mrf.mxu0
      %v1921 = vadd.f32 0.0, %v1920
      %v1922 = vpop.f32.mrf.mxu0
      %1923 = vdwg.mxu0
      %1924 = vst [vmem:[#allocation1] ss:$4 sm:$0xff] %v840
      %v1925 = vld.sshfl [vmem:[#allocation1] sm:$0xff pattern:$0x73625140]
      %1927 = vrot.lane.b32.xlu0 %v1925, 56
      %v1928 = vpop.permute.xlu0 %1927
      %v1930 = vsel %vm1213, %v1850, 0
      %v1933 = vsel %vm827, %v1928, 0
      %1935 = vmatpush.bf16.msra.mxu0 0
      %1936 = vmatpush.bf16.msra.mxu0 0
      %1937 = vmatpush.bf16.msra.mxu0 0
      %1938 = vmatpush.bf16.msra.mxu0 0
      %1939 = vmatpush.bf16.msra.mxu0 0
      %1940 = vmatpush.bf16.msra.mxu0 0
      %1941 = vmatpush.bf16.msra.mxu0 0
      %1942 = vmatpush.bf16.msra.mxu0 %v1933
      %1943 = vmatmul.bf16.gmra.mxu0 %v1930
      %v1944 = vpop.f32.mrf.mxu0
      %v1945 = vadd.f32 0.0, %v1944
      %v1946 = vpop.f32.mrf.mxu0
      %1947 = vdwg.mxu0
      %1948 = vst [vmem:[#allocation1] ss:$4 sm:$0xff] %v843
      %v1949 = vld.sshfl [vmem:[#allocation1] sm:$0xff pattern:$0x73625140]
      %1951 = vrot.lane.b32.xlu0 %v1949, 56
      %v1952 = vpop.permute.xlu0 %1951
      %v1954 = vsel %vm1213, %v1851, 0
      %v1957 = vsel %vm827, %v1952, 0
      %1959 = vmatpush.bf16.msra.mxu0 0
      %1960 = vmatpush.bf16.msra.mxu0 0
      %1961 = vmatpush.bf16.msra.mxu0 0
      %1962 = vmatpush.bf16.msra.mxu0 0
      %1963 = vmatpush.bf16.msra.mxu0 0
      %1964 = vmatpush.bf16.msra.mxu0 0
      %1965 = vmatpush.bf16.msra.mxu0 0
      %1966 = vmatpush.bf16.msra.mxu0 %v1957
      %1967 = vmatmul.bf16.gmra.mxu0 %v1954
      %v1968 = vpop.f32.mrf.mxu0
      %v1969 = vadd.f32 0.0, %v1968
      %v1970 = vpop.f32.mrf.mxu0
      %1971 = vdwg.mxu0
      %1972 = vst [vmem:[#allocation1] ss:$4 sm:$0xff] %v899
      %v1973 = vld.sshfl [vmem:[#allocation1] sm:$0xff pattern:$0x73625140]
      %1975 = vrot.lane.b32.xlu0 %v1973, 56
      %v1976 = vpop.permute.xlu0 %1975
      %v1978 = vsel %vm827, %v1976, 0
      %1980 = vmatpush.bf16.msra.mxu0 0
      %1981 = vmatpush.bf16.msra.mxu0 0
      %1982 = vmatpush.bf16.msra.mxu0 0
      %1983 = vmatpush.bf16.msra.mxu0 0
      %1984 = vmatpush.bf16.msra.mxu0 0
      %1985 = vmatpush.bf16.msra.mxu0 0
      %1986 = vmatpush.bf16.msra.mxu0 0
      %1987 = vmatpush.bf16.msra.mxu0 %v1978
      %1988 = vmatmul.bf16.gmra.mxu0 %v1858
      %v1989 = vpop.f32.mrf.mxu0
      %v1990 = vadd.f32 0.0, %v1989
      %v1991 = vpop.f32.mrf.mxu0
      %1992 = vdwg.mxu0
      %1993 = vst [vmem:[#allocation1] ss:$4 sm:$0xff] %v902
      %v1994 = vld.sshfl [vmem:[#allocation1] sm:$0xff pattern:$0x73625140]
      %1996 = vrot.lane.b32.xlu0 %v1994, 56
      %v1997 = vpop.permute.xlu0 %1996
      %v1999 = vsel %vm827, %v1997, 0
      %2001 = vmatpush.bf16.msra.mxu0 0
      %2002 = vmatpush.bf16.msra.mxu0 0
      %2003 = vmatpush.bf16.msra.mxu0 0
      %2004 = vmatpush.bf16.msra.mxu0 0
      %2005 = vmatpush.bf16.msra.mxu0 0
      %2006 = vmatpush.bf16.msra.mxu0 0
      %2007 = vmatpush.bf16.msra.mxu0 0
      %2008 = vmatpush.bf16.msra.mxu0 %v1999
      %2009 = vmatmul.bf16.gmra.mxu0 %v1882
      %v2010 = vpop.f32.mrf.mxu0
      %v2011 = vadd.f32 0.0, %v2010
      %v2012 = vpop.f32.mrf.mxu0
      %2013 = vdwg.mxu0
      %2014 = vst [vmem:[#allocation1] ss:$4 sm:$0xff] %v905
      %v2015 = vld.sshfl [vmem:[#allocation1] sm:$0xff pattern:$0x73625140]
      %2017 = vrot.lane.b32.xlu0 %v2015, 56
      %v2018 = vpop.permute.xlu0 %2017
      %v2020 = vsel %vm827, %v2018, 0
      %2022 = vmatpush.bf16.msra.mxu0 0
      %2023 = vmatpush.bf16.msra.mxu0 0
      %2024 = vmatpush.bf16.msra.mxu0 0
      %2025 = vmatpush.bf16.msra.mxu0 0
      %2026 = vmatpush.bf16.msra.mxu0 0
      %2027 = vmatpush.bf16.msra.mxu0 0
      %2028 = vmatpush.bf16.msra.mxu0 0
      %2029 = vmatpush.bf16.msra.mxu0 %v2020
      %2030 = vmatmul.bf16.gmra.mxu0 %v1906
      %v2031 = vpop.f32.mrf.mxu0
      %v2032 = vadd.f32 0.0, %v2031
      %v2033 = vpop.f32.mrf.mxu0
      %2034 = vdwg.mxu0
      %2035 = vst [vmem:[#allocation1] ss:$4 sm:$0xff] %v908
      %v2036 = vld.sshfl [vmem:[#allocation1] sm:$0xff pattern:$0x73625140]
      %2038 = vrot.lane.b32.xlu0 %v2036, 56
      %v2039 = vpop.permute.xlu0 %2038
      %v2041 = vsel %vm827, %v2039, 0
      %2043 = vmatpush.bf16.msra.mxu0 0
      %2044 = vmatpush.bf16.msra.mxu0 0
      %2045 = vmatpush.bf16.msra.mxu0 0
      %2046 = vmatpush.bf16.msra.mxu0 0
      %2047 = vmatpush.bf16.msra.mxu0 0
      %2048 = vmatpush.bf16.msra.mxu0 0
      %2049 = vmatpush.bf16.msra.mxu0 0
      %2050 = vmatpush.bf16.msra.mxu0 %v2041
      %2051 = vmatmul.bf16.gmra.mxu0 %v1930
      %v2052 = vpop.f32.mrf.mxu0
      %v2053 = vadd.f32 0.0, %v2052
      %v2054 = vpop.f32.mrf.mxu0
      %2055 = vdwg.mxu0
      %2056 = vst [vmem:[#allocation1] ss:$4 sm:$0xff] %v911
      %v2057 = vld.sshfl [vmem:[#allocation1] sm:$0xff pattern:$0x73625140]
      %2059 = vrot.lane.b32.xlu0 %v2057, 56
      %v2060 = vpop.permute.xlu0 %2059
      %v2062 = vsel %vm827, %v2060, 0
      %2064 = vmatpush.bf16.msra.mxu0 0
      %2065 = vmatpush.bf16.msra.mxu0 0
      %2066 = vmatpush.bf16.msra.mxu0 0
      %2067 = vmatpush.bf16.msra.mxu0 0
      %2068 = vmatpush.bf16.msra.mxu0 0
      %2069 = vmatpush.bf16.msra.mxu0 0
      %2070 = vmatpush.bf16.msra.mxu0 0
      %2071 = vmatpush.bf16.msra.mxu0 %v2062
      %2072 = vmatmul.bf16.gmra.mxu0 %v1954
      %v2073 = vpop.f32.mrf.mxu0
      %v2074 = vadd.f32 0.0, %v2073
      %v2075 = vpop.f32.mrf.mxu0
      %2076 = vdwg.mxu0
      %2082 = vst [vmem:[#allocation1] ss:$2 sm:$0xff] %v1873
      %s2083 = scalar_lea.vmem [#allocation1], 1
      %2084 = vst [vmem:[%s2083] ss:$2 sm:$0xff] %v1897
      %s2085 = scalar_lea.vmem [#allocation1], 16
      %2086 = vst [vmem:[%s2085] ss:$2 sm:$0xff] %v1921
      %s2087 = scalar_lea.vmem [#allocation1], 17
      %2088 = vst [vmem:[%s2087] ss:$2 sm:$0xff] %v1945
      %s2089 = scalar_lea.vmem [#allocation1], 32
      %2090 = vst [vmem:[%s2089] ss:$2 sm:$0xff] %v1969
      %v2091 = vld.sshfl [vmem:[#allocation1] sm:$0xff pattern:$0x75316420]
      %v2092 = vld.sshfl [vmem:[#allocation1 + $0x10] sm:$0xff pattern:$0x75316420]
      %v2093 = vld.sshfl [vmem:[#allocation1 + $0x20] sm:$0xff pattern:$0x75316420]
      %v2097 = vpack.c.bf16 %v2091, %v2091
      %v2098 = vpack.c.bf16 %v2092, %v2092
      %v2099 = vpack.c.bf16 %v2093, %v2093
      %2103 = vrot.lane.b32.xlu0 %v2097, 16
      %v2104 = vpop.permute.xlu0 %2103
      %2105 = vrot.lane.b32.xlu0 %v2098, 16
      %v2106 = vpop.permute.xlu0 %2105
      %2107 = vrot.lane.b32.xlu0 %v2099, 16
      %v2108 = vpop.permute.xlu0 %2107
      %vm2112 = vcmask 191616
      %2113 = vst.msk [vmem:[#allocation2] sm:$0xf] %vm2112, %v2104
      %2114 = vst.msk [vmem:[#allocation2 + $0x4] sm:$0xf] %vm2112, %v2106
      %vm2115 = vcmask 189568
      %2116 = vst.msk [vmem:[#allocation2 + $0x8] sm:$0x3] %vm2115, %v2108
      %2122 = vst [vmem:[#allocation1] ss:$2 sm:$0xff] %v1990
      %s2123 = scalar_lea.vmem [#allocation1], 1
      %2124 = vst [vmem:[%s2123] ss:$2 sm:$0xff] %v2011
      %s2125 = scalar_lea.vmem [#allocation1], 16
      %2126 = vst [vmem:[%s2125] ss:$2 sm:$0xff] %v2032
      %s2127 = scalar_lea.vmem [#allocation1], 17
      %2128 = vst [vmem:[%s2127] ss:$2 sm:$0xff] %v2053
      %s2129 = scalar_lea.vmem [#allocation1], 32
      %2130 = vst [vmem:[%s2129] ss:$2 sm:$0xff] %v2074
      %v2131 = vld.sshfl [vmem:[#allocation1] sm:$0xff pattern:$0x75316420]
      %v2132 = vld.sshfl [vmem:[#allocation1 + $0x10] sm:$0xff pattern:$0x75316420]
      %v2133 = vld.sshfl [vmem:[#allocation1 + $0x20] sm:$0xff pattern:$0x75316420]
      %v2137 = vpack.c.bf16 %v2131, %v2131
      %v2138 = vpack.c.bf16 %v2132, %v2132
      %v2139 = vpack.c.bf16 %v2133, %v2133
      %2143 = vrot.lane.b32.xlu0 %v2137, 24
      %v2144 = vpop.permute.xlu0 %2143
      %2145 = vrot.lane.b32.xlu0 %v2138, 24
      %v2146 = vpop.permute.xlu0 %2145
      %2147 = vrot.lane.b32.xlu0 %v2139, 24
      %v2148 = vpop.permute.xlu0 %2147
      %vm2152 = vcmask 257216
      %2153 = vst.msk [vmem:[#allocation2] sm:$0xf] %vm2152, %v2144
      %2154 = vst.msk [vmem:[#allocation2 + $0x4] sm:$0xf] %vm2152, %v2146
      %vm2155 = vcmask 255168
      %2156 = vst.msk [vmem:[#allocation2 + $0x8] sm:$0x3] %vm2155, %v2148
      %2157 = vst [vmem:[#allocation1] ss:$4 sm:$0xff] %v899
      %v2158 = vld.sshfl [vmem:[#allocation1] sm:$0xff pattern:$0x73625140]
      %2160 = vrot.lane.b32.xlu0 %v2158, 112
      %v2161 = vpop.permute.xlu0 %2160
      %2162 = vst [vmem:[#allocation1] ss:$4 sm:$0xff] %v899
      %v2163 = vld.sshfl [vmem:[#allocation1] sm:$0xff pattern:$0x73625140]
      %2165 = vrot.lane.b32.xlu0 %v2163, 80
      %v2166 = vpop.permute.xlu0 %2165
      %v2168 = vsel %vm917, %v2161, 0
      %v2171 = vsel %vm917, %v2166, 0
      %2173 = vmatpush.bf16.xpose.msra.mxu0 0
      %2174 = vmatpush.bf16.xpose.msra.mxu0 0
      %2175 = vmatpush.bf16.xpose.msra.mxu0 0
      %2176 = vmatpush.bf16.xpose.msra.mxu0 0
      %2177 = vmatpush.bf16.xpose.msra.mxu0 0
      %2178 = vmatpush.bf16.xpose.msra.mxu0 0
      %2179 = vmatpush.bf16.xpose.msra.mxu0 0
      %2180 = vmatpush.bf16.xpose.msra.mxu0 %v2171
      %2181 = vmatmul.bf16.gmra.mxu0 %v2168
      %v2182 = vpop.f32.mrf.mxu0
      %v2183 = vadd.f32 0.0, %v2182
      %v2184 = vpop.f32.mrf.mxu0
      %2185 = vdwg.mxu0
      %2186 = vst [vmem:[#allocation1] ss:$4 sm:$0xff] %v902
      %v2187 = vld.sshfl [vmem:[#allocation1] sm:$0xff pattern:$0x73625140]
      %2189 = vrot.lane.b32.xlu0 %v2187, 112
      %v2190 = vpop.permute.xlu0 %2189
      %2191 = vst [vmem:[#allocation1] ss:$4 sm:$0xff] %v902
      %v2192 = vld.sshfl [vmem:[#allocation1] sm:$0xff pattern:$0x73625140]
      %2194 = vrot.lane.b32.xlu0 %v2192, 80
      %v2195 = vpop.permute.xlu0 %2194
      %v2197 = vsel %vm917, %v2190, 0
      %v2200 = vsel %vm917, %v2195, 0
      %2202 = vmatpush.bf16.xpose.msra.mxu0 0
      %2203 = vmatpush.bf16.xpose.msra.mxu0 0
      %2204 = vmatpush.bf16.xpose.msra.mxu0 0
      %2205 = vmatpush.bf16.xpose.msra.mxu0 0
      %2206 = vmatpush.bf16.xpose.msra.mxu0 0
      %2207 = vmatpush.bf16.xpose.msra.mxu0 0
      %2208 = vmatpush.bf16.xpose.msra.mxu0 0
      %2209 = vmatpush.bf16.xpose.msra.mxu0 %v2200
      %2210 = vmatmul.bf16.gmra.mxu0 %v2197
      %v2211 = vpop.f32.mrf.mxu0
      %v2212 = vadd.f32 0.0, %v2211
      %v2213 = vpop.f32.mrf.mxu0
      %2214 = vdwg.mxu0
      %2215 = vst [vmem:[#allocation1] ss:$4 sm:$0xff] %v905
      %v2216 = vld.sshfl [vmem:[#allocation1] sm:$0xff pattern:$0x73625140]
      %2218 = vrot.lane.b32.xlu0 %v2216, 112
      %v2219 = vpop.permute.xlu0 %2218
      %2220 = vst [vmem:[#allocation1] ss:$4 sm:$0xff] %v905
      %v2221 = vld.sshfl [vmem:[#allocation1] sm:$0xff pattern:$0x73625140]
      %2223 = vrot.lane.b32.xlu0 %v2221, 80
      %v2224 = vpop.permute.xlu0 %2223
      %v2226 = vsel %vm917, %v2219, 0
      %v2229 = vsel %vm917, %v2224, 0
      %2231 = vmatpush.bf16.xpose.msra.mxu0 0
      %2232 = vmatpush.bf16.xpose.msra.mxu0 0
      %2233 = vmatpush.bf16.xpose.msra.mxu0 0
      %2234 = vmatpush.bf16.xpose.msra.mxu0 0
      %2235 = vmatpush.bf16.xpose.msra.mxu0 0
      %2236 = vmatpush.bf16.xpose.msra.mxu0 0
      %2237 = vmatpush.bf16.xpose.msra.mxu0 0
      %2238 = vmatpush.bf16.xpose.msra.mxu0 %v2229
      %2239 = vmatmul.bf16.gmra.mxu0 %v2226
      %v2240 = vpop.f32.mrf.mxu0
      %v2241 = vadd.f32 0.0, %v2240
      %v2242 = vpop.f32.mrf.mxu0
      %2243 = vdwg.mxu0
      %2244 = vst [vmem:[#allocation1] ss:$4 sm:$0xff] %v908
      %v2245 = vld.sshfl [vmem:[#allocation1] sm:$0xff pattern:$0x73625140]
      %2247 = vrot.lane.b32.xlu0 %v2245, 112
      %v2248 = vpop.permute.xlu0 %2247
      %2249 = vst [vmem:[#allocation1] ss:$4 sm:$0xff] %v908
      %v2250 = vld.sshfl [vmem:[#allocation1] sm:$0xff pattern:$0x73625140]
      %2252 = vrot.lane.b32.xlu0 %v2250, 80
      %v2253 = vpop.permute.xlu0 %2252
      %v2255 = vsel %vm917, %v2248, 0
      %v2258 = vsel %vm917, %v2253, 0
      %2260 = vmatpush.bf16.xpose.msra.mxu0 0
      %2261 = vmatpush.bf16.xpose.msra.mxu0 0
      %2262 = vmatpush.bf16.xpose.msra.mxu0 0
      %2263 = vmatpush.bf16.xpose.msra.mxu0 0
      %2264 = vmatpush.bf16.xpose.msra.mxu0 0
      %2265 = vmatpush.bf16.xpose.msra.mxu0 0
      %2266 = vmatpush.bf16.xpose.msra.mxu0 0
      %2267 = vmatpush.bf16.xpose.msra.mxu0 %v2258
      %2268 = vmatmul.bf16.gmra.mxu0 %v2255
      %v2269 = vpop.f32.mrf.mxu0
      %v2270 = vadd.f32 0.0, %v2269
      %v2271 = vpop.f32.mrf.mxu0
      %2272 = vdwg.mxu0
      %2273 = vst [vmem:[#allocation1] ss:$4 sm:$0xff] %v911
      %v2274 = vld.sshfl [vmem:[#allocation1] sm:$0xff pattern:$0x73625140]
      %2276 = vrot.lane.b32.xlu0 %v2274, 112
      %v2277 = vpop.permute.xlu0 %2276
      %2278 = vst [vmem:[#allocation1] ss:$4 sm:$0xff] %v911
      %v2279 = vld.sshfl [vmem:[#allocation1] sm:$0xff pattern:$0x73625140]
      %2281 = vrot.lane.b32.xlu0 %v2279, 80
      %v2282 = vpop.permute.xlu0 %2281
      %v2284 = vsel %vm917, %v2277, 0
      %v2287 = vsel %vm917, %v2282, 0
      %2289 = vmatpush.bf16.xpose.msra.mxu0 0
      %2290 = vmatpush.bf16.xpose.msra.mxu0 0
      %2291 = vmatpush.bf16.xpose.msra.mxu0 0
      %2292 = vmatpush.bf16.xpose.msra.mxu0 0
      %2293 = vmatpush.bf16.xpose.msra.mxu0 0
      %2294 = vmatpush.bf16.xpose.msra.mxu0 0
      %2295 = vmatpush.bf16.xpose.msra.mxu0 0
      %2296 = vmatpush.bf16.xpose.msra.mxu0 %v2287
      %2297 = vmatmul.bf16.gmra.mxu0 %v2284
      %v2298 = vpop.f32.mrf.mxu0
      %v2299 = vadd.f32 0.0, %v2298
      %v2300 = vpop.f32.mrf.mxu0
      %2301 = vdwg.mxu0
      %2302 = vst [vmem:[#allocation1] ss:$4 sm:$0xff] %v830
      %v2303 = vld.sshfl [vmem:[#allocation1] sm:$0xff pattern:$0x73625140]
      %2305 = vrot.lane.b32.xlu0 %v2303, 112
      %v2306 = vpop.permute.xlu0 %2305
      %2307 = vst [vmem:[#allocation1] ss:$4 sm:$0xff] %v830
      %v2308 = vld.sshfl [vmem:[#allocation1] sm:$0xff pattern:$0x73625140]
      %2310 = vrot.lane.b32.xlu0 %v2308, 80
      %v2311 = vpop.permute.xlu0 %2310
      %v2313 = vsel %vm917, %v2306, 0
      %v2316 = vsel %vm917, %v2311, 0
      %2318 = vmatpush.bf16.xpose.msra.mxu0 0
      %2319 = vmatpush.bf16.xpose.msra.mxu0 0
      %2320 = vmatpush.bf16.xpose.msra.mxu0 0
      %2321 = vmatpush.bf16.xpose.msra.mxu0 0
      %2322 = vmatpush.bf16.xpose.msra.mxu0 0
      %2323 = vmatpush.bf16.xpose.msra.mxu0 0
      %2324 = vmatpush.bf16.xpose.msra.mxu0 0
      %2325 = vmatpush.bf16.xpose.msra.mxu0 %v2316
      %2326 = vmatmul.bf16.gmra.mxu0 %v2313
      %v2327 = vpop.f32.mrf.mxu0
      %v2328 = vadd.f32 %v2183, %v2327
      %v2329 = vpop.f32.mrf.mxu0
      %2330 = vdwg.mxu0
      %2331 = vst [vmem:[#allocation1] ss:$4 sm:$0xff] %v834
      %v2332 = vld.sshfl [vmem:[#allocation1] sm:$0xff pattern:$0x73625140]
      %2334 = vrot.lane.b32.xlu0 %v2332, 112
      %v2335 = vpop.permute.xlu0 %2334
      %2336 = vst [vmem:[#allocation1] ss:$4 sm:$0xff] %v834
      %v2337 = vld.sshfl [vmem:[#allocation1] sm:$0xff pattern:$0x73625140]
      %2339 = vrot.lane.b32.xlu0 %v2337, 80
      %v2340 = vpop.permute.xlu0 %2339
      %v2342 = vsel %vm917, %v2335, 0
      %v2345 = vsel %vm917, %v2340, 0
      %2347 = vmatpush.bf16.xpose.msra.mxu0 0
      %2348 = vmatpush.bf16.xpose.msra.mxu0 0
      %2349 = vmatpush.bf16.xpose.msra.mxu0 0
      %2350 = vmatpush.bf16.xpose.msra.mxu0 0
      %2351 = vmatpush.bf16.xpose.msra.mxu0 0
      %2352 = vmatpush.bf16.xpose.msra.mxu0 0
      %2353 = vmatpush.bf16.xpose.msra.mxu0 0
      %2354 = vmatpush.bf16.xpose.msra.mxu0 %v2345
      %2355 = vmatmul.bf16.gmra.mxu0 %v2342
      %v2356 = vpop.f32.mrf.mxu0
      %v2357 = vadd.f32 %v2212, %v2356
      %v2358 = vpop.f32.mrf.mxu0
      %2359 = vdwg.mxu0
      %2360 = vst [vmem:[#allocation1] ss:$4 sm:$0xff] %v837
      %v2361 = vld.sshfl [vmem:[#allocation1] sm:$0xff pattern:$0x73625140]
      %2363 = vrot.lane.b32.xlu0 %v2361, 112
      %v2364 = vpop.permute.xlu0 %2363
      %2365 = vst [vmem:[#allocation1] ss:$4 sm:$0xff] %v837
      %v2366 = vld.sshfl [vmem:[#allocation1] sm:$0xff pattern:$0x73625140]
      %2368 = vrot.lane.b32.xlu0 %v2366, 80
      %v2369 = vpop.permute.xlu0 %2368
      %v2371 = vsel %vm917, %v2364, 0
      %v2374 = vsel %vm917, %v2369, 0
      %2376 = vmatpush.bf16.xpose.msra.mxu0 0
      %2377 = vmatpush.bf16.xpose.msra.mxu0 0
      %2378 = vmatpush.bf16.xpose.msra.mxu0 0
      %2379 = vmatpush.bf16.xpose.msra.mxu0 0
      %2380 = vmatpush.bf16.xpose.msra.mxu0 0
      %2381 = vmatpush.bf16.xpose.msra.mxu0 0
      %2382 = vmatpush.bf16.xpose.msra.mxu0 0
      %2383 = vmatpush.bf16.xpose.msra.mxu0 %v2374
      %2384 = vmatmul.bf16.gmra.mxu0 %v2371
      %v2385 = vpop.f32.mrf.mxu0
      %v2386 = vadd.f32 %v2241, %v2385
      %v2387 = vpop.f32.mrf.mxu0
      %2388 = vdwg.mxu0
      %2389 = vst [vmem:[#allocation1] ss:$4 sm:$0xff] %v840
      %v2390 = vld.sshfl [vmem:[#allocation1] sm:$0xff pattern:$0x73625140]
      %2392 = vrot.lane.b32.xlu0 %v2390, 112
      %v2393 = vpop.permute.xlu0 %2392
      %2394 = vst [vmem:[#allocation1] ss:$4 sm:$0xff] %v840
      %v2395 = vld.sshfl [vmem:[#allocation1] sm:$0xff pattern:$0x73625140]
      %2397 = vrot.lane.b32.xlu0 %v2395, 80
      %v2398 = vpop.permute.xlu0 %2397
      %v2400 = vsel %vm917, %v2393, 0
      %v2403 = vsel %vm917, %v2398, 0
      %2405 = vmatpush.bf16.xpose.msra.mxu0 0
      %2406 = vmatpush.bf16.xpose.msra.mxu0 0
      %2407 = vmatpush.bf16.xpose.msra.mxu0 0
      %2408 = vmatpush.bf16.xpose.msra.mxu0 0
      %2409 = vmatpush.bf16.xpose.msra.mxu0 0
      %2410 = vmatpush.bf16.xpose.msra.mxu0 0
      %2411 = vmatpush.bf16.xpose.msra.mxu0 0
      %2412 = vmatpush.bf16.xpose.msra.mxu0 %v2403
      %2413 = vmatmul.bf16.gmra.mxu0 %v2400
      %v2414 = vpop.f32.mrf.mxu0
      %v2415 = vadd.f32 %v2270, %v2414
      %v2416 = vpop.f32.mrf.mxu0
      %2417 = vdwg.mxu0
      %2418 = vst [vmem:[#allocation1] ss:$4 sm:$0xff] %v843
      %v2419 = vld.sshfl [vmem:[#allocation1] sm:$0xff pattern:$0x73625140]
      %2421 = vrot.lane.b32.xlu0 %v2419, 112
      %v2422 = vpop.permute.xlu0 %2421
      %2423 = vst [vmem:[#allocation1] ss:$4 sm:$0xff] %v843
      %v2424 = vld.sshfl [vmem:[#allocation1] sm:$0xff pattern:$0x73625140]
      %2426 = vrot.lane.b32.xlu0 %v2424, 80
      %v2427 = vpop.permute.xlu0 %2426
      %v2429 = vsel %vm917, %v2422, 0
      %v2432 = vsel %vm917, %v2427, 0
      %2434 = vmatpush.bf16.xpose.msra.mxu0 0
      %2435 = vmatpush.bf16.xpose.msra.mxu0 0
      %2436 = vmatpush.bf16.xpose.msra.mxu0 0
      %2437 = vmatpush.bf16.xpose.msra.mxu0 0
      %2438 = vmatpush.bf16.xpose.msra.mxu0 0
      %2439 = vmatpush.bf16.xpose.msra.mxu0 0
      %2440 = vmatpush.bf16.xpose.msra.mxu0 0
      %2441 = vmatpush.bf16.xpose.msra.mxu0 %v2432
      %2442 = vmatmul.bf16.gmra.mxu0 %v2429
      %v2443 = vpop.f32.mrf.mxu0
      %v2444 = vadd.f32 %v2299, %v2443
      %v2445 = vpop.f32.mrf.mxu0
      %2446 = vdwg.mxu0
      %v2447 = vsel %vm1147, %v2328, -inf
      %2448 = vmax.xlane.f32.xlu0 %v2447
      %v2449 = vpop.xlane.xlu0 %2448
      %v2450 = vsel %vm1147, %v2357, -inf
      %2451 = vmax.xlane.f32.xlu0 %v2450
      %v2452 = vpop.xlane.xlu0 %2451
      %v2453 = vsel %vm1147, %v2386, -inf
      %2454 = vmax.xlane.f32.xlu0 %v2453
      %v2455 = vpop.xlane.xlu0 %2454
      %v2456 = vsel %vm1147, %v2415, -inf
      %2457 = vmax.xlane.f32.xlu0 %v2456
      %v2458 = vpop.xlane.xlu0 %2457
      %v2459 = vsel %vm1147, %v2444, -inf
      %2460 = vmax.xlane.f32.xlu0 %v2459
      %v2461 = vpop.xlane.xlu0 %2460
      %v2462 = vsub.f32 %v2328, %v2449
      %v2463 = vsub.f32 %v2357, %v2452
      %v2464 = vsub.f32 %v2386, %v2455
      %v2465 = vsub.f32 %v2415, %v2458
      %v2466 = vsub.f32 %v2444, %v2461
      %v2467 = vmul.f32 %v2462, 1.442695
      %v2468 = vpow.pop %v2467
      %v2469 = vmul.f32 %v2463, 1.442695
      %v2470 = vpow.pop %v2469
      %v2471 = vmul.f32 %v2464, 1.442695
      %v2472 = vpow.pop %v2471
      %v2473 = vmul.f32 %v2465, 1.442695
      %v2474 = vpow.pop %v2473
      %v2475 = vmul.f32 %v2466, 1.442695
      %v2476 = vpow.pop %v2475
      %v2477 = vsel %vm1147, %v2468, 0.0
      %2478 = vadd.xlane.f32.xlu0 %v2477
      %v2479 = vpop.xlane.xlu0 %2478
      %v2480 = vsel %vm1147, %v2470, 0.0
      %2481 = vadd.xlane.f32.xlu0 %v2480
      %v2482 = vpop.xlane.xlu0 %2481
      %v2483 = vsel %vm1147, %v2472, 0.0
      %2484 = vadd.xlane.f32.xlu0 %v2483
      %v2485 = vpop.xlane.xlu0 %2484
      %v2486 = vsel %vm1147, %v2474, 0.0
      %2487 = vadd.xlane.f32.xlu0 %v2486
      %v2488 = vpop.xlane.xlu0 %2487
      %v2489 = vsel %vm1147, %v2476, 0.0
      %2490 = vadd.xlane.f32.xlu0 %v2489
      %v2491 = vpop.xlane.xlu0 %2490
      %v2492 = vrcp.pop %v2479
      %v2493 = vrcp.pop %v2482
      %v2494 = vrcp.pop %v2485
      %v2495 = vrcp.pop %v2488
      %v2496 = vrcp.pop %v2491
      %v2497 = vmul.f32 %v2468, %v2492
      %v2498 = vmul.f32 %v2470, %v2493
      %v2499 = vmul.f32 %v2472, %v2494
      %v2500 = vmul.f32 %v2474, %v2495
      %v2501 = vmul.f32 %v2476, %v2496
      %v2502 = vpack.c.bf16 %v2497, %v2497
      %v2503 = vpack.c.bf16 %v2498, %v2498
      %v2504 = vpack.c.bf16 %v2499, %v2499
      %v2505 = vpack.c.bf16 %v2500, %v2500
      %v2506 = vpack.c.bf16 %v2501, %v2501
      %2507 = vst [vmem:[#allocation1] ss:$4 sm:$0xff] %v830
      %v2508 = vld.sshfl [vmem:[#allocation1] sm:$0xff pattern:$0x73625140]
      %2510 = vrot.lane.b32.xlu0 %v2508, 48
      %v2511 = vpop.permute.xlu0 %2510
      %v2513 = vsel %vm1213, %v2502, 0
      %v2516 = vsel %vm827, %v2511, 0
      %2518 = vmatpush.bf16.msra.mxu0 0
      %2519 = vmatpush.bf16.msra.mxu0 0
      %2520 = vmatpush.bf16.msra.mxu0 0
      %2521 = vmatpush.bf16.msra.mxu0 0
      %2522 = vmatpush.bf16.msra.mxu0 0
      %2523 = vmatpush.bf16.msra.mxu0 0
      %2524 = vmatpush.bf16.msra.mxu0 0
      %2525 = vmatpush.bf16.msra.mxu0 %v2516
      %2526 = vmatmul.bf16.gmra.mxu0 %v2513
      %v2527 = vpop.f32.mrf.mxu0
      %v2528 = vadd.f32 0.0, %v2527
      %v2529 = vpop.f32.mrf.mxu0
      %2530 = vdwg.mxu0
      %2531 = vst [vmem:[#allocation1] ss:$4 sm:$0xff] %v834
      %v2532 = vld.sshfl [vmem:[#allocation1] sm:$0xff pattern:$0x73625140]
      %2534 = vrot.lane.b32.xlu0 %v2532, 48
      %v2535 = vpop.permute.xlu0 %2534
      %v2537 = vsel %vm1213, %v2503, 0
      %v2540 = vsel %vm827, %v2535, 0
      %2542 = vmatpush.bf16.msra.mxu0 0
      %2543 = vmatpush.bf16.msra.mxu0 0
      %2544 = vmatpush.bf16.msra.mxu0 0
      %2545 = vmatpush.bf16.msra.mxu0 0
      %2546 = vmatpush.bf16.msra.mxu0 0
      %2547 = vmatpush.bf16.msra.mxu0 0
      %2548 = vmatpush.bf16.msra.mxu0 0
      %2549 = vmatpush.bf16.msra.mxu0 %v2540
      %2550 = vmatmul.bf16.gmra.mxu0 %v2537
      %v2551 = vpop.f32.mrf.mxu0
      %v2552 = vadd.f32 0.0, %v2551
      %v2553 = vpop.f32.mrf.mxu0
      %2554 = vdwg.mxu0
      %2555 = vst [vmem:[#allocation1] ss:$4 sm:$0xff] %v837
      %v2556 = vld.sshfl [vmem:[#allocation1] sm:$0xff pattern:$0x73625140]
      %2558 = vrot.lane.b32.xlu0 %v2556, 48
      %v2559 = vpop.permute.xlu0 %2558
      %v2561 = vsel %vm1213, %v2504, 0
      %v2564 = vsel %vm827, %v2559, 0
      %2566 = vmatpush.bf16.msra.mxu0 0
      %2567 = vmatpush.bf16.msra.mxu0 0
      %2568 = vmatpush.bf16.msra.mxu0 0
      %2569 = vmatpush.bf16.msra.mxu0 0
      %2570 = vmatpush.bf16.msra.mxu0 0
      %2571 = vmatpush.bf16.msra.mxu0 0
      %2572 = vmatpush.bf16.msra.mxu0 0
      %2573 = vmatpush.bf16.msra.mxu0 %v2564
      %2574 = vmatmul.bf16.gmra.mxu0 %v2561
      %v2575 = vpop.f32.mrf.mxu0
      %v2576 = vadd.f32 0.0, %v2575
      %v2577 = vpop.f32.mrf.mxu0
      %2578 = vdwg.mxu0
      %2579 = vst [vmem:[#allocation1] ss:$4 sm:$0xff] %v840
      %v2580 = vld.sshfl [vmem:[#allocation1] sm:$0xff pattern:$0x73625140]
      %2582 = vrot.lane.b32.xlu0 %v2580, 48
      %v2583 = vpop.permute.xlu0 %2582
      %v2585 = vsel %vm1213, %v2505, 0
      %v2588 = vsel %vm827, %v2583, 0
      %2590 = vmatpush.bf16.msra.mxu0 0
      %2591 = vmatpush.bf16.msra.mxu0 0
      %2592 = vmatpush.bf16.msra.mxu0 0
      %2593 = vmatpush.bf16.msra.mxu0 0
      %2594 = vmatpush.bf16.msra.mxu0 0
      %2595 = vmatpush.bf16.msra.mxu0 0
      %2596 = vmatpush.bf16.msra.mxu0 0
      %2597 = vmatpush.bf16.msra.mxu0 %v2588
      %2598 = vmatmul.bf16.gmra.mxu0 %v2585
      %v2599 = vpop.f32.mrf.mxu0
      %v2600 = vadd.f32 0.0, %v2599
      %v2601 = vpop.f32.mrf.mxu0
      %2602 = vdwg.mxu0
      %2603 = vst [vmem:[#allocation1] ss:$4 sm:$0xff] %v843
      %v2604 = vld.sshfl [vmem:[#allocation1] sm:$0xff pattern:$0x73625140]
      %2606 = vrot.lane.b32.xlu0 %v2604, 48
      %v2607 = vpop.permute.xlu0 %2606
      %v2609 = vsel %vm1213, %v2506, 0
      %v2612 = vsel %vm827, %v2607, 0
      %2614 = vmatpush.bf16.msra.mxu0 0
      %2615 = vmatpush.bf16.msra.mxu0 0
      %2616 = vmatpush.bf16.msra.mxu0 0
      %2617 = vmatpush.bf16.msra.mxu0 0
      %2618 = vmatpush.bf16.msra.mxu0 0
      %2619 = vmatpush.bf16.msra.mxu0 0
      %2620 = vmatpush.bf16.msra.mxu0 0
      %2621 = vmatpush.bf16.msra.mxu0 %v2612
      %2622 = vmatmul.bf16.gmra.mxu0 %v2609
      %v2623 = vpop.f32.mrf.mxu0
      %v2624 = vadd.f32 0.0, %v2623
      %v2625 = vpop.f32.mrf.mxu0
      %2626 = vdwg.mxu0
      %2627 = vst [vmem:[#allocation1] ss:$4 sm:$0xff] %v899
      %v2628 = vld.sshfl [vmem:[#allocation1] sm:$0xff pattern:$0x73625140]
      %2630 = vrot.lane.b32.xlu0 %v2628, 48
      %v2631 = vpop.permute.xlu0 %2630
      %v2633 = vsel %vm827, %v2631, 0
      %2635 = vmatpush.bf16.msra.mxu0 0
      %2636 = vmatpush.bf16.msra.mxu0 0
      %2637 = vmatpush.bf16.msra.mxu0 0
      %2638 = vmatpush.bf16.msra.mxu0 0
      %2639 = vmatpush.bf16.msra.mxu0 0
      %2640 = vmatpush.bf16.msra.mxu0 0
      %2641 = vmatpush.bf16.msra.mxu0 0
      %2642 = vmatpush.bf16.msra.mxu0 %v2633
      %2643 = vmatmul.bf16.gmra.mxu0 %v2513
      %v2644 = vpop.f32.mrf.mxu0
      %v2645 = vadd.f32 0.0, %v2644
      %v2646 = vpop.f32.mrf.mxu0
      %2647 = vdwg.mxu0
      %2648 = vst [vmem:[#allocation1] ss:$4 sm:$0xff] %v902
      %v2649 = vld.sshfl [vmem:[#allocation1] sm:$0xff pattern:$0x73625140]
      %2651 = vrot.lane.b32.xlu0 %v2649, 48
      %v2652 = vpop.permute.xlu0 %2651
      %v2654 = vsel %vm827, %v2652, 0
      %2656 = vmatpush.bf16.msra.mxu0 0
      %2657 = vmatpush.bf16.msra.mxu0 0
      %2658 = vmatpush.bf16.msra.mxu0 0
      %2659 = vmatpush.bf16.msra.mxu0 0
      %2660 = vmatpush.bf16.msra.mxu0 0
      %2661 = vmatpush.bf16.msra.mxu0 0
      %2662 = vmatpush.bf16.msra.mxu0 0
      %2663 = vmatpush.bf16.msra.mxu0 %v2654
      %2664 = vmatmul.bf16.gmra.mxu0 %v2537
      %v2665 = vpop.f32.mrf.mxu0
      %v2666 = vadd.f32 0.0, %v2665
      %v2667 = vpop.f32.mrf.mxu0
      %2668 = vdwg.mxu0
      %2669 = vst [vmem:[#allocation1] ss:$4 sm:$0xff] %v905
      %v2670 = vld.sshfl [vmem:[#allocation1] sm:$0xff pattern:$0x73625140]
      %2672 = vrot.lane.b32.xlu0 %v2670, 48
      %v2673 = vpop.permute.xlu0 %2672
      %v2675 = vsel %vm827, %v2673, 0
      %2677 = vmatpush.bf16.msra.mxu0 0
      %2678 = vmatpush.bf16.msra.mxu0 0
      %2679 = vmatpush.bf16.msra.mxu0 0
      %2680 = vmatpush.bf16.msra.mxu0 0
      %2681 = vmatpush.bf16.msra.mxu0 0
      %2682 = vmatpush.bf16.msra.mxu0 0
      %2683 = vmatpush.bf16.msra.mxu0 0
      %2684 = vmatpush.bf16.msra.mxu0 %v2675
      %2685 = vmatmul.bf16.gmra.mxu0 %v2561
      %v2686 = vpop.f32.mrf.mxu0
      %v2687 = vadd.f32 0.0, %v2686
      %v2688 = vpop.f32.mrf.mxu0
      %2689 = vdwg.mxu0
      %2690 = vst [vmem:[#allocation1] ss:$4 sm:$0xff] %v908
      %v2691 = vld.sshfl [vmem:[#allocation1] sm:$0xff pattern:$0x73625140]
      %2693 = vrot.lane.b32.xlu0 %v2691, 48
      %v2694 = vpop.permute.xlu0 %2693
      %v2696 = vsel %vm827, %v2694, 0
      %2698 = vmatpush.bf16.msra.mxu0 0
      %2699 = vmatpush.bf16.msra.mxu0 0
      %2700 = vmatpush.bf16.msra.mxu0 0
      %2701 = vmatpush.bf16.msra.mxu0 0
      %2702 = vmatpush.bf16.msra.mxu0 0
      %2703 = vmatpush.bf16.msra.mxu0 0
      %2704 = vmatpush.bf16.msra.mxu0 0
      %2705 = vmatpush.bf16.msra.mxu0 %v2696
      %2706 = vmatmul.bf16.gmra.mxu0 %v2585
      %v2707 = vpop.f32.mrf.mxu0
      %v2708 = vadd.f32 0.0, %v2707
      %v2709 = vpop.f32.mrf.mxu0
      %2710 = vdwg.mxu0
      %2711 = vst [vmem:[#allocation1] ss:$4 sm:$0xff] %v911
      %v2712 = vld.sshfl [vmem:[#allocation1] sm:$0xff pattern:$0x73625140]
      %2714 = vrot.lane.b32.xlu0 %v2712, 48
      %v2715 = vpop.permute.xlu0 %2714
      %v2717 = vsel %vm827, %v2715, 0
      %2719 = vmatpush.bf16.msra.mxu0 0
      %2720 = vmatpush.bf16.msra.mxu0 0
      %2721 = vmatpush.bf16.msra.mxu0 0
      %2722 = vmatpush.bf16.msra.mxu0 0
      %2723 = vmatpush.bf16.msra.mxu0 0
      %2724 = vmatpush.bf16.msra.mxu0 0
      %2725 = vmatpush.bf16.msra.mxu0 0
      %2726 = vmatpush.bf16.msra.mxu0 %v2717
      %2727 = vmatmul.bf16.gmra.mxu0 %v2609
      %v2728 = vpop.f32.mrf.mxu0
      %v2729 = vadd.f32 0.0, %v2728
      %v2730 = vpop.f32.mrf.mxu0
      %2731 = vdwg.mxu0
      %2737 = vst [vmem:[#allocation1] ss:$2 sm:$0xff] %v2528
      %s2738 = scalar_lea.vmem [#allocation1], 1
      %2739 = vst [vmem:[%s2738] ss:$2 sm:$0xff] %v2552
      %s2740 = scalar_lea.vmem [#allocation1], 16
      %2741 = vst [vmem:[%s2740] ss:$2 sm:$0xff] %v2576
      %s2742 = scalar_lea.vmem [#allocation1], 17
      %2743 = vst [vmem:[%s2742] ss:$2 sm:$0xff] %v2600
      %s2744 = scalar_lea.vmem [#allocation1], 32
      %2745 = vst [vmem:[%s2744] ss:$2 sm:$0xff] %v2624
      %v2746 = vld.sshfl [vmem:[#allocation1] sm:$0xff pattern:$0x75316420]
      %v2747 = vld.sshfl [vmem:[#allocation1 + $0x10] sm:$0xff pattern:$0x75316420]
      %v2748 = vld.sshfl [vmem:[#allocation1 + $0x20] sm:$0xff pattern:$0x75316420]
      %v2752 = vpack.c.bf16 %v2746, %v2746
      %v2753 = vpack.c.bf16 %v2747, %v2747
      %v2754 = vpack.c.bf16 %v2748, %v2748
      %2758 = vrot.lane.b32.xlu0 %v2752, 32
      %v2759 = vpop.permute.xlu0 %2758
      %2760 = vrot.lane.b32.xlu0 %v2753, 32
      %v2761 = vpop.permute.xlu0 %2760
      %2762 = vrot.lane.b32.xlu0 %v2754, 32
      %v2763 = vpop.permute.xlu0 %2762
      %vm2767 = vcmask 322816
      %2768 = vst.msk [vmem:[#allocation2] sm:$0xf] %vm2767, %v2759
      %2769 = vst.msk [vmem:[#allocation2 + $0x4] sm:$0xf] %vm2767, %v2761
      %vm2770 = vcmask 320768
      %2771 = vst.msk [vmem:[#allocation2 + $0x8] sm:$0x3] %vm2770, %v2763
      %2777 = vst [vmem:[#allocation1] ss:$2 sm:$0xff] %v2645
      %s2778 = scalar_lea.vmem [#allocation1], 1
      %2779 = vst [vmem:[%s2778] ss:$2 sm:$0xff] %v2666
      %s2780 = scalar_lea.vmem [#allocation1], 16
      %2781 = vst [vmem:[%s2780] ss:$2 sm:$0xff] %v2687
      %s2782 = scalar_lea.vmem [#allocation1], 17
      %2783 = vst [vmem:[%s2782] ss:$2 sm:$0xff] %v2708
      %s2784 = scalar_lea.vmem [#allocation1], 32
      %2785 = vst [vmem:[%s2784] ss:$2 sm:$0xff] %v2729
      %v2786 = vld.sshfl [vmem:[#allocation1] sm:$0xff pattern:$0x75316420]
      %v2787 = vld.sshfl [vmem:[#allocation1 + $0x10] sm:$0xff pattern:$0x75316420]
      %v2788 = vld.sshfl [vmem:[#allocation1 + $0x20] sm:$0xff pattern:$0x75316420]
      %v2792 = vpack.c.bf16 %v2786, %v2786
      %v2793 = vpack.c.bf16 %v2787, %v2787
      %v2794 = vpack.c.bf16 %v2788, %v2788
      %2798 = vrot.lane.b32.xlu0 %v2792, 40
      %v2799 = vpop.permute.xlu0 %2798
      %2800 = vrot.lane.b32.xlu0 %v2793, 40
      %v2801 = vpop.permute.xlu0 %2800
      %2802 = vrot.lane.b32.xlu0 %v2794, 40
      %v2803 = vpop.permute.xlu0 %2802
      %vm2807 = vcmask 388416
      %2808 = vst.msk [vmem:[#allocation2] sm:$0xf] %vm2807, %v2799
      %2809 = vst.msk [vmem:[#allocation2 + $0x4] sm:$0xf] %vm2807, %v2801
      %vm2810 = vcmask 386368
      %2811 = vst.msk [vmem:[#allocation2 + $0x8] sm:$0x3] %vm2810, %v2803
      %2812 = vst [vmem:[#allocation1] ss:$4 sm:$0xff] %v899
      %v2813 = vld.sshfl [vmem:[#allocation1] sm:$0xff pattern:$0x73625140]
      %2815 = vrot.lane.b32.xlu0 %v2813, 104
      %v2816 = vpop.permute.xlu0 %2815
      %2817 = vst [vmem:[#allocation1] ss:$4 sm:$0xff] %v899
      %v2818 = vld.sshfl [vmem:[#allocation1] sm:$0xff pattern:$0x73625140]
      %2820 = vrot.lane.b32.xlu0 %v2818, 72
      %v2821 = vpop.permute.xlu0 %2820
      %v2823 = vsel %vm917, %v2816, 0
      %v2826 = vsel %vm917, %v2821, 0
      %2828 = vmatpush.bf16.xpose.msra.mxu0 0
      %2829 = vmatpush.bf16.xpose.msra.mxu0 0
      %2830 = vmatpush.bf16.xpose.msra.mxu0 0
      %2831 = vmatpush.bf16.xpose.msra.mxu0 0
      %2832 = vmatpush.bf16.xpose.msra.mxu0 0
      %2833 = vmatpush.bf16.xpose.msra.mxu0 0
      %2834 = vmatpush.bf16.xpose.msra.mxu0 0
      %2835 = vmatpush.bf16.xpose.msra.mxu0 %v2826
      %2836 = vmatmul.bf16.gmra.mxu0 %v2823
      %v2837 = vpop.f32.mrf.mxu0
      %v2838 = vadd.f32 0.0, %v2837
      %v2839 = vpop.f32.mrf.mxu0
      %2840 = vdwg.mxu0
      %2841 = vst [vmem:[#allocation1] ss:$4 sm:$0xff] %v902
      %v2842 = vld.sshfl [vmem:[#allocation1] sm:$0xff pattern:$0x73625140]
      %2844 = vrot.lane.b32.xlu0 %v2842, 104
      %v2845 = vpop.permute.xlu0 %2844
      %2846 = vst [vmem:[#allocation1] ss:$4 sm:$0xff] %v902
      %v2847 = vld.sshfl [vmem:[#allocation1] sm:$0xff pattern:$0x73625140]
      %2849 = vrot.lane.b32.xlu0 %v2847, 72
      %v2850 = vpop.permute.xlu0 %2849
      %v2852 = vsel %vm917, %v2845, 0
      %v2855 = vsel %vm917, %v2850, 0
      %2857 = vmatpush.bf16.xpose.msra.mxu0 0
      %2858 = vmatpush.bf16.xpose.msra.mxu0 0
      %2859 = vmatpush.bf16.xpose.msra.mxu0 0
      %2860 = vmatpush.bf16.xpose.msra.mxu0 0
      %2861 = vmatpush.bf16.xpose.msra.mxu0 0
      %2862 = vmatpush.bf16.xpose.msra.mxu0 0
      %2863 = vmatpush.bf16.xpose.msra.mxu0 0
      %2864 = vmatpush.bf16.xpose.msra.mxu0 %v2855
      %2865 = vmatmul.bf16.gmra.mxu0 %v2852
      %v2866 = vpop.f32.mrf.mxu0
      %v2867 = vadd.f32 0.0, %v2866
      %v2868 = vpop.f32.mrf.mxu0
      %2869 = vdwg.mxu0
      %2870 = vst [vmem:[#allocation1] ss:$4 sm:$0xff] %v905
      %v2871 = vld.sshfl [vmem:[#allocation1] sm:$0xff pattern:$0x73625140]
      %2873 = vrot.lane.b32.xlu0 %v2871, 104
      %v2874 = vpop.permute.xlu0 %2873
      %2875 = vst [vmem:[#allocation1] ss:$4 sm:$0xff] %v905
      %v2876 = vld.sshfl [vmem:[#allocation1] sm:$0xff pattern:$0x73625140]
      %2878 = vrot.lane.b32.xlu0 %v2876, 72
      %v2879 = vpop.permute.xlu0 %2878
      %v2881 = vsel %vm917, %v2874, 0
      %v2884 = vsel %vm917, %v2879, 0
      %2886 = vmatpush.bf16.xpose.msra.mxu0 0
      %2887 = vmatpush.bf16.xpose.msra.mxu0 0
      %2888 = vmatpush.bf16.xpose.msra.mxu0 0
      %2889 = vmatpush.bf16.xpose.msra.mxu0 0
      %2890 = vmatpush.bf16.xpose.msra.mxu0 0
      %2891 = vmatpush.bf16.xpose.msra.mxu0 0
      %2892 = vmatpush.bf16.xpose.msra.mxu0 0
      %2893 = vmatpush.bf16.xpose.msra.mxu0 %v2884
      %2894 = vmatmul.bf16.gmra.mxu0 %v2881
      %v2895 = vpop.f32.mrf.mxu0
      %v2896 = vadd.f32 0.0, %v2895
      %v2897 = vpop.f32.mrf.mxu0
      %2898 = vdwg.mxu0
      %2899 = vst [vmem:[#allocation1] ss:$4 sm:$0xff] %v908
      %v2900 = vld.sshfl [vmem:[#allocation1] sm:$0xff pattern:$0x73625140]
      %2902 = vrot.lane.b32.xlu0 %v2900, 104
      %v2903 = vpop.permute.xlu0 %2902
      %2904 = vst [vmem:[#allocation1] ss:$4 sm:$0xff] %v908
      %v2905 = vld.sshfl [vmem:[#allocation1] sm:$0xff pattern:$0x73625140]
      %2907 = vrot.lane.b32.xlu0 %v2905, 72
      %v2908 = vpop.permute.xlu0 %2907
      %v2910 = vsel %vm917, %v2903, 0
      %v2913 = vsel %vm917, %v2908, 0
      %2915 = vmatpush.bf16.xpose.msra.mxu0 0
      %2916 = vmatpush.bf16.xpose.msra.mxu0 0
      %2917 = vmatpush.bf16.xpose.msra.mxu0 0
      %2918 = vmatpush.bf16.xpose.msra.mxu0 0
      %2919 = vmatpush.bf16.xpose.msra.mxu0 0
      %2920 = vmatpush.bf16.xpose.msra.mxu0 0
      %2921 = vmatpush.bf16.xpose.msra.mxu0 0
      %2922 = vmatpush.bf16.xpose.msra.mxu0 %v2913
      %2923 = vmatmul.bf16.gmra.mxu0 %v2910
      %v2924 = vpop.f32.mrf.mxu0
      %v2925 = vadd.f32 0.0, %v2924
      %v2926 = vpop.f32.mrf.mxu0
      %2927 = vdwg.mxu0
      %2928 = vst [vmem:[#allocation1] ss:$4 sm:$0xff] %v911
      %v2929 = vld.sshfl [vmem:[#allocation1] sm:$0xff pattern:$0x73625140]
      %2931 = vrot.lane.b32.xlu0 %v2929, 104
      %v2932 = vpop.permute.xlu0 %2931
      %2933 = vst [vmem:[#allocation1] ss:$4 sm:$0xff] %v911
      %v2934 = vld.sshfl [vmem:[#allocation1] sm:$0xff pattern:$0x73625140]
      %2936 = vrot.lane.b32.xlu0 %v2934, 72
      %v2937 = vpop.permute.xlu0 %2936
      %v2939 = vsel %vm917, %v2932, 0
      %v2942 = vsel %vm917, %v2937, 0
      %2944 = vmatpush.bf16.xpose.msra.mxu0 0
      %2945 = vmatpush.bf16.xpose.msra.mxu0 0
      %2946 = vmatpush.bf16.xpose.msra.mxu0 0
      %2947 = vmatpush.bf16.xpose.msra.mxu0 0
      %2948 = vmatpush.bf16.xpose.msra.mxu0 0
      %2949 = vmatpush.bf16.xpose.msra.mxu0 0
      %2950 = vmatpush.bf16.xpose.msra.mxu0 0
      %2951 = vmatpush.bf16.xpose.msra.mxu0 %v2942
      %2952 = vmatmul.bf16.gmra.mxu0 %v2939
      %v2953 = vpop.f32.mrf.mxu0
      %v2954 = vadd.f32 0.0, %v2953
      %v2955 = vpop.f32.mrf.mxu0
      %2956 = vdwg.mxu0
      %2957 = vst [vmem:[#allocation1] ss:$4 sm:$0xff] %v830
      %v2958 = vld.sshfl [vmem:[#allocation1] sm:$0xff pattern:$0x73625140]
      %2960 = vrot.lane.b32.xlu0 %v2958, 104
      %v2961 = vpop.permute.xlu0 %2960
      %2962 = vst [vmem:[#allocation1] ss:$4 sm:$0xff] %v830
      %v2963 = vld.sshfl [vmem:[#allocation1] sm:$0xff pattern:$0x73625140]
      %2965 = vrot.lane.b32.xlu0 %v2963, 72
      %v2966 = vpop.permute.xlu0 %2965
      %v2968 = vsel %vm917, %v2961, 0
      %v2971 = vsel %vm917, %v2966, 0
      %2973 = vmatpush.bf16.xpose.msra.mxu0 0
      %2974 = vmatpush.bf16.xpose.msra.mxu0 0
      %2975 = vmatpush.bf16.xpose.msra.mxu0 0
      %2976 = vmatpush.bf16.xpose.msra.mxu0 0
      %2977 = vmatpush.bf16.xpose.msra.mxu0 0
      %2978 = vmatpush.bf16.xpose.msra.mxu0 0
      %2979 = vmatpush.bf16.xpose.msra.mxu0 0
      %2980 = vmatpush.bf16.xpose.msra.mxu0 %v2971
      %2981 = vmatmul.bf16.gmra.mxu0 %v2968
      %v2982 = vpop.f32.mrf.mxu0
      %v2983 = vadd.f32 %v2838, %v2982
      %v2984 = vpop.f32.mrf.mxu0
      %2985 = vdwg.mxu0
      %2986 = vst [vmem:[#allocation1] ss:$4 sm:$0xff] %v834
      %v2987 = vld.sshfl [vmem:[#allocation1] sm:$0xff pattern:$0x73625140]
      %2989 = vrot.lane.b32.xlu0 %v2987, 104
      %v2990 = vpop.permute.xlu0 %2989
      %2991 = vst [vmem:[#allocation1] ss:$4 sm:$0xff] %v834
      %v2992 = vld.sshfl [vmem:[#allocation1] sm:$0xff pattern:$0x73625140]
      %2994 = vrot.lane.b32.xlu0 %v2992, 72
      %v2995 = vpop.permute.xlu0 %2994
      %v2997 = vsel %vm917, %v2990, 0
      %v3000 = vsel %vm917, %v2995, 0
      %3002 = vmatpush.bf16.xpose.msra.mxu0 0
      %3003 = vmatpush.bf16.xpose.msra.mxu0 0
      %3004 = vmatpush.bf16.xpose.msra.mxu0 0
      %3005 = vmatpush.bf16.xpose.msra.mxu0 0
      %3006 = vmatpush.bf16.xpose.msra.mxu0 0
      %3007 = vmatpush.bf16.xpose.msra.mxu0 0
      %3008 = vmatpush.bf16.xpose.msra.mxu0 0
      %3009 = vmatpush.bf16.xpose.msra.mxu0 %v3000
      %3010 = vmatmul.bf16.gmra.mxu0 %v2997
      %v3011 = vpop.f32.mrf.mxu0
      %v3012 = vadd.f32 %v2867, %v3011
      %v3013 = vpop.f32.mrf.mxu0
      %3014 = vdwg.mxu0
      %3015 = vst [vmem:[#allocation1] ss:$4 sm:$0xff] %v837
      %v3016 = vld.sshfl [vmem:[#allocation1] sm:$0xff pattern:$0x73625140]
      %3018 = vrot.lane.b32.xlu0 %v3016, 104
      %v3019 = vpop.permute.xlu0 %3018
      %3020 = vst [vmem:[#allocation1] ss:$4 sm:$0xff] %v837
      %v3021 = vld.sshfl [vmem:[#allocation1] sm:$0xff pattern:$0x73625140]
      %3023 = vrot.lane.b32.xlu0 %v3021, 72
      %v3024 = vpop.permute.xlu0 %3023
      %v3026 = vsel %vm917, %v3019, 0
      %v3029 = vsel %vm917, %v3024, 0
      %3031 = vmatpush.bf16.xpose.msra.mxu0 0
      %3032 = vmatpush.bf16.xpose.msra.mxu0 0
      %3033 = vmatpush.bf16.xpose.msra.mxu0 0
      %3034 = vmatpush.bf16.xpose.msra.mxu0 0
      %3035 = vmatpush.bf16.xpose.msra.mxu0 0
      %3036 = vmatpush.bf16.xpose.msra.mxu0 0
      %3037 = vmatpush.bf16.xpose.msra.mxu0 0
      %3038 = vmatpush.bf16.xpose.msra.mxu0 %v3029
      %3039 = vmatmul.bf16.gmra.mxu0 %v3026
      %v3040 = vpop.f32.mrf.mxu0
      %v3041 = vadd.f32 %v2896, %v3040
      %v3042 = vpop.f32.mrf.mxu0
      %3043 = vdwg.mxu0
      %3044 = vst [vmem:[#allocation1] ss:$4 sm:$0xff] %v840
      %v3045 = vld.sshfl [vmem:[#allocation1] sm:$0xff pattern:$0x73625140]
      %3047 = vrot.lane.b32.xlu0 %v3045, 104
      %v3048 = vpop.permute.xlu0 %3047
      %3049 = vst [vmem:[#allocation1] ss:$4 sm:$0xff] %v840
      %v3050 = vld.sshfl [vmem:[#allocation1] sm:$0xff pattern:$0x73625140]
      %3052 = vrot.lane.b32.xlu0 %v3050, 72
      %v3053 = vpop.permute.xlu0 %3052
      %v3055 = vsel %vm917, %v3048, 0
      %v3058 = vsel %vm917, %v3053, 0
      %3060 = vmatpush.bf16.xpose.msra.mxu0 0
      %3061 = vmatpush.bf16.xpose.msra.mxu0 0
      %3062 = vmatpush.bf16.xpose.msra.mxu0 0
      %3063 = vmatpush.bf16.xpose.msra.mxu0 0
      %3064 = vmatpush.bf16.xpose.msra.mxu0 0
      %3065 = vmatpush.bf16.xpose.msra.mxu0 0
      %3066 = vmatpush.bf16.xpose.msra.mxu0 0
      %3067 = vmatpush.bf16.xpose.msra.mxu0 %v3058
      %3068 = vmatmul.bf16.gmra.mxu0 %v3055
      %v3069 = vpop.f32.mrf.mxu0
      %v3070 = vadd.f32 %v2925, %v3069
      %v3071 = vpop.f32.mrf.mxu0
      %3072 = vdwg.mxu0
      %3073 = vst [vmem:[#allocation1] ss:$4 sm:$0xff] %v843
      %v3074 = vld.sshfl [vmem:[#allocation1] sm:$0xff pattern:$0x73625140]
      %3076 = vrot.lane.b32.xlu0 %v3074, 104
      %v3077 = vpop.permute.xlu0 %3076
      %3078 = vst [vmem:[#allocation1] ss:$4 sm:$0xff] %v843
      %v3079 = vld.sshfl [vmem:[#allocation1] sm:$0xff pattern:$0x73625140]
      %3081 = vrot.lane.b32.xlu0 %v3079, 72
      %v3082 = vpop.permute.xlu0 %3081
      %v3084 = vsel %vm917, %v3077, 0
      %v3087 = vsel %vm917, %v3082, 0
      %3089 = vmatpush.bf16.xpose.msra.mxu0 0
      %3090 = vmatpush.bf16.xpose.msra.mxu0 0
      %3091 = vmatpush.bf16.xpose.msra.mxu0 0
      %3092 = vmatpush.bf16.xpose.msra.mxu0 0
      %3093 = vmatpush.bf16.xpose.msra.mxu0 0
      %3094 = vmatpush.bf16.xpose.msra.mxu0 0
      %3095 = vmatpush.bf16.xpose.msra.mxu0 0
      %3096 = vmatpush.bf16.xpose.msra.mxu0 %v3087
      %3097 = vmatmul.bf16.gmra.mxu0 %v3084
      %v3098 = vpop.f32.mrf.mxu0
      %v3099 = vadd.f32 %v2954, %v3098
      %v3100 = vpop.f32.mrf.mxu0
      %3101 = vdwg.mxu0
      %v3102 = vsel %vm1147, %v2983, -inf
      %3103 = vmax.xlane.f32.xlu0 %v3102
      %v3104 = vpop.xlane.xlu0 %3103
      %v3105 = vsel %vm1147, %v3012, -inf
      %3106 = vmax.xlane.f32.xlu0 %v3105
      %v3107 = vpop.xlane.xlu0 %3106
      %v3108 = vsel %vm1147, %v3041, -inf
      %3109 = vmax.xlane.f32.xlu0 %v3108
      %v3110 = vpop.xlane.xlu0 %3109
      %v3111 = vsel %vm1147, %v3070, -inf
      %3112 = vmax.xlane.f32.xlu0 %v3111
      %v3113 = vpop.xlane.xlu0 %3112
      %v3114 = vsel %vm1147, %v3099, -inf
      %3115 = vmax.xlane.f32.xlu0 %v3114
      %v3116 = vpop.xlane.xlu0 %3115
      %v3117 = vsub.f32 %v2983, %v3104
      %v3118 = vsub.f32 %v3012, %v3107
      %v3119 = vsub.f32 %v3041, %v3110
      %v3120 = vsub.f32 %v3070, %v3113
      %v3121 = vsub.f32 %v3099, %v3116
      %v3122 = vmul.f32 %v3117, 1.442695
      %v3123 = vpow.pop %v3122
      %v3124 = vmul.f32 %v3118, 1.442695
      %v3125 = vpow.pop %v3124
      %v3126 = vmul.f32 %v3119, 1.442695
      %v3127 = vpow.pop %v3126
      %v3128 = vmul.f32 %v3120, 1.442695
      %v3129 = vpow.pop %v3128
      %v3130 = vmul.f32 %v3121, 1.442695
      %v3131 = vpow.pop %v3130
      %v3132 = vsel %vm1147, %v3123, 0.0
      %3133 = vadd.xlane.f32.xlu0 %v3132
      %v3134 = vpop.xlane.xlu0 %3133
      %v3135 = vsel %vm1147, %v3125, 0.0
      %3136 = vadd.xlane.f32.xlu0 %v3135
      %v3137 = vpop.xlane.xlu0 %3136
      %v3138 = vsel %vm1147, %v3127, 0.0
      %3139 = vadd.xlane.f32.xlu0 %v3138
      %v3140 = vpop.xlane.xlu0 %3139
      %v3141 = vsel %vm1147, %v3129, 0.0
      %3142 = vadd.xlane.f32.xlu0 %v3141
      %v3143 = vpop.xlane.xlu0 %3142
      %v3144 = vsel %vm1147, %v3131, 0.0
      %3145 = vadd.xlane.f32.xlu0 %v3144
      %v3146 = vpop.xlane.xlu0 %3145
      %v3147 = vrcp.pop %v3134
      %v3148 = vrcp.pop %v3137
      %v3149 = vrcp.pop %v3140
      %v3150 = vrcp.pop %v3143
      %v3151 = vrcp.pop %v3146
      %v3152 = vmul.f32 %v3123, %v3147
      %v3153 = vmul.f32 %v3125, %v3148
      %v3154 = vmul.f32 %v3127, %v3149
      %v3155 = vmul.f32 %v3129, %v3150
      %v3156 = vmul.f32 %v3131, %v3151
      %v3157 = vpack.c.bf16 %v3152, %v3152
      %v3158 = vpack.c.bf16 %v3153, %v3153
      %v3159 = vpack.c.bf16 %v3154, %v3154
      %v3160 = vpack.c.bf16 %v3155, %v3155
      %v3161 = vpack.c.bf16 %v3156, %v3156
      %3162 = vst [vmem:[#allocation1] ss:$4 sm:$0xff] %v830
      %v3163 = vld.sshfl [vmem:[#allocation1] sm:$0xff pattern:$0x73625140]
      %3165 = vrot.lane.b32.xlu0 %v3163, 40
      %v3166 = vpop.permute.xlu0 %3165
      %v3168 = vsel %vm1213, %v3157, 0
      %v3171 = vsel %vm827, %v3166, 0
      %3173 = vmatpush.bf16.msra.mxu0 0
      %3174 = vmatpush.bf16.msra.mxu0 0
      %3175 = vmatpush.bf16.msra.mxu0 0
      %3176 = vmatpush.bf16.msra.mxu0 0
      %3177 = vmatpush.bf16.msra.mxu0 0
      %3178 = vmatpush.bf16.msra.mxu0 0
      %3179 = vmatpush.bf16.msra.mxu0 0
      %3180 = vmatpush.bf16.msra.mxu0 %v3171
      %3181 = vmatmul.bf16.gmra.mxu0 %v3168
      %v3182 = vpop.f32.mrf.mxu0
      %v3183 = vadd.f32 0.0, %v3182
      %v3184 = vpop.f32.mrf.mxu0
      %3185 = vdwg.mxu0
      %3186 = vst [vmem:[#allocation1] ss:$4 sm:$0xff] %v834
      %v3187 = vld.sshfl [vmem:[#allocation1] sm:$0xff pattern:$0x73625140]
      %3189 = vrot.lane.b32.xlu0 %v3187, 40
      %v3190 = vpop.permute.xlu0 %3189
      %v3192 = vsel %vm1213, %v3158, 0
      %v3195 = vsel %vm827, %v3190, 0
      %3197 = vmatpush.bf16.msra.mxu0 0
      %3198 = vmatpush.bf16.msra.mxu0 0
      %3199 = vmatpush.bf16.msra.mxu0 0
      %3200 = vmatpush.bf16.msra.mxu0 0
      %3201 = vmatpush.bf16.msra.mxu0 0
      %3202 = vmatpush.bf16.msra.mxu0 0
      %3203 = vmatpush.bf16.msra.mxu0 0
      %3204 = vmatpush.bf16.msra.mxu0 %v3195
      %3205 = vmatmul.bf16.gmra.mxu0 %v3192
      %v3206 = vpop.f32.mrf.mxu0
      %v3207 = vadd.f32 0.0, %v3206
      %v3208 = vpop.f32.mrf.mxu0
      %3209 = vdwg.mxu0
      %3210 = vst [vmem:[#allocation1] ss:$4 sm:$0xff] %v837
      %v3211 = vld.sshfl [vmem:[#allocation1] sm:$0xff pattern:$0x73625140]
      %3213 = vrot.lane.b32.xlu0 %v3211, 40
      %v3214 = vpop.permute.xlu0 %3213
      %v3216 = vsel %vm1213, %v3159, 0
      %v3219 = vsel %vm827, %v3214, 0
      %3221 = vmatpush.bf16.msra.mxu0 0
      %3222 = vmatpush.bf16.msra.mxu0 0
      %3223 = vmatpush.bf16.msra.mxu0 0
      %3224 = vmatpush.bf16.msra.mxu0 0
      %3225 = vmatpush.bf16.msra.mxu0 0
      %3226 = vmatpush.bf16.msra.mxu0 0
      %3227 = vmatpush.bf16.msra.mxu0 0
      %3228 = vmatpush.bf16.msra.mxu0 %v3219
      %3229 = vmatmul.bf16.gmra.mxu0 %v3216
      %v3230 = vpop.f32.mrf.mxu0
      %v3231 = vadd.f32 0.0, %v3230
      %v3232 = vpop.f32.mrf.mxu0
      %3233 = vdwg.mxu0
      %3234 = vst [vmem:[#allocation1] ss:$4 sm:$0xff] %v840
      %v3235 = vld.sshfl [vmem:[#allocation1] sm:$0xff pattern:$0x73625140]
      %3237 = vrot.lane.b32.xlu0 %v3235, 40
      %v3238 = vpop.permute.xlu0 %3237
      %v3240 = vsel %vm1213, %v3160, 0
      %v3243 = vsel %vm827, %v3238, 0
      %3245 = vmatpush.bf16.msra.mxu0 0
      %3246 = vmatpush.bf16.msra.mxu0 0
      %3247 = vmatpush.bf16.msra.mxu0 0
      %3248 = vmatpush.bf16.msra.mxu0 0
      %3249 = vmatpush.bf16.msra.mxu0 0
      %3250 = vmatpush.bf16.msra.mxu0 0
      %3251 = vmatpush.bf16.msra.mxu0 0
      %3252 = vmatpush.bf16.msra.mxu0 %v3243
      %3253 = vmatmul.bf16.gmra.mxu0 %v3240
      %v3254 = vpop.f32.mrf.mxu0
      %v3255 = vadd.f32 0.0, %v3254
      %v3256 = vpop.f32.mrf.mxu0
      %3257 = vdwg.mxu0
      %3258 = vst [vmem:[#allocation1] ss:$4 sm:$0xff] %v843
      %v3259 = vld.sshfl [vmem:[#allocation1] sm:$0xff pattern:$0x73625140]
      %3261 = vrot.lane.b32.xlu0 %v3259, 40
      %v3262 = vpop.permute.xlu0 %3261
      %v3264 = vsel %vm1213, %v3161, 0
      %v3267 = vsel %vm827, %v3262, 0
      %3269 = vmatpush.bf16.msra.mxu0 0
      %3270 = vmatpush.bf16.msra.mxu0 0
      %3271 = vmatpush.bf16.msra.mxu0 0
      %3272 = vmatpush.bf16.msra.mxu0 0
      %3273 = vmatpush.bf16.msra.mxu0 0
      %3274 = vmatpush.bf16.msra.mxu0 0
      %3275 = vmatpush.bf16.msra.mxu0 0
      %3276 = vmatpush.bf16.msra.mxu0 %v3267
      %3277 = vmatmul.bf16.gmra.mxu0 %v3264
      %v3278 = vpop.f32.mrf.mxu0
      %v3279 = vadd.f32 0.0, %v3278
      %v3280 = vpop.f32.mrf.mxu0
      %3281 = vdwg.mxu0
      %3282 = vst [vmem:[#allocation1] ss:$4 sm:$0xff] %v899
      %v3283 = vld.sshfl [vmem:[#allocation1] sm:$0xff pattern:$0x73625140]
      %3285 = vrot.lane.b32.xlu0 %v3283, 40
      %v3286 = vpop.permute.xlu0 %3285
      %v3288 = vsel %vm827, %v3286, 0
      %3290 = vmatpush.bf16.msra.mxu0 0
      %3291 = vmatpush.bf16.msra.mxu0 0
      %3292 = vmatpush.bf16.msra.mxu0 0
      %3293 = vmatpush.bf16.msra.mxu0 0
      %3294 = vmatpush.bf16.msra.mxu0 0
      %3295 = vmatpush.bf16.msra.mxu0 0
      %3296 = vmatpush.bf16.msra.mxu0 0
      %3297 = vmatpush.bf16.msra.mxu0 %v3288
      %3298 = vmatmul.bf16.gmra.mxu0 %v3168
      %v3299 = vpop.f32.mrf.mxu0
      %v3300 = vadd.f32 0.0, %v3299
      %v3301 = vpop.f32.mrf.mxu0
      %3302 = vdwg.mxu0
      %3303 = vst [vmem:[#allocation1] ss:$4 sm:$0xff] %v902
      %v3304 = vld.sshfl [vmem:[#allocation1] sm:$0xff pattern:$0x73625140]
      %3306 = vrot.lane.b32.xlu0 %v3304, 40
      %v3307 = vpop.permute.xlu0 %3306
      %v3309 = vsel %vm827, %v3307, 0
      %3311 = vmatpush.bf16.msra.mxu0 0
      %3312 = vmatpush.bf16.msra.mxu0 0
      %3313 = vmatpush.bf16.msra.mxu0 0
      %3314 = vmatpush.bf16.msra.mxu0 0
      %3315 = vmatpush.bf16.msra.mxu0 0
      %3316 = vmatpush.bf16.msra.mxu0 0
      %3317 = vmatpush.bf16.msra.mxu0 0
      %3318 = vmatpush.bf16.msra.mxu0 %v3309
      %3319 = vmatmul.bf16.gmra.mxu0 %v3192
      %v3320 = vpop.f32.mrf.mxu0
      %v3321 = vadd.f32 0.0, %v3320
      %v3322 = vpop.f32.mrf.mxu0
      %3323 = vdwg.mxu0
      %3324 = vst [vmem:[#allocation1] ss:$4 sm:$0xff] %v905
      %v3325 = vld.sshfl [vmem:[#allocation1] sm:$0xff pattern:$0x73625140]
      %3327 = vrot.lane.b32.xlu0 %v3325, 40
      %v3328 = vpop.permute.xlu0 %3327
      %v3330 = vsel %vm827, %v3328, 0
      %3332 = vmatpush.bf16.msra.mxu0 0
      %3333 = vmatpush.bf16.msra.mxu0 0
      %3334 = vmatpush.bf16.msra.mxu0 0
      %3335 = vmatpush.bf16.msra.mxu0 0
      %3336 = vmatpush.bf16.msra.mxu0 0
      %3337 = vmatpush.bf16.msra.mxu0 0
      %3338 = vmatpush.bf16.msra.mxu0 0
      %3339 = vmatpush.bf16.msra.mxu0 %v3330
      %3340 = vmatmul.bf16.gmra.mxu0 %v3216
      %v3341 = vpop.f32.mrf.mxu0
      %v3342 = vadd.f32 0.0, %v3341
      %v3343 = vpop.f32.mrf.mxu0
      %3344 = vdwg.mxu0
      %3345 = vst [vmem:[#allocation1] ss:$4 sm:$0xff] %v908
      %v3346 = vld.sshfl [vmem:[#allocation1] sm:$0xff pattern:$0x73625140]
      %3348 = vrot.lane.b32.xlu0 %v3346, 40
      %v3349 = vpop.permute.xlu0 %3348
      %v3351 = vsel %vm827, %v3349, 0
      %3353 = vmatpush.bf16.msra.mxu0 0
      %3354 = vmatpush.bf16.msra.mxu0 0
      %3355 = vmatpush.bf16.msra.mxu0 0
      %3356 = vmatpush.bf16.msra.mxu0 0
      %3357 = vmatpush.bf16.msra.mxu0 0
      %3358 = vmatpush.bf16.msra.mxu0 0
      %3359 = vmatpush.bf16.msra.mxu0 0
      %3360 = vmatpush.bf16.msra.mxu0 %v3351
      %3361 = vmatmul.bf16.gmra.mxu0 %v3240
      %v3362 = vpop.f32.mrf.mxu0
      %v3363 = vadd.f32 0.0, %v3362
      %v3364 = vpop.f32.mrf.mxu0
      %3365 = vdwg.mxu0
      %3366 = vst [vmem:[#allocation1] ss:$4 sm:$0xff] %v911
      %v3367 = vld.sshfl [vmem:[#allocation1] sm:$0xff pattern:$0x73625140]
      %3369 = vrot.lane.b32.xlu0 %v3367, 40
      %v3370 = vpop.permute.xlu0 %3369
      %v3372 = vsel %vm827, %v3370, 0
      %3374 = vmatpush.bf16.msra.mxu0 0
      %3375 = vmatpush.bf16.msra.mxu0 0
      %3376 = vmatpush.bf16.msra.mxu0 0
      %3377 = vmatpush.bf16.msra.mxu0 0
      %3378 = vmatpush.bf16.msra.mxu0 0
      %3379 = vmatpush.bf16.msra.mxu0 0
      %3380 = vmatpush.bf16.msra.mxu0 0
      %3381 = vmatpush.bf16.msra.mxu0 %v3372
      %3382 = vmatmul.bf16.gmra.mxu0 %v3264
      %v3383 = vpop.f32.mrf.mxu0
      %v3384 = vadd.f32 0.0, %v3383
      %v3385 = vpop.f32.mrf.mxu0
      %3386 = vdwg.mxu0
      %3392 = vst [vmem:[#allocation1] ss:$2 sm:$0xff] %v3183
      %s3393 = scalar_lea.vmem [#allocation1], 1
      %3394 = vst [vmem:[%s3393] ss:$2 sm:$0xff] %v3207
      %s3395 = scalar_lea.vmem [#allocation1], 16
      %3396 = vst [vmem:[%s3395] ss:$2 sm:$0xff] %v3231
      %s3397 = scalar_lea.vmem [#allocation1], 17
      %3398 = vst [vmem:[%s3397] ss:$2 sm:$0xff] %v3255
      %s3399 = scalar_lea.vmem [#allocation1], 32
      %3400 = vst [vmem:[%s3399] ss:$2 sm:$0xff] %v3279
      %v3401 = vld.sshfl [vmem:[#allocation1] sm:$0xff pattern:$0x75316420]
      %v3402 = vld.sshfl [vmem:[#allocation1 + $0x10] sm:$0xff pattern:$0x75316420]
      %v3403 = vld.sshfl [vmem:[#allocation1 + $0x20] sm:$0xff pattern:$0x75316420]
      %v3407 = vpack.c.bf16 %v3401, %v3401
      %v3408 = vpack.c.bf16 %v3402, %v3402
      %v3409 = vpack.c.bf16 %v3403, %v3403
      %3413 = vrot.lane.b32.xlu0 %v3407, 48
      %v3414 = vpop.permute.xlu0 %3413
      %3415 = vrot.lane.b32.xlu0 %v3408, 48
      %v3416 = vpop.permute.xlu0 %3415
      %3417 = vrot.lane.b32.xlu0 %v3409, 48
      %v3418 = vpop.permute.xlu0 %3417
      %vm3422 = vcmask 454016
      %3423 = vst.msk [vmem:[#allocation2] sm:$0xf] %vm3422, %v3414
      %3424 = vst.msk [vmem:[#allocation2 + $0x4] sm:$0xf] %vm3422, %v3416
      %vm3425 = vcmask 451968
      %3426 = vst.msk [vmem:[#allocation2 + $0x8] sm:$0x3] %vm3425, %v3418
      %3432 = vst [vmem:[#allocation1] ss:$2 sm:$0xff] %v3300
      %s3433 = scalar_lea.vmem [#allocation1], 1
      %3434 = vst [vmem:[%s3433] ss:$2 sm:$0xff] %v3321
      %s3435 = scalar_lea.vmem [#allocation1], 16
      %3436 = vst [vmem:[%s3435] ss:$2 sm:$0xff] %v3342
      %s3437 = scalar_lea.vmem [#allocation1], 17
      %3438 = vst [vmem:[%s3437] ss:$2 sm:$0xff] %v3363
      %s3439 = scalar_lea.vmem [#allocation1], 32
      %3440 = vst [vmem:[%s3439] ss:$2 sm:$0xff] %v3384
      %v3441 = vld.sshfl [vmem:[#allocation1] sm:$0xff pattern:$0x75316420]
      %v3442 = vld.sshfl [vmem:[#allocation1 + $0x10] sm:$0xff pattern:$0x75316420]
      %v3443 = vld.sshfl [vmem:[#allocation1 + $0x20] sm:$0xff pattern:$0x75316420]
      %v3447 = vpack.c.bf16 %v3441, %v3441
      %v3448 = vpack.c.bf16 %v3442, %v3442
      %v3449 = vpack.c.bf16 %v3443, %v3443
      %3453 = vrot.lane.b32.xlu0 %v3447, 56
      %v3454 = vpop.permute.xlu0 %3453
      %3455 = vrot.lane.b32.xlu0 %v3448, 56
      %v3456 = vpop.permute.xlu0 %3455
      %3457 = vrot.lane.b32.xlu0 %v3449, 56
      %v3458 = vpop.permute.xlu0 %3457
      %vm3462 = vcmask 519616
      %3463 = vst.msk [vmem:[#allocation2] sm:$0xf] %vm3462, %v3454
      %3464 = vst.msk [vmem:[#allocation2 + $0x4] sm:$0xf] %vm3462, %v3456
      %vm3465 = vcmask 517568
      %3466 = vst.msk [vmem:[#allocation2 + $0x8] sm:$0x3] %vm3465, %v3458
      %v3467 = vld [vmem:[#allocation2] sm:$0xf]
      %v3468 = vld [vmem:[#allocation2 + $0x4] sm:$0xf]
      %v3469 = vld [vmem:[#allocation2 + $0x8] sm:$0x3]
      %v3470 = vld [vmem:[%s10] sm:$0xf]
      %v3471 = vld [vmem:[%s10 + $0x4] sm:$0xf]
      %v3472 = vld [vmem:[%s10 + $0x8] sm:$0xf]
      %v3473 = vld [vmem:[%s10 + $0xc] sm:$0xf]
      %v3474 = vld [vmem:[%s11] sm:$0x1]
      %v3476 = vperm.slane %v3474, 0
      %v3481 = vunpack.c.l.b16 %v3467
      %v3482 = vunpack.c.l.b16 %v3468
      %v3483 = vunpack.c.l.b16 %v3469
      %v3484 = vpack.c.b16 %v3482, %v3481
      %v3485 = vpack.c.b16 %v3483, %v3483
      %v3490 = vunpack.c.l.b16 %v3470
      %v3491 = vunpack.c.l.b16 %v3471
      %v3492 = vunpack.c.l.b16 %v3472
      %v3493 = vunpack.c.l.b16 %v3473
      %v3494 = vpack.c.b16 %v3491, %v3490
      %v3495 = vpack.c.b16 %v3493, %v3492
      %v3499 = vsel %vm603, %v3484, 0
      %v3502 = vsel %vm603, %v3485, 0
      %3504 = vmatpush.bf16.msra.mxu0 0
      %3505 = vmatpush.bf16.msra.mxu0 0
      %3506 = vmatpush.bf16.msra.mxu0 0
      %3507 = vmatpush.bf16.msra.mxu0 0
      %3508 = vmatpush.bf16.msra.mxu0 0
      %3509 = vmatpush.bf16.msra.mxu0 0
      %3510 = vmatpush.bf16.msra.mxu0 %v3495
      %3511 = vmatpush.bf16.msra.mxu0 %v3494
      %3512 = vmatmul.bf16.gmra.mxu0 %v3499
      %v3513 = vpop.f32.mrf.mxu0
      %v3514 = vadd.f32 %v3476, %v3513
      %v3515 = vpop.f32.mrf.mxu0
      %v3516 = vadd.f32 %v3476, %v3515
      %3517 = vmatmul.bf16.gmra.mxu0 %v3502
      %v3518 = vpop.f32.mrf.mxu0
      %v3519 = vadd.f32 %v3476, %v3518
      %v3520 = vpop.f32.mrf.mxu0
      %3521 = vdwg.mxu0
      %v3522 = vld [vmem:[%s12] sm:$0xf]
      %v3523 = vld [vmem:[%s12 + $0x4] sm:$0xf]
      %v3524 = vld [vmem:[%s12 + $0x8] sm:$0xf]
      %v3525 = vld [vmem:[%s12 + $0xc] sm:$0xf]
      %v3526 = vld [vmem:[%s13] sm:$0x1]
      %v3528 = vperm.slane %v3526, 0
      %3530 = vrot.lane.b32.xlu0 %v3484, 96
      %v3531 = vpop.permute.xlu0 %3530
      %3532 = vrot.lane.b32.xlu0 %v3485, 96
      %v3533 = vpop.permute.xlu0 %3532
      %v3538 = vunpack.c.l.b16 %v3522
      %v3539 = vunpack.c.l.b16 %v3523
      %v3540 = vunpack.c.l.b16 %v3524
      %v3541 = vunpack.c.l.b16 %v3525
      %v3542 = vpack.c.b16 %v3539, %v3538
      %v3543 = vpack.c.b16 %v3541, %v3540
      %v3547 = vsel %vm603, %v3531, 0
      %v3550 = vsel %vm603, %v3533, 0
      %3552 = vmatpush.bf16.msra.mxu0 0
      %3553 = vmatpush.bf16.msra.mxu0 0
      %3554 = vmatpush.bf16.msra.mxu0 0
      %3555 = vmatpush.bf16.msra.mxu0 0
      %3556 = vmatpush.bf16.msra.mxu0 0
      %3557 = vmatpush.bf16.msra.mxu0 0
      %3558 = vmatpush.bf16.msra.mxu0 %v3543
      %3559 = vmatpush.bf16.msra.mxu0 %v3542
      %3560 = vmatmul.bf16.gmra.mxu0 %v3547
      %v3561 = vpop.f32.mrf.mxu0
      %v3562 = vadd.f32 %v3528, %v3561
      %v3563 = vpop.f32.mrf.mxu0
      %v3564 = vadd.f32 %v3528, %v3563
      %3565 = vmatmul.bf16.gmra.mxu0 %v3550
      %v3566 = vpop.f32.mrf.mxu0
      %v3567 = vadd.f32 %v3528, %v3566
      %v3568 = vpop.f32.mrf.mxu0
      %3569 = vdwg.mxu0
      %v3570 = vadd.f32 %v595, %v3514
      %v3571 = vadd.f32 %v596, %v3516
      %v3572 = vadd.f32 %v597, %v3519
      %3573 = vst.msk [vmem:[%s582] sm:$0xff] %vm603, %v3570
      %3574 = vst.msk [vmem:[%s582 + $0x8] sm:$0xff] %vm603, %v3571
      %3575 = vst.msk [vmem:[%s582 + $0x10] sm:$0xf] %vm610, %v3572
      %v3576 = vadd.f32 %v598, %v3562
      %v3577 = vadd.f32 %v599, %v3564
      %v3578 = vadd.f32 %v600, %v3567
      %3579 = vst.msk [vmem:[%s592] sm:$0xff] %vm603, %v3576
      %3580 = vst.msk [vmem:[%s592 + $0x8] sm:$0xff] %vm603, %v3577
      %3581 = vst.msk [vmem:[%s592 + $0x10] sm:$0xf] %vm610, %v3578
      %s3582 = smul.u32 3, %s32
      %p3583 = scmp.lt.s32.totalorder %s31, 1
      %s3584 = scalar_select %p3583, %s31, 1
      %p3585 = scmp.lt.s32.totalorder %s3582, 2
      %s3586 = scalar_select %p3585, %s3582, 2
      %s3587 = smul.addr %s3584, 3
      %s3588 = sadd.s32 %s3586, %s3587
      %s3589 = smul.addr %s3588, 8
      %s3590 = scalar_lea.vmem %s14, %s3589
      %s3591 = smul.u32 3, %s32
      %p3592 = scmp.lt.s32.totalorder %s31, 1
      %s3593 = scalar_select %p3592, %s31, 1
      %p3594 = scmp.lt.s32.totalorder %s3591, 2
      %s3595 = scalar_select %p3594, %s3591, 2
      %s3596 = smul.addr %s3593, 3
      %s3597 = sadd.s32 %s3595, %s3596
      %s3598 = smul.addr %s3597, 8
      %s3599 = scalar_lea.vmem %s15, %s3598
      // Predicated region
      $region77: #{video_transformer_forward.7} parent=75 // pred_check
        %p3600 = pneg %p367
      $region78: #{video_transformer_forward.7} parent=75 // pred_check_branch
        %3602 = sbr.rel (%p3600) target = $region80
      $region79: #{video_transformer_forward.7} parent=75 // pred_region
        %s3603 = smul.u32 3, %s32
      $region80: #{video_transformer_forward.7} parent=75 // pred_fallthru
        _
      // Predicated region
      $region81: #{video_transformer_forward.7} parent=75 // pred_check
        %p3604 = pneg %p395
      $region82: #{video_transformer_forward.7} parent=75 // pred_check_branch
        %3606 = sbr.rel (%p3604) target = $region84
      $region83: #{video_transformer_forward.7} parent=75 // pred_region
        %s3607 = smul.u32 3, %s32
      $region84: #{video_transformer_forward.7} parent=75 // pred_fallthru
        _
    $region76: #{video_transformer_forward.7} parent=5 // pred_fallthru
      _
    %p3608 = scmp.le.s32.totalorder 2, %s22
    // Predicated region
    $region85: #{video_transformer_forward.7} parent=5 // pred_check
      %p3609 = pneg %p3608
    $region86: #{video_transformer_forward.7} parent=5 // pred_check_branch
      %3611 = sbr.rel (%p3609) target = $region88
    $region87: #{video_transformer_forward.7} parent=5 // pred_region
      %s3612 = ssub.s32 %s22, 2
      // Predicated region
      $region89: #{video_transformer_forward.7} parent=87 // pred_check
        %p3613 = pneg %p373
      $region90: #{video_transformer_forward.7} parent=87 // pred_check_branch
        %3615 = sbr.rel (%p3613) target = $region92
      $region91: #{video_transformer_forward.7} parent=87 // pred_region
        %s3616 = smul.u32 3, %s34
        %p3617 = scmp.lt.s32.totalorder %s33, 1
        %s3618 = scalar_select %p3617, %s33, 1
        %p3619 = scmp.lt.s32.totalorder %s3616, 2
        %s3620 = scalar_select %p3619, %s3616, 2
        %s3621 = smul.addr %s3618, 3
        %s3622 = sadd.s32 %s3620, %s3621
        %s3623 = smul.addr %s3622, 8
        %s3624 = scalar_lea.vmem %s14, %s3623
      $region92: #{video_transformer_forward.7} parent=87 // pred_fallthru
        _
      // Predicated region
      $region93: #{video_transformer_forward.7} parent=87 // pred_check
        %p3625 = pneg %p401
      $region94: #{video_transformer_forward.7} parent=87 // pred_check_branch
        %3627 = sbr.rel (%p3625) target = $region96
      $region95: #{video_transformer_forward.7} parent=87 // pred_region
        %s3628 = smul.u32 3, %s34
        %p3629 = scmp.lt.s32.totalorder %s33, 1
        %s3630 = scalar_select %p3629, %s33, 1
        %p3631 = scmp.lt.s32.totalorder %s3628, 2
        %s3632 = scalar_select %p3631, %s3628, 2
        %s3633 = smul.addr %s3630, 3
        %s3634 = sadd.s32 %s3632, %s3633
        %s3635 = smul.addr %s3634, 8
        %s3636 = scalar_lea.vmem %s15, %s3635
      $region96: #{video_transformer_forward.7} parent=87 // pred_fallthru
        _
    $region88: #{video_transformer_forward.7} parent=5 // pred_fallthru
      _
  $region6: #{video_transformer_forward.7} parent=0 // loop_footer
    %s26 = sadd.s32 1, %s22
  $region7: #{video_transformer_forward.7} parent=0 // loop_footer_branch
    %21 = sbr.rel target = $region3
  $region8: #{video_transformer_forward.7} parent=0 // loop_exit
    _

</llo_original>
